<compile_context>
chip_gen: v6e
topology: v6e:2x2x1
jax: 0.10.0
libtpu: 0.0.40
codegen_flags: <defaults>
</compile_context>

<pallas_src>
import functools

import jax
import jax.numpy as jnp
from jax import lax
from jax.experimental import pallas as pl
from jax.experimental.pallas import tpu as pltpu

EPS = 1e-5
LANE = 128
SUBLANE = 8


def _round_up(x, m):
    return (x + m - 1) // m * m


def _double_conv_kernel(xA_ref, xB_ref, wA_ref, w2_ref, bA_ref, b2_ref,
                        out_ref, xs_ref, y1_ref, *, W):
    """One (batch, row-strip) tile per grid step.

    xA_ref : (1, TH, Wxp, Cin_p)     bf16  padded-input rows [s*TH, s*TH+TH)
    xB_ref : (1, 4,  Wxp, Cin_p)     bf16  padded-input rows [s*TH+TH, s*TH+TH+4)
    wA_ref : (3, 3*Cin_p, 2*Cout_p)  bf16  per-dy [conv1 | identity] weights, BN folded
    w2_ref : (3, 3*Cout_p, Cout_p)   bf16  per-dy conv2 weights, BN folded
    bA_ref : (1, 2*Cout_p)           f32   [bias1 | bias_id]
    b2_ref : (1, Cout_p)             f32   bias2
    out_ref: (1, TH, Wa, Cout_p)     bf16  output strip (lane-dense, sublane-aligned)
    xs_ref : (TH+4, Wxp, Cin_p)      bf16  scratch: assembled input strip (2-row halos)
    y1_ref : (TH+2, Wxp, Cout_p)     bf16  scratch: conv1+ReLU activation (1-row halos)
    """
    TH, Wa, Cout_p = out_ref.shape[1], out_ref.shape[2], out_ref.shape[3]
    Wxp = xs_ref.shape[1]
    s = pl.program_id(1)
    last = pl.num_programs(1) - 1

    # The padded array is shifted down by 2 rows, so each A block already starts at its
    # own top halo; only the 4 bottom-halo rows need the extra (tiny) B block.  Two plain
    # full-width stores assemble the (TH+4)-row strip in VMEM.
    xs_ref[0:TH, :, :] = xA_ref[0]
    xs_ref[TH:TH + 4, :, :] = xB_ref[0]

    def dy_group(src_ref, dy, rows):
        # Concatenate the three dx-shifted column windows of rows [dy, dy+rows) along the
        # channel (lane) axis -> matmul operand with K = 3*C.  (K >= 384 at C=128 fills
        # the 256-deep MXU on v6e/v7x; on v5e per-tap K=C accumulation is preferable.)
        cp = src_ref.shape[-1]
        cols = [src_ref[dy:dy + rows, 7 + dx:7 + dx + Wa, :] for dx in range(3)]
        return jnp.concatenate(cols, axis=-1).reshape(rows * Wa, 3 * cp)

    # ---- conv1 (3x3) + identity (1x1 folded onto the centre tap), BN1/BNid folded ----
    # Computed over TH+2 rows so the conv2 halo rows hold *real* conv1 values (the halo
    # zeroing of the previous revision was wrong at interior strip boundaries).
    z = bA_ref[...]
    for dy in range(3):
        z = z + jnp.dot(dy_group(xs_ref, dy, TH + 2), wA_ref[dy],
                        preferred_element_type=jnp.float32)

    yid = z[Wa:(TH + 1) * Wa, Cout_p:]            # identity branch, centre TH rows (f32)
    y1 = jnp.maximum(z[:, :Cout_p], 0.0)          # BN1 folded + ReLU, (TH+2)*Wa rows

    # ---- scatter y1 into the conv2 buffer: interior starts at column 8 (sublane-aligned,
    #      unmasked stores); only the thin true-image-border columns/rows get zeroed ----
    y1_ref[:, 8:8 + Wa, :] = y1.reshape(TH + 2, Wa, Cout_p).astype(y1_ref.dtype)
    zc = jnp.zeros((TH + 2, 1, Cout_p), y1_ref.dtype)
    y1_ref[:, 7:8, :] = zc                        # y1[:, -1] = 0   (left image border)
    y1_ref[:, 8 + W:9 + W, :] = zc                # y1[:,  W] = 0   (right image border)
    zr = jnp.zeros((1, Wxp, Cout_p), y1_ref.dtype)

    @pl.when(s == 0)
    def _():                                      # y1[-1, :] = 0   (top image border)
        y1_ref[0:1, :, :] = zr

    @pl.when(s == last)
    def _():                                      # y1[H, :]  = 0   (bottom image border)
        y1_ref[TH + 1:TH + 2, :, :] = zr

    # ---- conv2 (3x3), BN2 folded, dy-grouped accumulation ----
    y2 = b2_ref[...]
    for dy in range(3):
        y2 = y2 + jnp.dot(dy_group(y1_ref, dy, TH), w2_ref[dy],
                          preferred_element_type=jnp.float32)

    # ---- residual add + final ReLU; bf16 output halves the writeback DMA ----
    out = jnp.maximum(y2 + yid, 0.0)
    out_ref[...] = out.reshape(1, TH, Wa, Cout_p).astype(out_ref.dtype)


def _fold_bn(conv_bias, gamma, beta, mean, var):
    """Fold conv bias + eval-mode BatchNorm into per-channel (scale, bias)."""
    scale = gamma / jnp.sqrt(var + EPS)
    bias = (conv_bias - mean) * scale + beta
    return scale.astype(jnp.float32), bias.astype(jnp.float32)


def _pick_block_h(H, N, est_fn, budget):
    """Largest multiple-of-4 divisor of H whose per-step VMEM estimate fits the budget,
    with a soft preference for enough grid steps to feed both v7x TensorCores."""
    cands = sorted([c for c in range(4, H + 1, 4) if H % c == 0], reverse=True)
    fit = [c for c in cands if est_fn(c) <= budget] or [cands[-1]]
    for c in fit:
        if N * (H // c) >= 16 or c <= 32:
            return c
    return fit[-1]


def double_conv_forward(x_nchw, params, *, block_h=None,
                        vmem_budget_bytes=36 * 1024 * 1024,
                        return_nhwc_padded=False):
    """Pallas implementation of DoubleConv.forward. x_nchw: (N, Cin, H, W) float32."""
    N, Cin, H, W = x_nchw.shape
    Cout = params["w1"].shape[0]
    # TODO(synk): H not a multiple of 4 would need a different bottom-halo block size.
    assert H % 4 == 0, "double_conv_forward requires H % 4 == 0"

    Cin_p = _round_up(Cin, LANE)
    Cout_p = _round_up(Cout, LANE)
    Wa = _round_up(W, SUBLANE)        # kernel-visible (sublane-aligned) width
    Wxp = Wa + 16                     # 8-col aligned left pad + interior + right pad/halo

    def vmem_est(th):
        b2, f4 = 2, 4
        xA = th * Wxp * Cin_p * b2
        xB = 4 * Wxp * Cin_p * b2
        ob = th * Wa * Cout_p * b2
        xs = (th + 4) * Wxp * Cin_p * b2
        y1p = (th + 2) * Wxp * Cout_p * b2
        wgt = (9 * Cin_p * 2 * Cout_p + 9 * Cout_p * Cout_p) * b2
        z = (th + 2) * Wa * 2 * Cout_p * f4          # fused conv1(+id) f32 result
        opnd = (th + 2) * Wa * 3 * max(Cin_p, Cout_p) * b2   # one dy-group operand
        acc = th * Wa * Cout_p * f4 * 2               # conv2 acc + identity branch
        return 2 * (xA + xB + ob) + xs + y1p + wgt + z + opnd + acc

    if block_h is None:
        block_h = _pick_block_h(H, N, vmem_est, vmem_budget_bytes)
    assert H % block_h == 0 and block_h % 4 == 0, "block_h must divide H and be %4==0"
    TH = block_h
    n_strips = H // TH
    est_bytes = vmem_est(TH)
    vmem_limit = int(min(max(int(1.5 * est_bytes), 32 << 20), 100 << 20))

    # ---- fold eval-mode BatchNorm into conv weights / biases ----
    s1, b1 = _fold_bn(params["b1"], params["bn1_g"], params["bn1_b"],
                      params["bn1_m"], params["bn1_v"])
    s2, b2f = _fold_bn(params["b2"], params["bn2_g"], params["bn2_b"],
                       params["bn2_m"], params["bn2_v"])
    sid, bid = _fold_bn(params["bid"], params["bnid_g"], params["bnid_b"],
                        params["bnid_m"], params["bnid_v"])

    # PyTorch OIHW -> (dy, dx, I, O), BN scale folded into the output-channel axis.
    w1 = jnp.transpose(params["w1"], (2, 3, 1, 0)).astype(jnp.float32) * s1   # (3,3,Cin,Cout)
    w2 = jnp.transpose(params["w2"], (2, 3, 1, 0)).astype(jnp.float32) * s2   # (3,3,Cout,Cout)
    wid = (jnp.transpose(params["wid"], (2, 3, 1, 0)).reshape(Cin, Cout)
           .astype(jnp.float32) * sid)                                        # (Cin,Cout)

    # Zero-pad channels to lane-dense multiples of 128.
    w1p = jnp.zeros((3, 3, Cin_p, Cout_p), jnp.float32).at[:, :, :Cin, :Cout].set(w1)
    w2p = jnp.zeros((3, 3, Cout_p, Cout_p), jnp.float32).at[:, :, :Cout, :Cout].set(w2)
    widp = jnp.zeros((Cin_p, Cout_p), jnp.float32).at[:Cin, :Cout].set(wid)

    # Per-dy [conv1 | identity] weights; identity lives on the centre (dy=1, dx=1) tap.
    # (On v5e, if MXU-bound, the identity could be un-fused into its own K=Cin_p matmul.)
    wA = jnp.zeros((3, 3 * Cin_p, 2 * Cout_p), jnp.float32)
    wA = wA.at[:, :, :Cout_p].set(w1p.reshape(3, 3 * Cin_p, Cout_p))
    wA = wA.at[1, Cin_p:2 * Cin_p, Cout_p:].set(widp)
    wA = wA.astype(jnp.bfloat16)
    w2m = w2p.reshape(3, 3 * Cout_p, Cout_p).astype(jnp.bfloat16)

    bA = jnp.zeros((1, 2 * Cout_p), jnp.float32)
    bA = bA.at[0, :Cout].set(b1).at[0, Cout_p:Cout_p + Cout].set(bid)
    b2v = jnp.zeros((1, Cout_p), jnp.float32).at[0, :Cout].set(b2f)

    # ---- NCHW -> NHWC, 2-row top/bottom halo, 8-col aligned left pad, channel pad, bf16.
    x = jnp.transpose(x_nchw, (0, 2, 3, 1)).astype(jnp.float32)               # (N,H,W,Cin)
    xp = jnp.pad(x, ((0, 0), (2, 2), (8, Wxp - 8 - W), (0, Cin_p - Cin)))
    xp = xp.astype(jnp.bfloat16)                                              # (N,H+4,Wxp,Cin_p)

    kernel = functools.partial(_double_conv_kernel, W=W)
    const2 = lambda n, s: (0, 0)
    const3 = lambda n, s: (0, 0, 0)

    out = pl.pallas_call(
        kernel,
        out_shape=jax.ShapeDtypeStruct((N, H, Wa, Cout_p), jnp.bfloat16),
        grid=(N, n_strips),
        in_specs=[
            # body rows of the strip: non-overlapping blocks, input read once from HBM
            pl.BlockSpec((1, TH, Wxp, Cin_p), lambda n, s: (n, s, 0, 0)),
            # 4 bottom-halo rows of the strip (tiny extra read per strip)
            pl.BlockSpec((1, 4, Wxp, Cin_p),
                         lambda n, s: (n, (s + 1) * (TH // 4), 0, 0)),
            # constants: single-buffered (their index_map never changes)
            pl.BlockSpec((3, 3 * Cin_p, 2 * Cout_p), const3,
                         pipeline_mode=pl.Buffered(1)),
            pl.BlockSpec((3, 3 * Cout_p, Cout_p), const3,
                         pipeline_mode=pl.Buffered(1)),
            pl.BlockSpec((1, 2 * Cout_p), const2, pipeline_mode=pl.Buffered(1)),
            pl.BlockSpec((1, Cout_p), const2, pipeline_mode=pl.Buffered(1)),
        ],
        out_specs=pl.BlockSpec((1, TH, Wa, Cout_p), lambda n, s: (n, s, 0, 0)),
        scratch_shapes=[
            pltpu.VMEM((TH + 4, Wxp, Cin_p), jnp.bfloat16),
            pltpu.VMEM((TH + 2, Wxp, Cout_p), jnp.bfloat16),
        ],
        compiler_params=pltpu.CompilerParams(
            dimension_semantics=("parallel", "parallel"),
            vmem_limit_bytes=vmem_limit,
        ),
    )(xp, xp, wA, w2m, bA, b2v)

    if return_nhwc_padded:
        # NHWC consumers can take the padded bf16 slab directly and skip the epilogue pass.
        return out
    out = out[:, :, :W, :Cout].astype(jnp.float32)
    return jnp.transpose(out, (0, 3, 1, 2))


# ---------------------------- pure-JAX f32 reference ----------------------------
def _ref_forward(x_nchw, params):
    x = jnp.transpose(x_nchw, (0, 2, 3, 1)).astype(jnp.float32)  # NHWC

    def conv(x, w_oihw, b, pad):
        w = jnp.transpose(w_oihw, (2, 3, 1, 0)).astype(jnp.float32)
        y = lax.conv_general_dilated(
            x, w, window_strides=(1, 1), padding=[(pad, pad), (pad, pad)],
            dimension_numbers=("NHWC", "HWIO", "NHWC"))
        return y + b.reshape(1, 1, 1, -1)

    def bn(y, g, b, m, v):
        return (y - m.reshape(1, 1, 1, -1)) / jnp.sqrt(v.reshape(1, 1, 1, -1) + EPS) \
               * g.reshape(1, 1, 1, -1) + b.reshape(1, 1, 1, -1)

    y = conv(x, params["w1"], params["b1"], 1)
    y = bn(y, params["bn1_g"], params["bn1_b"], params["bn1_m"], params["bn1_v"])
    y = jnp.maximum(y, 0.0)
    y = conv(y, params["w2"], params["b2"], 1)
    y = bn(y, params["bn2_g"], params["bn2_b"], params["bn2_m"], params["bn2_v"])

    idt = conv(x, params["wid"], params["bid"], 0)
    idt = bn(idt, params["bnid_g"], params["bnid_b"], params["bnid_m"], params["bnid_v"])

    out = jnp.maximum(y + idt, 0.0)
    return jnp.transpose(out, (0, 3, 1, 2))


def _make_params(key, cin, cout):
    ks = jax.random.split(key, 12)
    return {
        # conv weights in PyTorch OIHW layout
        "w1": 0.1 * jax.random.normal(ks[0], (cout, cin, 3, 3), jnp.float32),
        "b1": 0.1 * jax.random.normal(ks[1], (cout,), jnp.float32),
        "w2": 0.1 * jax.random.normal(ks[2], (cout, cout, 3, 3), jnp.float32),
        "b2": 0.1 * jax.random.normal(ks[3], (cout,), jnp.float32),
        "wid": 0.1 * jax.random.normal(ks[4], (cout, cin, 1, 1), jnp.float32),
        "bid": 0.1 * jax.random.normal(ks[5], (cout,), jnp.float32),
        # BatchNorm (eval-mode) parameters
        "bn1_g": 1.0 + 0.1 * jax.random.normal(ks[6], (cout,), jnp.float32),
        "bn1_b": 0.1 * jax.random.normal(ks[7], (cout,), jnp.float32),
        "bn1_m": 0.05 * jax.random.normal(ks[8], (cout,), jnp.float32),
        "bn1_v": 1.0 + 0.1 * jax.nn.softplus(jax.random.normal(ks[9], (cout,), jnp.float32)),
        "bn2_g": 1.0 + 0.1 * jax.random.normal(ks[10], (cout,), jnp.float32),
        "bn2_b": 0.1 * jax.random.normal(ks[11], (cout,), jnp.float32),
        "bn2_m": jnp.zeros((cout,), jnp.float32),
        "bn2_v": jnp.ones((cout,), jnp.float32),
        "bnid_g": jnp.ones((cout,), jnp.float32),
        "bnid_b": jnp.zeros((cout,), jnp.float32),
        "bnid_m": jnp.zeros((cout,), jnp.float32),
        "bnid_v": jnp.ones((cout,), jnp.float32),
    }


if __name__ == "__main__":
    N, Cin, Cout, H, W = 2, 4, 8, 16, 16
    key = jax.random.PRNGKey(0)
    kx, kp = jax.random.split(key)
    x = jax.random.normal(kx, (N, Cin, H, W), jnp.float32)
    params = _make_params(kp, Cin, Cout)

    ref = jax.block_until_ready(_ref_forward(x, params))

    # block_h=8 exercises the 2-strip halo path (including both image-border strips);
    # block_h=None exercises the budget-driven single-strip path.
    for bh in (8, None):
        out = jax.block_until_ready(double_conv_forward(x, params, block_h=bh))
        assert out.shape == (N, Cout, H, W)
        err = float(jnp.max(jnp.abs(out - ref)))
        assert jnp.allclose(out, ref, atol=2.5e-2, rtol=2.5e-2), \
            f"block_h={bh}: max abs diff {err}"
    print("KERNEL_OK")
</pallas_src>

<mosaic_0001>
module attributes {stable_mosaic.version = 11 : i64} {
  func.func @_double_conv_kernel(%arg0: i32, %arg1: i32, %arg2: memref<1x8x32x128xbf16, #tpu.memory_space<vmem>>, %arg3: memref<1x4x32x128xbf16, #tpu.memory_space<vmem>>, %arg4: memref<3x384x256xbf16, #tpu.memory_space<vmem>>, %arg5: memref<3x384x128xbf16, #tpu.memory_space<vmem>>, %arg6: memref<1x256xf32, #tpu.memory_space<vmem>>, %arg7: memref<1x128xf32, #tpu.memory_space<vmem>>, %arg8: memref<1x8x16x128xbf16, #tpu.memory_space<vmem>>, %arg9: memref<12x32x128xbf16, #tpu.memory_space<vmem>>, %arg10: memref<10x32x128xbf16, #tpu.memory_space<vmem>>) attributes {dimension_semantics = [#tpu.dimension_semantics<parallel>, #tpu.dimension_semantics<parallel>], iteration_bounds = array<i64: 2, 2>, scalar_prefetch = 0 : i64, scratch_operands = 2 : i64, tpu.core_type = #tpu.core_type<tc>, window_params = [{transform_indices = @transform_0, window_bounds = array<i64: 1, 8, 32, 128>}, {transform_indices = @transform_1, window_bounds = array<i64: 1, 4, 32, 128>}, {pipeline_mode = #tpu.pipeline_mode<synchronous>, transform_indices = @transform_2, window_bounds = array<i64: 3, 384, 256>}, {pipeline_mode = #tpu.pipeline_mode<synchronous>, transform_indices = @transform_3, window_bounds = array<i64: 3, 384, 128>}, {pipeline_mode = #tpu.pipeline_mode<synchronous>, transform_indices = @transform_4, window_bounds = array<i64: 1, 256>}, {pipeline_mode = #tpu.pipeline_mode<synchronous>, transform_indices = @transform_5, window_bounds = array<i64: 1, 128>}, {transform_indices = @transform_6, window_bounds = array<i64: 1, 8, 16, 128>}]} {
    %c0 = arith.constant 0 : index
    %c0_0 = arith.constant 0 : index
    %c0_1 = arith.constant 0 : index
    %c0_2 = arith.constant 0 : index
    %0 = vector.load %arg2[%c0, %c0_0, %c0_1, %c0_2] : memref<1x8x32x128xbf16, #tpu.memory_space<vmem>>, vector<1x8x32x128xbf16>
    %1 = vector.shape_cast %0 : vector<1x8x32x128xbf16> to vector<8x32x128xbf16>
    %c0_3 = arith.constant 0 : index
    %c0_4 = arith.constant 0 : index
    %c0_5 = arith.constant 0 : index
    %2 = vector.load %arg9[%c0_3, %c0_4, %c0_5] : memref<12x32x128xbf16, #tpu.memory_space<vmem>>, vector<8x32x128xbf16>
    tpu.vector_store %arg9[%c0_3, %c0_4, %c0_5], %1 {strides = array<i32>} : memref<12x32x128xbf16, #tpu.memory_space<vmem>>, vector<8x32x128xbf16>,
    %c0_6 = arith.constant 0 : index
    %c0_7 = arith.constant 0 : index
    %c0_8 = arith.constant 0 : index
    %c0_9 = arith.constant 0 : index
    %3 = vector.load %arg3[%c0_6, %c0_7, %c0_8, %c0_9] : memref<1x4x32x128xbf16, #tpu.memory_space<vmem>>, vector<1x4x32x128xbf16>
    %4 = vector.shape_cast %3 : vector<1x4x32x128xbf16> to vector<4x32x128xbf16>
    %c8 = arith.constant 8 : index
    %c0_10 = arith.constant 0 : index
    %c0_11 = arith.constant 0 : index
    %5 = vector.load %arg9[%c8, %c0_10, %c0_11] : memref<12x32x128xbf16, #tpu.memory_space<vmem>>, vector<4x32x128xbf16>
    tpu.vector_store %arg9[%c8, %c0_10, %c0_11], %4 {strides = array<i32>} : memref<12x32x128xbf16, #tpu.memory_space<vmem>>, vector<4x32x128xbf16>,
    %c0_12 = arith.constant 0 : index
    %c0_13 = arith.constant 0 : index
    %6 = vector.load %arg6[%c0_12, %c0_13] : memref<1x256xf32, #tpu.memory_space<vmem>>, vector<1x256xf32>
    %c0_14 = arith.constant 0 : index
    %c7 = arith.constant 7 : index
    %c0_15 = arith.constant 0 : index
    %7 = vector.load %arg9[%c0_14, %c7, %c0_15] : memref<12x32x128xbf16, #tpu.memory_space<vmem>>, vector<10x16x128xbf16>
    %c0_16 = arith.constant 0 : index
    %c8_17 = arith.constant 8 : index
    %c0_18 = arith.constant 0 : index
    %8 = vector.load %arg9[%c0_16, %c8_17, %c0_18] : memref<12x32x128xbf16, #tpu.memory_space<vmem>>, vector<10x16x128xbf16>
    %c0_19 = arith.constant 0 : index
    %c9 = arith.constant 9 : index
    %c0_20 = arith.constant 0 : index
    %9 = vector.load %arg9[%c0_19, %c9, %c0_20] : memref<12x32x128xbf16, #tpu.memory_space<vmem>>, vector<10x16x128xbf16>
    %10 = tpu.concatenate %7, %8, %9 in 2 : vector<10x16x128xbf16>, vector<10x16x128xbf16>, vector<10x16x128xbf16> -> vector<10x16x384xbf16>
    %11 = vector.shape_cast %10 : vector<10x16x384xbf16> to vector<160x384xbf16>
    %c0_21 = arith.constant 0 : index
    %c0_22 = arith.constant 0 : index
    %c0_23 = arith.constant 0 : index
    %12 = vector.load %arg4[%c0_21, %c0_22, %c0_23] : memref<3x384x256xbf16, #tpu.memory_space<vmem>>, vector<1x384x256xbf16>
    %13 = vector.shape_cast %12 : vector<1x384x256xbf16> to vector<384x256xbf16>
    %cst = arith.constant dense<0.000000e+00> : vector<160x256xf32>
    %14 = tpu.matmul %11, %13, %cst {dimension_numbers = #tpu.dot_dimension_numbers<[1], [0], [0], [1], [0, 0, 1, 1], [], []>} : vector<160x384xbf16>, vector<384x256xbf16>, vector<160x256xf32> -> vector<160x256xf32>
    %15 = vector.broadcast %6 : vector<1x256xf32> to vector<160x256xf32>
    %16 = arith.addf %15, %14 : vector<160x256xf32>
    %c1 = arith.constant 1 : index
    %c7_24 = arith.constant 7 : index
    %c0_25 = arith.constant 0 : index
    %17 = vector.load %arg9[%c1, %c7_24, %c0_25] : memref<12x32x128xbf16, #tpu.memory_space<vmem>>, vector<10x16x128xbf16>
    %c1_26 = arith.constant 1 : index
    %c8_27 = arith.constant 8 : index
    %c0_28 = arith.constant 0 : index
    %18 = vector.load %arg9[%c1_26, %c8_27, %c0_28] : memref<12x32x128xbf16, #tpu.memory_space<vmem>>, vector<10x16x128xbf16>
    %c1_29 = arith.constant 1 : index
    %c9_30 = arith.constant 9 : index
    %c0_31 = arith.constant 0 : index
    %19 = vector.load %arg9[%c1_29, %c9_30, %c0_31] : memref<12x32x128xbf16, #tpu.memory_space<vmem>>, vector<10x16x128xbf16>
    %20 = tpu.concatenate %17, %18, %19 in 2 : vector<10x16x128xbf16>, vector<10x16x128xbf16>, vector<10x16x128xbf16> -> vector<10x16x384xbf16>
    %21 = vector.shape_cast %20 : vector<10x16x384xbf16> to vector<160x384xbf16>
    %c1_32 = arith.constant 1 : index
    %c0_33 = arith.constant 0 : index
    %c0_34 = arith.constant 0 : index
    %22 = vector.load %arg4[%c1_32, %c0_33, %c0_34] : memref<3x384x256xbf16, #tpu.memory_space<vmem>>, vector<1x384x256xbf16>
    %23 = vector.shape_cast %22 : vector<1x384x256xbf16> to vector<384x256xbf16>
    %cst_35 = arith.constant dense<0.000000e+00> : vector<160x256xf32>
    %24 = tpu.matmul %21, %23, %cst_35 {dimension_numbers = #tpu.dot_dimension_numbers<[1], [0], [0], [1], [0, 0, 1, 1], [], []>} : vector<160x384xbf16>, vector<384x256xbf16>, vector<160x256xf32> -> vector<160x256xf32>
    %25 = arith.addf %16, %24 : vector<160x256xf32>
    %c2 = arith.constant 2 : index
    %c7_36 = arith.constant 7 : index
    %c0_37 = arith.constant 0 : index
    %26 = vector.load %arg9[%c2, %c7_36, %c0_37] : memref<12x32x128xbf16, #tpu.memory_space<vmem>>, vector<10x16x128xbf16>
    %c2_38 = arith.constant 2 : index
    %c8_39 = arith.constant 8 : index
    %c0_40 = arith.constant 0 : index
    %27 = vector.load %arg9[%c2_38, %c8_39, %c0_40] : memref<12x32x128xbf16, #tpu.memory_space<vmem>>, vector<10x16x128xbf16>
    %c2_41 = arith.constant 2 : index
    %c9_42 = arith.constant 9 : index
    %c0_43 = arith.constant 0 : index
    %28 = vector.load %arg9[%c2_41, %c9_42, %c0_43] : memref<12x32x128xbf16, #tpu.memory_space<vmem>>, vector<10x16x128xbf16>
    %29 = tpu.concatenate %26, %27, %28 in 2 : vector<10x16x128xbf16>, vector<10x16x128xbf16>, vector<10x16x128xbf16> -> vector<10x16x384xbf16>
    %30 = vector.shape_cast %29 : vector<10x16x384xbf16> to vector<160x384xbf16>
    %c2_44 = arith.constant 2 : index
    %c0_45 = arith.constant 0 : index
    %c0_46 = arith.constant 0 : index
    %31 = vector.load %arg4[%c2_44, %c0_45, %c0_46] : memref<3x384x256xbf16, #tpu.memory_space<vmem>>, vector<1x384x256xbf16>
    %32 = vector.shape_cast %31 : vector<1x384x256xbf16> to vector<384x256xbf16>
    %cst_47 = arith.constant dense<0.000000e+00> : vector<160x256xf32>
    %33 = tpu.matmul %30, %32, %cst_47 {dimension_numbers = #tpu.dot_dimension_numbers<[1], [0], [0], [1], [0, 0, 1, 1], [], []>} : vector<160x384xbf16>, vector<384x256xbf16>, vector<160x256xf32> -> vector<160x256xf32>
    %34 = arith.addf %25, %33 : vector<160x256xf32>
    %35 = vector.extract_strided_slice %34 {offsets = [16, 128], sizes = [128, 128], strides = [1, 1]} : vector<160x256xf32> to vector<128x128xf32>
    %36 = vector.extract_strided_slice %34 {offsets = [0, 0], sizes = [160, 128], strides = [1, 1]} : vector<160x256xf32> to vector<160x128xf32>
    %cst_48 = arith.constant 0.000000e+00 : f32
    %37 = vector.broadcast %cst_48 : f32 to vector<160x128xf32>
    %38 = arith.maximumf %36, %37 : vector<160x128xf32>
    %39 = vector.shape_cast %38 : vector<160x128xf32> to vector<10x16x128xf32>
    %40 = arith.truncf %39 : vector<10x16x128xf32> to vector<10x16x128xbf16>
    %c0_49 = arith.constant 0 : index
    %c8_50 = arith.constant 8 : index
    %c0_51 = arith.constant 0 : index
    %41 = vector.load %arg10[%c0_49, %c8_50, %c0_51] : memref<10x32x128xbf16, #tpu.memory_space<vmem>>, vector<10x16x128xbf16>
    tpu.vector_store %arg10[%c0_49, %c8_50, %c0_51], %40 {strides = array<i32>} : memref<10x32x128xbf16, #tpu.memory_space<vmem>>, vector<10x16x128xbf16>,
    %cst_52 = arith.constant 0.000000e+00 : bf16
    %42 = vector.broadcast %cst_52 : bf16 to vector<10x1x128xbf16>
    %c0_53 = arith.constant 0 : index
    %c7_54 = arith.constant 7 : index
    %c0_55 = arith.constant 0 : index
    %43 = vector.load %arg10[%c0_53, %c7_54, %c0_55] : memref<10x32x128xbf16, #tpu.memory_space<vmem>>, vector<10x1x128xbf16>
    tpu.vector_store %arg10[%c0_53, %c7_54, %c0_55], %42 {strides = array<i32>} : memref<10x32x128xbf16, #tpu.memory_space<vmem>>, vector<10x1x128xbf16>,
    %c0_56 = arith.constant 0 : index
    %c24 = arith.constant 24 : index
    %c0_57 = arith.constant 0 : index
    %44 = vector.load %arg10[%c0_56, %c24, %c0_57] : memref<10x32x128xbf16, #tpu.memory_space<vmem>>, vector<10x1x128xbf16>
    tpu.vector_store %arg10[%c0_56, %c24, %c0_57], %42 {strides = array<i32>} : memref<10x32x128xbf16, #tpu.memory_space<vmem>>, vector<10x1x128xbf16>,
    %cst_58 = arith.constant 0.000000e+00 : bf16
    %45 = vector.broadcast %cst_58 : bf16 to vector<1x32x128xbf16>
    %c0_i32 = arith.constant 0 : i32
    %46 = arith.cmpi eq, %arg1, %c0_i32 : i32
    %47 = arith.extui %46 : i1 to i32
    %c0_i32_59 = arith.constant 0 : i32
    %48 = arith.cmpi ne, %47, %c0_i32_59 : i32
    scf.if %48 {
      %c0_107 = arith.constant 0 : index
      %c0_108 = arith.constant 0 : index
      %c0_109 = arith.constant 0 : index
      %87 = vector.load %arg10[%c0_107, %c0_108, %c0_109] : memref<10x32x128xbf16, #tpu.memory_space<vmem>>, vector<1x32x128xbf16>
      tpu.vector_store %arg10[%c0_107, %c0_108, %c0_109], %45 {strides = array<i32>} : memref<10x32x128xbf16, #tpu.memory_space<vmem>>, vector<1x32x128xbf16>,
    } else {
    }
    %c1_i32 = arith.constant 1 : i32
    %49 = arith.cmpi eq, %arg1, %c1_i32 : i32
    %50 = arith.extui %49 : i1 to i32
    %c0_i32_60 = arith.constant 0 : i32
    %51 = arith.cmpi ne, %50, %c0_i32_60 : i32
    scf.if %51 {
      %c9_107 = arith.constant 9 : index
      %c0_108 = arith.constant 0 : index
      %c0_109 = arith.constant 0 : index
      %87 = vector.load %arg10[%c9_107, %c0_108, %c0_109] : memref<10x32x128xbf16, #tpu.memory_space<vmem>>, vector<1x32x128xbf16>
      tpu.vector_store %arg10[%c9_107, %c0_108, %c0_109], %45 {strides = array<i32>} : memref<10x32x128xbf16, #tpu.memory_space<vmem>>, vector<1x32x128xbf16>,
    } else {
    }
    %c0_61 = arith.constant 0 : index
    %c0_62 = arith.constant 0 : index
    %52 = vector.load %arg7[%c0_61, %c0_62] : memref<1x128xf32, #tpu.memory_space<vmem>>, vector<1x128xf32>
    %c0_63 = arith.constant 0 : index
    %c7_64 = arith.constant 7 : index
    %c0_65 = arith.constant 0 : index
    %53 = vector.load %arg10[%c0_63, %c7_64, %c0_65] : memref<10x32x128xbf16, #tpu.memory_space<vmem>>, vector<8x16x128xbf16>
    %c0_66 = arith.constant 0 : index
    %c8_67 = arith.constant 8 : index
    %c0_68 = arith.constant 0 : index
    %54 = vector.load %arg10[%c0_66, %c8_67, %c0_68] : memref<10x32x128xbf16, #tpu.memory_space<vmem>>, vector<8x16x128xbf16>
    %c0_69 = arith.constant 0 : index
    %c9_70 = arith.constant 9 : index
    %c0_71 = arith.constant 0 : index
    %55 = vector.load %arg10[%c0_69, %c9_70, %c0_71] : memref<10x32x128xbf16, #tpu.memory_space<vmem>>, vector<8x16x128xbf16>
    %56 = tpu.concatenate %53, %54, %55 in 2 : vector<8x16x128xbf16>, vector<8x16x128xbf16>, vector<8x16x128xbf16> -> vector<8x16x384xbf16>
    %57 = vector.shape_cast %56 : vector<8x16x384xbf16> to vector<128x384xbf16>
    %c0_72 = arith.constant 0 : index
    %c0_73 = arith.constant 0 : index
    %c0_74 = arith.constant 0 : index
    %58 = vector.load %arg5[%c0_72, %c0_73, %c0_74] : memref<3x384x128xbf16, #tpu.memory_space<vmem>>, vector<1x384x128xbf16>
    %59 = vector.shape_cast %58 : vector<1x384x128xbf16> to vector<384x128xbf16>
    %cst_75 = arith.constant dense<0.000000e+00> : vector<128x128xf32>
    %60 = tpu.matmul %57, %59, %cst_75 {dimension_numbers = #tpu.dot_dimension_numbers<[1], [0], [0], [1], [0, 0, 1, 1], [], []>} : vector<128x384xbf16>, vector<384x128xbf16>, vector<128x128xf32> -> vector<128x128xf32>
    %61 = vector.broadcast %52 : vector<1x128xf32> to vector<128x128xf32>
    %62 = arith.addf %61, %60 : vector<128x128xf32>
    %c1_76 = arith.constant 1 : index
    %c7_77 = arith.constant 7 : index
    %c0_78 = arith.constant 0 : index
    %63 = vector.load %arg10[%c1_76, %c7_77, %c0_78] : memref<10x32x128xbf16, #tpu.memory_space<vmem>>, vector<8x16x128xbf16>
    %c1_79 = arith.constant 1 : index
    %c8_80 = arith.constant 8 : index
    %c0_81 = arith.constant 0 : index
    %64 = vector.load %arg10[%c1_79, %c8_80, %c0_81] : memref<10x32x128xbf16, #tpu.memory_space<vmem>>, vector<8x16x128xbf16>
    %c1_82 = arith.constant 1 : index
    %c9_83 = arith.constant 9 : index
    %c0_84 = arith.constant 0 : index
    %65 = vector.load %arg10[%c1_82, %c9_83, %c0_84] : memref<10x32x128xbf16, #tpu.memory_space<vmem>>, vector<8x16x128xbf16>
    %66 = tpu.concatenate %63, %64, %65 in 2 : vector<8x16x128xbf16>, vector<8x16x128xbf16>, vector<8x16x128xbf16> -> vector<8x16x384xbf16>
    %67 = vector.shape_cast %66 : vector<8x16x384xbf16> to vector<128x384xbf16>
    %c1_85 = arith.constant 1 : index
    %c0_86 = arith.constant 0 : index
    %c0_87 = arith.constant 0 : index
    %68 = vector.load %arg5[%c1_85, %c0_86, %c0_87] : memref<3x384x128xbf16, #tpu.memory_space<vmem>>, vector<1x384x128xbf16>
    %69 = vector.shape_cast %68 : vector<1x384x128xbf16> to vector<384x128xbf16>
    %cst_88 = arith.constant dense<0.000000e+00> : vector<128x128xf32>
    %70 = tpu.matmul %67, %69, %cst_88 {dimension_numbers = #tpu.dot_dimension_numbers<[1], [0], [0], [1], [0, 0, 1, 1], [], []>} : vector<128x384xbf16>, vector<384x128xbf16>, vector<128x128xf32> -> vector<128x128xf32>
    %71 = arith.addf %62, %70 : vector<128x128xf32>
    %c2_89 = arith.constant 2 : index
    %c7_90 = arith.constant 7 : index
    %c0_91 = arith.constant 0 : index
    %72 = vector.load %arg10[%c2_89, %c7_90, %c0_91] : memref<10x32x128xbf16, #tpu.memory_space<vmem>>, vector<8x16x128xbf16>
    %c2_92 = arith.constant 2 : index
    %c8_93 = arith.constant 8 : index
    %c0_94 = arith.constant 0 : index
    %73 = vector.load %arg10[%c2_92, %c8_93, %c0_94] : memref<10x32x128xbf16, #tpu.memory_space<vmem>>, vector<8x16x128xbf16>
    %c2_95 = arith.constant 2 : index
    %c9_96 = arith.constant 9 : index
    %c0_97 = arith.constant 0 : index
    %74 = vector.load %arg10[%c2_95, %c9_96, %c0_97] : memref<10x32x128xbf16, #tpu.memory_space<vmem>>, vector<8x16x128xbf16>
    %75 = tpu.concatenate %72, %73, %74 in 2 : vector<8x16x128xbf16>, vector<8x16x128xbf16>, vector<8x16x128xbf16> -> vector<8x16x384xbf16>
    %76 = vector.shape_cast %75 : vector<8x16x384xbf16> to vector<128x384xbf16>
    %c2_98 = arith.constant 2 : index
    %c0_99 = arith.constant 0 : index
    %c0_100 = arith.constant 0 : index
    %77 = vector.load %arg5[%c2_98, %c0_99, %c0_100] : memref<3x384x128xbf16, #tpu.memory_space<vmem>>, vector<1x384x128xbf16>
    %78 = vector.shape_cast %77 : vector<1x384x128xbf16> to vector<384x128xbf16>
    %cst_101 = arith.constant dense<0.000000e+00> : vector<128x128xf32>
    %79 = tpu.matmul %76, %78, %cst_101 {dimension_numbers = #tpu.dot_dimension_numbers<[1], [0], [0], [1], [0, 0, 1, 1], [], []>} : vector<128x384xbf16>, vector<384x128xbf16>, vector<128x128xf32> -> vector<128x128xf32>
    %80 = arith.addf %71, %79 : vector<128x128xf32>
    %81 = arith.addf %80, %35 : vector<128x128xf32>
    %cst_102 = arith.constant 0.000000e+00 : f32
    %82 = vector.broadcast %cst_102 : f32 to vector<128x128xf32>
    %83 = arith.maximumf %81, %82 : vector<128x128xf32>
    %84 = vector.shape_cast %83 : vector<128x128xf32> to vector<1x8x16x128xf32>
    %85 = arith.truncf %84 : vector<1x8x16x128xf32> to vector<1x8x16x128xbf16>
    %c0_103 = arith.constant 0 : index
    %c0_104 = arith.constant 0 : index
    %c0_105 = arith.constant 0 : index
    %c0_106 = arith.constant 0 : index
    %86 = vector.load %arg8[%c0_103, %c0_104, %c0_105, %c0_106] : memref<1x8x16x128xbf16, #tpu.memory_space<vmem>>, vector<1x8x16x128xbf16>
    tpu.vector_store %arg8[%c0_103, %c0_104, %c0_105, %c0_106], %85 {strides = array<i32>} : memref<1x8x16x128xbf16, #tpu.memory_space<vmem>>, vector<1x8x16x128xbf16>,
    return
  }
  func.func @transform_0(%arg0: i32, %arg1: i32) -> (i32, i32, i32, i32) {
    %c0_i32 = arith.constant 0 : i32
    %c0_i32_0 = arith.constant 0 : i32
    %c0_i32_1 = arith.constant 0 : i32
    return %arg0, %arg1, %c0_i32, %c0_i32_0 : i32, i32, i32, i32
  }
  func.func @transform_1(%arg0: i32, %arg1: i32) -> (i32, i32, i32, i32) {
    %c1_i32 = arith.constant 1 : i32
    %0 = arith.addi %arg1, %c1_i32 : i32
    %c2_i32 = arith.constant 2 : i32
    %1 = arith.muli %0, %c2_i32 : i32
    %c0_i32 = arith.constant 0 : i32
    %c0_i32_0 = arith.constant 0 : i32
    %c0_i32_1 = arith.constant 0 : i32
    return %arg0, %1, %c0_i32, %c0_i32_0 : i32, i32, i32, i32
  }
  func.func @transform_2(%arg0: i32, %arg1: i32) -> (i32, i32, i32) {
    %c0_i32 = arith.constant 0 : i32
    %c0_i32_0 = arith.constant 0 : i32
    %c0_i32_1 = arith.constant 0 : i32
    %c0_i32_2 = arith.constant 0 : i32
    return %c0_i32, %c0_i32_0, %c0_i32_1 : i32, i32, i32
  }
  func.func @transform_3(%arg0: i32, %arg1: i32) -> (i32, i32, i32) {
    %c0_i32 = arith.constant 0 : i32
    %c0_i32_0 = arith.constant 0 : i32
    %c0_i32_1 = arith.constant 0 : i32
    %c0_i32_2 = arith.constant 0 : i32
    return %c0_i32, %c0_i32_0, %c0_i32_1 : i32, i32, i32
  }
  func.func @transform_4(%arg0: i32, %arg1: i32) -> (i32, i32) {
    %c0_i32 = arith.constant 0 : i32
    %c0_i32_0 = arith.constant 0 : i32
    %c0_i32_1 = arith.constant 0 : i32
    return %c0_i32, %c0_i32_0 : i32, i32
  }
  func.func @transform_5(%arg0: i32, %arg1: i32) -> (i32, i32) {
    %c0_i32 = arith.constant 0 : i32
    %c0_i32_0 = arith.constant 0 : i32
    %c0_i32_1 = arith.constant 0 : i32
    return %c0_i32, %c0_i32_0 : i32, i32
  }
  func.func @transform_6(%arg0: i32, %arg1: i32) -> (i32, i32, i32, i32) {
    %c0_i32 = arith.constant 0 : i32
    %c0_i32_0 = arith.constant 0 : i32
    %c0_i32_1 = arith.constant 0 : i32
    return %arg0, %arg1, %c0_i32, %c0_i32_0 : i32, i32, i32, i32
  }
}

</mosaic_0001>

<llo_original>
// kernel: tpu_custom_call.1
$region0: #{tpu_custom_call.1}
  #allocation0 [shape = 'u32[]', space=smem, size = 0x4, offset = 0x4, fixed_abs, tag = 'smem constant byte address 0x4 - core index']
  #allocation1 [shape = 'u32[144,128]{1,0:T(1,128)}', space=vmem, size = 0x12000, scoped, tag = 'internal scratch']
  #allocation2 [shape = 'bf16[12,32,128]{2,1,0:T(8,128)(2,1)}', space=vmem, size = 0x18000, scoped, tag = 'scratch operand']
  #allocation3 [shape = 'bf16[10,32,128]{2,1,0:T(8,128)(2,1)}', space=vmem, size = 0x14000, scoped, tag = 'scratch operand']
  %s0 = inlined_call_operand.hbm [shape: bf16[2,20,32,128], index: 0, kind: input, shape index: {}]
  %s1 = inlined_call_operand.hbm [shape: bf16[2,20,32,128], index: 1, kind: input, shape index: {}]
  %s2 = inlined_call_operand.hbm [shape: bf16[3,384,256], index: 2, kind: input, shape index: {}]
  %s3 = inlined_call_operand.hbm [shape: bf16[3,384,128], index: 3, kind: input, shape index: {}]
  %s4 = inlined_call_operand.vmem [shape: f32[1,256], index: 4, kind: input, shape index: {}]
  %s5 = inlined_call_operand.vmem [shape: f32[1,128], index: 5, kind: input, shape index: {}]
  %s6 = inlined_call_operand.hbm [shape: bf16[2,16,16,128], index: 6, kind: output, shape index: {}]
  %s7 = sld [smem:[#allocation0]]
  $region81: #{tpu_custom_call.1} parent=0
    _
  %s9 = ssub.s32 1, %s7
  %s10 = scalar_select 0, %s9, %s7
  $region1: #{tpu_custom_call.1} parent=0
    #allocation4 [shape = 'u8[131072]{0}', space=vmem, size = 0x20000, scoped, tag = 'input window, operand 0']
    #allocation5 [shape = 's32[2]{0}', space=sflag, size = 0x8, scoped, tag = 'scoped memory for tpu_custom_call.1']
    #allocation6 [shape = 's32[2]{0}', space=sflag, size = 0x8, scoped, tag = 'scoped memory for tpu_custom_call.1']
    #allocation7 [shape = 'u8[65536]{0}', space=vmem, size = 0x10000, scoped, tag = 'input window, operand 1']
    #allocation8 [shape = 's32[2]{0}', space=sflag, size = 0x8, scoped, tag = 'scoped memory for tpu_custom_call.1']
    #allocation9 [shape = 'u8[589824]{0}', space=vmem, size = 0x90000, scoped, tag = 'input window, operand 2, single buffered']
    #allocation10 [shape = 'u8[294912]{0}', space=vmem, size = 0x48000, scoped, tag = 'input window, operand 3, single buffered']
    #allocation11 [shape = 's32[1]{0}', space=sflag, size = 0x4, scoped, tag = 'scoped memory for tpu_custom_call.1']
    #allocation12 [shape = 'u8[65536]{0}', space=vmem, size = 0x10000, scoped, tag = 'output window, operand 0']
    %11 = vsyncpa [#allocation5], 0
    %s12 = scalar_lea.sflag [#allocation5], 1
    %13 = vsyncpa %s12, 0
    %14 = vsyncpa [#allocation8], 0
    %s15 = scalar_lea.sflag [#allocation8], 1
    %16 = vsyncpa %s15, 0
    %17 = vsyncpa [#allocation11], 0
    %18 = vsyncpa [#allocation6], 0
    %s19 = scalar_lea.sflag [#allocation6], 1
    %20 = vsyncpa %s19, 0
    loop: start=0, step=1, limit=6
    $region2: #{tpu_custom_call.1} parent=1 // loop_pre_header
      _
    $region3: #{tpu_custom_call.1} parent=1 // loop_header
      %s22 = sphi 0, %s26
      %p23 = scmp.ge.s32.totalorder %s22, 6
      %s29 = sphi 0, %s41
      %s30 = sphi 0, %s37
      %s31 = sphi 0, %s29
      %s32 = sphi 0, %s30
      %s33 = sphi 0, %s31
      %s34 = sphi 0, %s32
      %s46 = sphi 0, %s48
      %s49 = sphi 0, %s46
      %s50 = sphi 0, %s49
      %s66 = sphi 0, %s50
      %s78 = sphi 0, %s80
      %s81 = sphi 0, %s78
      %s82 = sphi 0, %s81
      %s98 = sphi 0, %s82
      %s102 = sphi 0, %s102
      %s104 = sphi 0, %s102
      %s105 = sphi 0, %s104
      %s119 = sphi 0, %s105
      %s123 = sphi 0, %s123
      %s125 = sphi 0, %s123
      %s126 = sphi 0, %s125
      %s140 = sphi 0, %s126
      %s144 = sphi 0, %s144
      %s146 = sphi 0, %s144
      %s147 = sphi 0, %s146
      %s161 = sphi 0, %s147
      %s165 = sphi 0, %s165
      %s167 = sphi 0, %s165
      %s168 = sphi 0, %s167
      %s182 = sphi 0, %s168
      %s190 = sphi 0, %s192
      %s193 = sphi 0, %s190
      %s194 = sphi 0, %s193
      %s210 = sphi 0, %s194
    $region4: #{tpu_custom_call.1} parent=1 // loop_header_branch
      %25 = sbr.rel (%p23) target = $region8
    $region5: #{tpu_custom_call.1} parent=1 // loop_body
      %s27 = ssub.s32 %s22, 1
      %s28 = ssub.s32 %s22, 2
      %s35 = sadd.s32 1, %s30
      %p36 = scmp.ge.s32.totalorder %s35, 2
      %s37 = scalar_select %p36, 0, %s35
      %s38 = sadd.s32 1, %s29
      %s39 = scalar_select %p36, %s38, %s29
      %p40 = scmp.ge.s32.totalorder %s39, 2
      %s41 = scalar_select %p40, 0, %s39
      %s42 = ssub.s32 %s29, %s41
      %s43 = ssub.s32 %s30, %s37
      %s44 = sor.u32 %s42, %s43
      %p45 = scmp.eq.s32.totalorder %s44, 0
      %s47 = sadd.s32 %s46, 1
      %s48 = scalar_select %p45, %s46, %s47
      %p51 = pneg %p45
      %p52 = scmp.eq.s32.totalorder %s22, 3
      %p53 = por %p51, %p52
      %p54 = scmp.ne.s32.totalorder %s46, %s49
      %p55 = scmp.eq.s32.totalorder %s22, 0
      %p56 = por %p54, %p55
      %p57 = scmp.ne.s32.totalorder %s46, %s49
      %p58 = scmp.eq.s32.totalorder %s27, 3
      %p59 = por %p57, %p58
      %p60 = scmp.ne.s32.totalorder %s49, %s50
      %p61 = scmp.eq.s32.totalorder %s27, 0
      %p62 = por %p60, %p61
      %p63 = scmp.ne.s32.totalorder %s49, %s50
      %p64 = scmp.eq.s32.totalorder %s28, 3
      %p65 = por %p63, %p64
      %p67 = scmp.ne.s32.totalorder %s50, %s66
      %p68 = scmp.eq.s32.totalorder %s28, 0
      %p69 = por %p67, %p68
      %s70 = sadd.s32 %s30, 1
      %s71 = smul.u32 %s70, 2
      %s72 = sadd.s32 %s37, 1
      %s73 = smul.u32 %s72, 2
      %s74 = ssub.s32 %s29, %s41
      %s75 = ssub.s32 %s71, %s73
      %s76 = sor.u32 %s74, %s75
      %p77 = scmp.eq.s32.totalorder %s76, 0
      %s79 = sadd.s32 %s78, 1
      %s80 = scalar_select %p77, %s78, %s79
      %p83 = pneg %p77
      %p84 = scmp.eq.s32.totalorder %s22, 3
      %p85 = por %p83, %p84
      %p86 = scmp.ne.s32.totalorder %s78, %s81
      %p87 = scmp.eq.s32.totalorder %s22, 0
      %p88 = por %p86, %p87
      %p89 = scmp.ne.s32.totalorder %s78, %s81
      %p90 = scmp.eq.s32.totalorder %s27, 3
      %p91 = por %p89, %p90
      %p92 = scmp.ne.s32.totalorder %s81, %s82
      %p93 = scmp.eq.s32.totalorder %s27, 0
      %p94 = por %p92, %p93
      %p95 = scmp.ne.s32.totalorder %s81, %s82
      %p96 = scmp.eq.s32.totalorder %s28, 3
      %p97 = por %p95, %p96
      %p99 = scmp.ne.s32.totalorder %s82, %s98
      %p100 = scmp.eq.s32.totalorder %s28, 0
      %p101 = por %p99, %p100
      %s103 = sadd.s32 %s102, 1
      %p106 = scmp.eq.s32.totalorder %s22, 3
      %p107 = scmp.ne.s32.totalorder %s102, %s104
      %p108 = scmp.eq.s32.totalorder %s22, 0
      %p109 = por %p107, %p108
      %p110 = scmp.ne.s32.totalorder %s102, %s104
      %p111 = scmp.eq.s32.totalorder %s27, 3
      %p112 = por %p110, %p111
      %p113 = scmp.ne.s32.totalorder %s104, %s105
      %p114 = scmp.eq.s32.totalorder %s27, 0
      %p115 = por %p113, %p114
      %p116 = scmp.ne.s32.totalorder %s104, %s105
      %p117 = scmp.eq.s32.totalorder %s28, 3
      %p118 = por %p116, %p117
      %p120 = scmp.ne.s32.totalorder %s105, %s119
      %p121 = scmp.eq.s32.totalorder %s28, 0
      %p122 = por %p120, %p121
      %s124 = sadd.s32 %s123, 1
      %p127 = scmp.eq.s32.totalorder %s22, 3
      %p128 = scmp.ne.s32.totalorder %s123, %s125
      %p129 = scmp.eq.s32.totalorder %s22, 0
      %p130 = por %p128, %p129
      %p131 = scmp.ne.s32.totalorder %s123, %s125
      %p132 = scmp.eq.s32.totalorder %s27, 3
      %p133 = por %p131, %p132
      %p134 = scmp.ne.s32.totalorder %s125, %s126
      %p135 = scmp.eq.s32.totalorder %s27, 0
      %p136 = por %p134, %p135
      %p137 = scmp.ne.s32.totalorder %s125, %s126
      %p138 = scmp.eq.s32.totalorder %s28, 3
      %p139 = por %p137, %p138
      %p141 = scmp.ne.s32.totalorder %s126, %s140
      %p142 = scmp.eq.s32.totalorder %s28, 0
      %p143 = por %p141, %p142
      %s145 = sadd.s32 %s144, 1
      %p148 = scmp.eq.s32.totalorder %s22, 3
      %p149 = scmp.ne.s32.totalorder %s144, %s146
      %p150 = scmp.eq.s32.totalorder %s22, 0
      %p151 = por %p149, %p150
      %p152 = scmp.ne.s32.totalorder %s144, %s146
      %p153 = scmp.eq.s32.totalorder %s27, 3
      %p154 = por %p152, %p153
      %p155 = scmp.ne.s32.totalorder %s146, %s147
      %p156 = scmp.eq.s32.totalorder %s27, 0
      %p157 = por %p155, %p156
      %p158 = scmp.ne.s32.totalorder %s146, %s147
      %p159 = scmp.eq.s32.totalorder %s28, 3
      %p160 = por %p158, %p159
      %p162 = scmp.ne.s32.totalorder %s147, %s161
      %p163 = scmp.eq.s32.totalorder %s28, 0
      %p164 = por %p162, %p163
      %s166 = sadd.s32 %s165, 1
      %p169 = scmp.eq.s32.totalorder %s22, 3
      %p170 = scmp.ne.s32.totalorder %s165, %s167
      %p171 = scmp.eq.s32.totalorder %s22, 0
      %p172 = por %p170, %p171
      %p173 = scmp.ne.s32.totalorder %s165, %s167
      %p174 = scmp.eq.s32.totalorder %s27, 3
      %p175 = por %p173, %p174
      %p176 = scmp.ne.s32.totalorder %s167, %s168
      %p177 = scmp.eq.s32.totalorder %s27, 0
      %p178 = por %p176, %p177
      %p179 = scmp.ne.s32.totalorder %s167, %s168
      %p180 = scmp.eq.s32.totalorder %s28, 3
      %p181 = por %p179, %p180
      %p183 = scmp.ne.s32.totalorder %s168, %s182
      %p184 = scmp.eq.s32.totalorder %s28, 0
      %p185 = por %p183, %p184
      %s186 = ssub.s32 %s29, %s41
      %s187 = ssub.s32 %s30, %s37
      %s188 = sor.u32 %s186, %s187
      %p189 = scmp.eq.s32.totalorder %s188, 0
      %s191 = sadd.s32 %s190, 1
      %s192 = scalar_select %p189, %s190, %s191
      %p195 = pneg %p189
      %p196 = scmp.eq.s32.totalorder %s22, 3
      %p197 = por %p195, %p196
      %p198 = scmp.ne.s32.totalorder %s190, %s193
      %p199 = scmp.eq.s32.totalorder %s22, 0
      %p200 = por %p198, %p199
      %p201 = scmp.ne.s32.totalorder %s190, %s193
      %p202 = scmp.eq.s32.totalorder %s27, 3
      %p203 = por %p201, %p202
      %p204 = scmp.ne.s32.totalorder %s193, %s194
      %p205 = scmp.eq.s32.totalorder %s27, 0
      %p206 = por %p204, %p205
      %p207 = scmp.ne.s32.totalorder %s193, %s194
      %p208 = scmp.eq.s32.totalorder %s28, 3
      %p209 = por %p207, %p208
      %p211 = scmp.ne.s32.totalorder %s194, %s210
      %p212 = scmp.eq.s32.totalorder %s28, 0
      %p213 = por %p211, %p212
      %p214 = scmp.le.s32.totalorder 1, %s22
      %p215 = scmp.lt.s32.totalorder %s22, 5
      %p216 = pnand %p214, %p215
      %p217 = pneg %p216
      // Predicated region
      $region9: #{tpu_custom_call.1} parent=5 // pred_check
        _
      $region10: #{tpu_custom_call.1} parent=5 // pred_check_branch
        %219 = sbr.rel (%p216) target = $region12
      $region11: #{tpu_custom_call.1} parent=5 // pred_region
        %s220 = ssub.s32 %s22, 1
        // Predicated region
        $region13: #{tpu_custom_call.1} parent=11 // pred_check
          %p221 = pneg %p115
        $region14: #{tpu_custom_call.1} parent=11 // pred_check_branch
          %223 = sbr.rel (%p221) target = $region16
        $region15: #{tpu_custom_call.1} parent=11 // pred_region
          %s225 = ssub.s32 18432, 18432
          %226 = vsyncadd [#allocation8], %s225
          %s227 = sshll.u32 [#allocation9], 4
          %s228 = int_to_ptr.vmem [resolvable:$true] %s227
          %233 = dma.hbm_to_vmem [thread:$0]  %s2, 18432, %s228, [#allocation8], 128, 128, 8
        $region16: #{tpu_custom_call.1} parent=11 // pred_fallthru
          _
        // Predicated region
        $region17: #{tpu_custom_call.1} parent=11 // pred_check
          %p234 = pneg %p136
        $region18: #{tpu_custom_call.1} parent=11 // pred_check_branch
          %236 = sbr.rel (%p234) target = $region20
        $region19: #{tpu_custom_call.1} parent=11 // pred_region
          %s238 = ssub.s32 9216, 9216
          %239 = vsyncadd [#allocation11], %s238
          %s240 = sshll.u32 [#allocation10], 4
          %s241 = int_to_ptr.vmem [resolvable:$true] %s240
          %246 = dma.hbm_to_vmem [thread:$0]  %s3, 9216, %s241, [#allocation11], 64, 64, 4
        $region20: #{tpu_custom_call.1} parent=11 // pred_fallthru
          _
        // Predicated region
        $region21: #{tpu_custom_call.1} parent=11 // pred_check
          %p247 = pneg %p157
        $region22: #{tpu_custom_call.1} parent=11 // pred_check_branch
          %249 = sbr.rel (%p247) target = $region24
        $region23: #{tpu_custom_call.1} parent=11 // pred_region
          _
        $region24: #{tpu_custom_call.1} parent=11 // pred_fallthru
          _
        // Predicated region
        $region25: #{tpu_custom_call.1} parent=11 // pred_check
          %p250 = pneg %p178
        $region26: #{tpu_custom_call.1} parent=11 // pred_check_branch
          %252 = sbr.rel (%p250) target = $region28
        $region27: #{tpu_custom_call.1} parent=11 // pred_region
          _
        $region28: #{tpu_custom_call.1} parent=11 // pred_fallthru
          _
      $region12: #{tpu_custom_call.1} parent=5 // pred_fallthru
        _
      %p253 = scmp.lt.s32.totalorder %s22, 4
      // Predicated region
      $region29: #{tpu_custom_call.1} parent=5 // pred_check
        %p254 = pneg %p253
      $region30: #{tpu_custom_call.1} parent=5 // pred_check_branch
        %256 = sbr.rel (%p254) target = $region32
      $region31: #{tpu_custom_call.1} parent=5 // pred_region
        // Predicated region
        $region33: #{tpu_custom_call.1} parent=31 // pred_check
          %p257 = pneg %p56
        $region34: #{tpu_custom_call.1} parent=31 // pred_check_branch
          %259 = sbr.rel (%p257) target = $region36
        $region35: #{tpu_custom_call.1} parent=31 // pred_region
          %s260 = sand.u32 %s46, 1
          %s261 = scalar_lea.sflag [#allocation5], %s260
          %s262 = sand.u32 %s46, 1
          %s263 = smul.addr %s262, 128
          %s264 = scalar_lea.vmem [#allocation4], %s263
          %s265 = smul.u32 8, %s30
          %s266 = ssub.s32 20, %s265
          %p267 = scmp.lt.s32.totalorder %s266, 8
          %s268 = scalar_select %p267, %s266, 8
          %s269 = smul.u32 64, %s268
          %s270 = smul.u32 %s269, 4
          %s272 = ssub.s32 2048, %s270
          %273 = vsyncadd %s261, %s272
          %p274 = scmp.ne.s32.totalorder 0, %s270
          %s275 = smul.addr %s265, 4
          %s276 = smul.addr %s29, 80
          %s277 = sadd.s32 %s275, %s276
          %s278 = smul.addr %s277, 64
          %s279 = scalar_lea.hbm %s0, %s278
          %s280 = smul.u32 %s268, 4
          %s281 = smul.u32 4, %s280
          %s282 = sshll.u32 %s264, 4
          %s283 = int_to_ptr.vmem [resolvable:$true] %s282
          %s284 = sshll.u32 %s281, 4
          %288 = dma.hbm_to_vmem [thread:$0]  (%p274), %s279, %s284, %s283, %s261, 64, 64, 4
        $region36: #{tpu_custom_call.1} parent=31 // pred_fallthru
          _
        // Predicated region
        $region37: #{tpu_custom_call.1} parent=31 // pred_check
          %p289 = pneg %p88
        $region38: #{tpu_custom_call.1} parent=31 // pred_check_branch
          %291 = sbr.rel (%p289) target = $region40
        $region39: #{tpu_custom_call.1} parent=31 // pred_region
          %s292 = sand.u32 %s22, 1
          %s293 = scalar_lea.sflag [#allocation8], %s292
          %s294 = sand.u32 %s78, 1
          %s295 = smul.addr %s294, 64
          %s296 = scalar_lea.vmem [#allocation7], %s295
          %s297 = sadd.s32 %s30, 1
          %s298 = smul.u32 %s297, 2
          %s299 = smul.u32 4, %s298
          %s301 = ssub.s32 1024, 1024
          %302 = vsyncadd %s293, %s301
          %s303 = smul.addr %s299, 4
          %s304 = smul.addr %s29, 80
          %s305 = sadd.s32 %s303, %s304
          %s306 = smul.addr %s305, 64
          %s307 = scalar_lea.hbm %s1, %s306
          %s308 = sshll.u32 %s296, 4
          %s309 = int_to_ptr.vmem [resolvable:$true] %s308
          %314 = dma.hbm_to_vmem [thread:$0]  %s307, 1024, %s309, %s293, 64, 64, 4
        $region40: #{tpu_custom_call.1} parent=31 // pred_fallthru
          _
      $region32: #{tpu_custom_call.1} parent=5 // pred_fallthru
        _
      %p315 = scmp.le.s32.totalorder 1, %s22
      %p316 = scmp.lt.s32.totalorder %s22, 5
      %p317 = pnand %p315, %p316
      %p318 = pneg %p317
      // Predicated region
      $region41: #{tpu_custom_call.1} parent=5 // pred_check
        _
      $region42: #{tpu_custom_call.1} parent=5 // pred_check_branch
        %320 = sbr.rel (%p317) target = $region44
      $region43: #{tpu_custom_call.1} parent=5 // pred_region
        %s321 = ssub.s32 %s22, 1
        %s322 = sand.u32 %s49, 1
        %s323 = scalar_lea.sflag [#allocation5], %s322
        %s324 = sand.u32 %s49, 1
        %s325 = smul.addr %s324, 128
        %s326 = scalar_lea.vmem [#allocation4], %s325
        // Predicated region
        $region45: #{tpu_custom_call.1} parent=43 // pred_check
          %p327 = pneg %p62
        $region46: #{tpu_custom_call.1} parent=43 // pred_check_branch
          %329 = sbr.rel (%p327) target = $region48
        $region47: #{tpu_custom_call.1} parent=43 // pred_region
          %330 = dma.done %s323, 2048
        $region48: #{tpu_custom_call.1} parent=43 // pred_fallthru
          _
        %s331 = sand.u32 %s27, 1
        %s332 = scalar_lea.sflag [#allocation8], %s331
        %s333 = sand.u32 %s81, 1
        %s334 = smul.addr %s333, 64
        %s335 = scalar_lea.vmem [#allocation7], %s334
        // Predicated region
        $region49: #{tpu_custom_call.1} parent=43 // pred_check
          %p336 = pneg %p94
        $region50: #{tpu_custom_call.1} parent=43 // pred_check_branch
          %338 = sbr.rel (%p336) target = $region52
        $region51: #{tpu_custom_call.1} parent=43 // pred_region
          %339 = dma.done %s332, 1024
        $region52: #{tpu_custom_call.1} parent=43 // pred_fallthru
          _
        // Predicated region
        $region53: #{tpu_custom_call.1} parent=43 // pred_check
          %p340 = pneg %p115
        $region54: #{tpu_custom_call.1} parent=43 // pred_check_branch
          %342 = sbr.rel (%p340) target = $region56
        $region55: #{tpu_custom_call.1} parent=43 // pred_region
          %343 = dma.done [#allocation8], 18432
        $region56: #{tpu_custom_call.1} parent=43 // pred_fallthru
          _
        // Predicated region
        $region57: #{tpu_custom_call.1} parent=43 // pred_check
          %p344 = pneg %p136
        $region58: #{tpu_custom_call.1} parent=43 // pred_check_branch
          %346 = sbr.rel (%p344) target = $region60
        $region59: #{tpu_custom_call.1} parent=43 // pred_region
          %347 = dma.done [#allocation11], 9216
        $region60: #{tpu_custom_call.1} parent=43 // pred_fallthru
          _
        %s348 = sand.u32 %s49, 1
        %s349 = scalar_lea.sflag [#allocation5], %s348
        %s350 = sand.u32 %s49, 1
        %s351 = smul.addr %s350, 128
        %s352 = scalar_lea.vmem [#allocation4], %s351
        %p353 = pneg %p62
        %p354 = pneg %p59
        %s355 = sand.u32 %s27, 1
        %s356 = scalar_lea.sflag [#allocation8], %s355
        %s357 = sand.u32 %s81, 1
        %s358 = smul.addr %s357, 64
        %s359 = scalar_lea.vmem [#allocation7], %s358
        %p360 = pneg %p94
        %p361 = pneg %p91
        %p362 = pneg %p115
        %p363 = pneg %p112
        %p364 = pneg %p136
        %p365 = pneg %p133
        %p366 = pneg %p157
        %p367 = pneg %p154
        %p368 = pneg %p178
        %p369 = pneg %p175
        %p370 = pneg %p206
        %p371 = pneg %p203
        %s372 = sand.u32 %s193, 1
        %s373 = scalar_lea.sflag [#allocation6], %s372
        %s374 = sand.u32 %s193, 1
        %s375 = smul.addr %s374, 64
        %s376 = scalar_lea.vmem [#allocation12], %s375
        %s377 = smul.u32 8, %s32
        %s378 = ssub.s32 20, %s377
        %p379 = scmp.lt.s32.totalorder %s378, 8
        %s380 = scalar_select %p379, %s378, 8
        %s381 = smul.u32 64, %s380
        %s382 = smul.u32 %s381, 4
        %s383 = sadd.s32 %s32, 1
        %s384 = smul.u32 %s383, 2
        %s385 = smul.u32 4, %s384
        %s386 = smul.u32 8, %s32
        %v388 = vld [vmem:[%s326] sm:$0xf]
        %v389 = vld [vmem:[%s326 + $0x4] sm:$0xf]
        %v390 = vld [vmem:[%s326 + $0x8] sm:$0xf]
        %v391 = vld [vmem:[%s326 + $0xc] sm:$0xf]
        %v392 = vld [vmem:[%s326 + $0x10] sm:$0xf]
        %v393 = vld [vmem:[%s326 + $0x14] sm:$0xf]
        %v394 = vld [vmem:[%s326 + $0x18] sm:$0xf]
        %v395 = vld [vmem:[%s326 + $0x1c] sm:$0xf]
        %v396 = vld [vmem:[%s326 + $0x20] sm:$0xf]
        %v397 = vld [vmem:[%s326 + $0x24] sm:$0xf]
        %v398 = vld [vmem:[%s326 + $0x28] sm:$0xf]
        %v399 = vld [vmem:[%s326 + $0x2c] sm:$0xf]
        %v400 = vld [vmem:[%s326 + $0x30] sm:$0xf]
        %v401 = vld [vmem:[%s326 + $0x34] sm:$0xf]
        %v402 = vld [vmem:[%s326 + $0x38] sm:$0xf]
        %v403 = vld [vmem:[%s326 + $0x3c] sm:$0xf]
        %v404 = vld [vmem:[%s326 + $0x40] sm:$0xf]
        %v405 = vld [vmem:[%s326 + $0x44] sm:$0xf]
        %v406 = vld [vmem:[%s326 + $0x48] sm:$0xf]
        %v407 = vld [vmem:[%s326 + $0x4c] sm:$0xf]
        %v408 = vld [vmem:[%s326 + $0x50] sm:$0xf]
        %v409 = vld [vmem:[%s326 + $0x54] sm:$0xf]
        %v410 = vld [vmem:[%s326 + $0x58] sm:$0xf]
        %v411 = vld [vmem:[%s326 + $0x5c] sm:$0xf]
        %v412 = vld [vmem:[%s326 + $0x60] sm:$0xf]
        %v413 = vld [vmem:[%s326 + $0x64] sm:$0xf]
        %v414 = vld [vmem:[%s326 + $0x68] sm:$0xf]
        %v415 = vld [vmem:[%s326 + $0x6c] sm:$0xf]
        %v416 = vld [vmem:[%s326 + $0x70] sm:$0xf]
        %v417 = vld [vmem:[%s326 + $0x74] sm:$0xf]
        %v418 = vld [vmem:[%s326 + $0x78] sm:$0xf]
        %v419 = vld [vmem:[%s326 + $0x7c] sm:$0xf]
        %420 = vst [vmem:[#allocation2] sm:$0xf] %v388
        %421 = vst [vmem:[#allocation2 + $0x4] sm:$0xf] %v389
        %422 = vst [vmem:[#allocation2 + $0x8] sm:$0xf] %v390
        %423 = vst [vmem:[#allocation2 + $0xc] sm:$0xf] %v391
        %424 = vst [vmem:[#allocation2 + $0x10] sm:$0xf] %v392
        %425 = vst [vmem:[#allocation2 + $0x14] sm:$0xf] %v393
        %426 = vst [vmem:[#allocation2 + $0x18] sm:$0xf] %v394
        %427 = vst [vmem:[#allocation2 + $0x1c] sm:$0xf] %v395
        %428 = vst [vmem:[#allocation2 + $0x20] sm:$0xf] %v396
        %429 = vst [vmem:[#allocation2 + $0x24] sm:$0xf] %v397
        %430 = vst [vmem:[#allocation2 + $0x28] sm:$0xf] %v398
        %431 = vst [vmem:[#allocation2 + $0x2c] sm:$0xf] %v399
        %432 = vst [vmem:[#allocation2 + $0x30] sm:$0xf] %v400
        %433 = vst [vmem:[#allocation2 + $0x34] sm:$0xf] %v401
        %434 = vst [vmem:[#allocation2 + $0x38] sm:$0xf] %v402
        %435 = vst [vmem:[#allocation2 + $0x3c] sm:$0xf] %v403
        %436 = vst [vmem:[#allocation2 + $0x40] sm:$0xf] %v404
        %437 = vst [vmem:[#allocation2 + $0x44] sm:$0xf] %v405
        %438 = vst [vmem:[#allocation2 + $0x48] sm:$0xf] %v406
        %439 = vst [vmem:[#allocation2 + $0x4c] sm:$0xf] %v407
        %440 = vst [vmem:[#allocation2 + $0x50] sm:$0xf] %v408
        %441 = vst [vmem:[#allocation2 + $0x54] sm:$0xf] %v409
        %442 = vst [vmem:[#allocation2 + $0x58] sm:$0xf] %v410
        %443 = vst [vmem:[#allocation2 + $0x5c] sm:$0xf] %v411
        %444 = vst [vmem:[#allocation2 + $0x60] sm:$0xf] %v412
        %445 = vst [vmem:[#allocation2 + $0x64] sm:$0xf] %v413
        %446 = vst [vmem:[#allocation2 + $0x68] sm:$0xf] %v414
        %447 = vst [vmem:[#allocation2 + $0x6c] sm:$0xf] %v415
        %448 = vst [vmem:[#allocation2 + $0x70] sm:$0xf] %v416
        %449 = vst [vmem:[#allocation2 + $0x74] sm:$0xf] %v417
        %450 = vst [vmem:[#allocation2 + $0x78] sm:$0xf] %v418
        %451 = vst [vmem:[#allocation2 + $0x7c] sm:$0xf] %v419
        %v452 = vld [vmem:[%s335] sm:$0xf]
        %v453 = vld [vmem:[%s335 + $0x4] sm:$0xf]
        %v454 = vld [vmem:[%s335 + $0x8] sm:$0xf]
        %v455 = vld [vmem:[%s335 + $0xc] sm:$0xf]
        %v456 = vld [vmem:[%s335 + $0x10] sm:$0xf]
        %v457 = vld [vmem:[%s335 + $0x14] sm:$0xf]
        %v458 = vld [vmem:[%s335 + $0x18] sm:$0xf]
        %v459 = vld [vmem:[%s335 + $0x1c] sm:$0xf]
        %v460 = vld [vmem:[%s335 + $0x20] sm:$0xf]
        %v461 = vld [vmem:[%s335 + $0x24] sm:$0xf]
        %v462 = vld [vmem:[%s335 + $0x28] sm:$0xf]
        %v463 = vld [vmem:[%s335 + $0x2c] sm:$0xf]
        %v464 = vld [vmem:[%s335 + $0x30] sm:$0xf]
        %v465 = vld [vmem:[%s335 + $0x34] sm:$0xf]
        %v466 = vld [vmem:[%s335 + $0x38] sm:$0xf]
        %v467 = vld [vmem:[%s335 + $0x3c] sm:$0xf]
        %s468 = scalar_lea.vmem [#allocation2], 128
        %469 = vst [vmem:[%s468] sm:$0xf] %v452
        %470 = vst [vmem:[%s468 + $0x4] sm:$0xf] %v453
        %471 = vst [vmem:[%s468 + $0x8] sm:$0xf] %v454
        %472 = vst [vmem:[%s468 + $0xc] sm:$0xf] %v455
        %473 = vst [vmem:[%s468 + $0x10] sm:$0xf] %v456
        %474 = vst [vmem:[%s468 + $0x14] sm:$0xf] %v457
        %475 = vst [vmem:[%s468 + $0x18] sm:$0xf] %v458
        %476 = vst [vmem:[%s468 + $0x1c] sm:$0xf] %v459
        %477 = vst [vmem:[%s468 + $0x20] sm:$0xf] %v460
        %478 = vst [vmem:[%s468 + $0x24] sm:$0xf] %v461
        %479 = vst [vmem:[%s468 + $0x28] sm:$0xf] %v462
        %480 = vst [vmem:[%s468 + $0x2c] sm:$0xf] %v463
        %481 = vst [vmem:[%s468 + $0x30] sm:$0xf] %v464
        %482 = vst [vmem:[%s468 + $0x34] sm:$0xf] %v465
        %483 = vst [vmem:[%s468 + $0x38] sm:$0xf] %v466
        %484 = vst [vmem:[%s468 + $0x3c] sm:$0xf] %v467
        %v485 = vld [vmem:[%s4] sm:$0x3]
        %v486 = vld [vmem:[#allocation2] sm:$0x8]
        %v487 = vld [vmem:[#allocation2 + $0x4] sm:$0xf]
        %v488 = vld [vmem:[#allocation2 + $0x8] sm:$0xf]
        %v489 = vld [vmem:[#allocation2 + $0x10] sm:$0x8]
        %v490 = vld [vmem:[#allocation2 + $0x14] sm:$0xf]
        %v491 = vld [vmem:[#allocation2 + $0x18] sm:$0xf]
        %v492 = vld [vmem:[#allocation2 + $0x20] sm:$0x8]
        %v493 = vld [vmem:[#allocation2 + $0x24] sm:$0xf]
        %v494 = vld [vmem:[#allocation2 + $0x28] sm:$0xf]
        %v495 = vld [vmem:[#allocation2 + $0x30] sm:$0x8]
        %v496 = vld [vmem:[#allocation2 + $0x34] sm:$0xf]
        %v497 = vld [vmem:[#allocation2 + $0x38] sm:$0xf]
        %v498 = vld [vmem:[#allocation2 + $0x40] sm:$0x8]
        %v499 = vld [vmem:[#allocation2 + $0x44] sm:$0xf]
        %v500 = vld [vmem:[#allocation2 + $0x48] sm:$0xf]
        %v501 = vld [vmem:[#allocation2 + $0x50] sm:$0x8]
        %v502 = vld [vmem:[#allocation2 + $0x54] sm:$0xf]
        %v503 = vld [vmem:[#allocation2 + $0x58] sm:$0xf]
        %v504 = vld [vmem:[#allocation2 + $0x60] sm:$0x8]
        %v505 = vld [vmem:[#allocation2 + $0x64] sm:$0xf]
        %v506 = vld [vmem:[#allocation2 + $0x68] sm:$0xf]
        %v507 = vld [vmem:[#allocation2 + $0x70] sm:$0x8]
        %v508 = vld [vmem:[#allocation2 + $0x74] sm:$0xf]
        %v509 = vld [vmem:[#allocation2 + $0x78] sm:$0xf]
        %v510 = vld [vmem:[#allocation2 + $0x80] sm:$0x8]
        %v511 = vld [vmem:[#allocation2 + $0x84] sm:$0xf]
        %v512 = vld [vmem:[#allocation2 + $0x88] sm:$0xf]
        %v513 = vld [vmem:[#allocation2 + $0x90] sm:$0x8]
        %v514 = vld [vmem:[#allocation2 + $0x94] sm:$0xf]
        %v515 = vld [vmem:[#allocation2 + $0x98] sm:$0xf]
        %v516 = vld [vmem:[#allocation2 + $0xc] sm:$0x1]
        %v517 = vld [vmem:[#allocation2 + $0x1c] sm:$0x1]
        %v518 = vld [vmem:[#allocation2 + $0x2c] sm:$0x1]
        %v519 = vld [vmem:[#allocation2 + $0x3c] sm:$0x1]
        %v520 = vld [vmem:[#allocation2 + $0x4c] sm:$0x1]
        %v521 = vld [vmem:[#allocation2 + $0x5c] sm:$0x1]
        %v522 = vld [vmem:[#allocation2 + $0x6c] sm:$0x1]
        %v523 = vld [vmem:[#allocation2 + $0x7c] sm:$0x1]
        %v524 = vld [vmem:[#allocation2 + $0x8c] sm:$0x1]
        %v525 = vld [vmem:[#allocation2 + $0x9c] sm:$0x1]
        %v556 = vunpack.c.l.b16 %v486
        %v557 = vunpack.c.l.b16 %v487
        %v558 = vunpack.c.l.b16 %v488
        %v559 = vunpack.c.l.b16 %v489
        %v560 = vunpack.c.l.b16 %v490
        %v561 = vunpack.c.l.b16 %v491
        %v562 = vunpack.c.l.b16 %v492
        %v563 = vunpack.c.l.b16 %v493
        %v564 = vunpack.c.l.b16 %v494
        %v565 = vunpack.c.l.b16 %v495
        %v566 = vunpack.c.l.b16 %v496
        %v567 = vunpack.c.l.b16 %v497
        %v568 = vunpack.c.l.b16 %v498
        %v569 = vunpack.c.l.b16 %v499
        %v570 = vunpack.c.l.b16 %v500
        %v571 = vunpack.c.l.b16 %v501
        %v572 = vunpack.c.l.b16 %v502
        %v573 = vunpack.c.l.b16 %v503
        %v574 = vunpack.c.l.b16 %v504
        %v575 = vunpack.c.l.b16 %v505
        %v576 = vunpack.c.l.b16 %v506
        %v577 = vunpack.c.l.b16 %v507
        %v578 = vunpack.c.l.b16 %v508
        %v579 = vunpack.c.l.b16 %v509
        %v580 = vunpack.c.l.b16 %v510
        %v581 = vunpack.c.l.b16 %v511
        %v582 = vunpack.c.l.b16 %v512
        %v583 = vunpack.c.l.b16 %v513
        %v584 = vunpack.c.l.b16 %v514
        %v585 = vunpack.c.l.b16 %v515
        %v586 = vpack.c.b16 %v557, %v556
        %v587 = vpack.c.b16 %v558, %v558
        %v588 = vpack.c.b16 %v560, %v559
        %v589 = vpack.c.b16 %v561, %v561
        %v590 = vpack.c.b16 %v563, %v562
        %v591 = vpack.c.b16 %v564, %v564
        %v592 = vpack.c.b16 %v566, %v565
        %v593 = vpack.c.b16 %v567, %v567
        %v594 = vpack.c.b16 %v569, %v568
        %v595 = vpack.c.b16 %v570, %v570
        %v596 = vpack.c.b16 %v572, %v571
        %v597 = vpack.c.b16 %v573, %v573
        %v598 = vpack.c.b16 %v575, %v574
        %v599 = vpack.c.b16 %v576, %v576
        %v600 = vpack.c.b16 %v578, %v577
        %v601 = vpack.c.b16 %v579, %v579
        %v602 = vpack.c.b16 %v581, %v580
        %v603 = vpack.c.b16 %v582, %v582
        %v604 = vpack.c.b16 %v584, %v583
        %v605 = vpack.c.b16 %v585, %v585
        %v606 = vpack.c.b16 %v558, %v557
        %v607 = vpack.c.b16 %v561, %v560
        %v608 = vpack.c.b16 %v564, %v563
        %v609 = vpack.c.b16 %v567, %v566
        %v610 = vpack.c.b16 %v570, %v569
        %v611 = vpack.c.b16 %v573, %v572
        %v612 = vpack.c.b16 %v576, %v575
        %v613 = vpack.c.b16 %v579, %v578
        %v614 = vpack.c.b16 %v582, %v581
        %v615 = vpack.c.b16 %v585, %v584
        %v617 = vshrl.u32 %v606, 16
        %v619 = vrot.slane %v617, 4
        %v620 = vshll.u32 %v606, 16
        %v622 = vrot.slane %v620, 5
        %v623 = vor.u32 %v619, %v622
        %v625 = vshrl.u32 %v607, 16
        %v627 = vrot.slane %v625, 4
        %v628 = vshll.u32 %v607, 16
        %v630 = vrot.slane %v628, 5
        %v631 = vor.u32 %v627, %v630
        %v633 = vshrl.u32 %v608, 16
        %v635 = vrot.slane %v633, 4
        %v636 = vshll.u32 %v608, 16
        %v638 = vrot.slane %v636, 5
        %v639 = vor.u32 %v635, %v638
        %v641 = vshrl.u32 %v609, 16
        %v643 = vrot.slane %v641, 4
        %v644 = vshll.u32 %v609, 16
        %v646 = vrot.slane %v644, 5
        %v647 = vor.u32 %v643, %v646
        %v649 = vshrl.u32 %v610, 16
        %v651 = vrot.slane %v649, 4
        %v652 = vshll.u32 %v610, 16
        %v654 = vrot.slane %v652, 5
        %v655 = vor.u32 %v651, %v654
        %v657 = vshrl.u32 %v611, 16
        %v659 = vrot.slane %v657, 4
        %v660 = vshll.u32 %v611, 16
        %v662 = vrot.slane %v660, 5
        %v663 = vor.u32 %v659, %v662
        %v665 = vshrl.u32 %v612, 16
        %v667 = vrot.slane %v665, 4
        %v668 = vshll.u32 %v612, 16
        %v670 = vrot.slane %v668, 5
        %v671 = vor.u32 %v667, %v670
        %v673 = vshrl.u32 %v613, 16
        %v675 = vrot.slane %v673, 4
        %v676 = vshll.u32 %v613, 16
        %v678 = vrot.slane %v676, 5
        %v679 = vor.u32 %v675, %v678
        %v681 = vshrl.u32 %v614, 16
        %v683 = vrot.slane %v681, 4
        %v684 = vshll.u32 %v614, 16
        %v686 = vrot.slane %v684, 5
        %v687 = vor.u32 %v683, %v686
        %v689 = vshrl.u32 %v615, 16
        %v691 = vrot.slane %v689, 4
        %v692 = vshll.u32 %v615, 16
        %v694 = vrot.slane %v692, 5
        %v695 = vor.u32 %v691, %v694
        %v706 = vunpack.c.l.b16 %v516
        %v707 = vunpack.c.l.b16 %v517
        %v708 = vunpack.c.l.b16 %v518
        %v709 = vunpack.c.l.b16 %v519
        %v710 = vunpack.c.l.b16 %v520
        %v711 = vunpack.c.l.b16 %v521
        %v712 = vunpack.c.l.b16 %v522
        %v713 = vunpack.c.l.b16 %v523
        %v714 = vunpack.c.l.b16 %v524
        %v715 = vunpack.c.l.b16 %v525
        %v716 = vpack.c.b16 %v706, %v706
        %v717 = vpack.c.b16 %v707, %v707
        %v718 = vpack.c.b16 %v708, %v708
        %v719 = vpack.c.b16 %v709, %v709
        %v720 = vpack.c.b16 %v710, %v710
        %v721 = vpack.c.b16 %v711, %v711
        %v722 = vpack.c.b16 %v712, %v712
        %v723 = vpack.c.b16 %v713, %v713
        %v724 = vpack.c.b16 %v714, %v714
        %v725 = vpack.c.b16 %v715, %v715
        %vm726 = vcmask 1042432
        %v727 = vrot.slane %v606, 5
        %v728 = vrot.slane %v716, 5
        %v729 = vsel %vm726, %v727, %v728
        %v730 = vrot.slane %v607, 5
        %v731 = vrot.slane %v717, 5
        %v732 = vsel %vm726, %v730, %v731
        %v733 = vrot.slane %v608, 5
        %v734 = vrot.slane %v718, 5
        %v735 = vsel %vm726, %v733, %v734
        %v736 = vrot.slane %v609, 5
        %v737 = vrot.slane %v719, 5
        %v738 = vsel %vm726, %v736, %v737
        %v739 = vrot.slane %v610, 5
        %v740 = vrot.slane %v720, 5
        %v741 = vsel %vm726, %v739, %v740
        %v742 = vrot.slane %v611, 5
        %v743 = vrot.slane %v721, 5
        %v744 = vsel %vm726, %v742, %v743
        %v745 = vrot.slane %v612, 5
        %v746 = vrot.slane %v722, 5
        %v747 = vsel %vm726, %v745, %v746
        %v748 = vrot.slane %v613, 5
        %v749 = vrot.slane %v723, 5
        %v750 = vsel %vm726, %v748, %v749
        %v751 = vrot.slane %v614, 5
        %v752 = vrot.slane %v724, 5
        %v753 = vsel %vm726, %v751, %v752
        %v754 = vrot.slane %v615, 5
        %v755 = vrot.slane %v725, 5
        %v756 = vsel %vm726, %v754, %v755
        %vm757 = vsmask.f32 4352
        %v759 = vshrl.u32 %v586, 16
        %v761 = vrot.slane %v759, 3
        %v762 = vshll.u32 %v586, 16
        %v764 = vrot.slane %v762, 4
        %v765 = vor.u32 %v761, %v764
        %v767 = vshrl.u32 %v587, 16
        %v769 = vrot.slane %v767, 3
        %v770 = vshll.u32 %v587, 16
        %v772 = vrot.slane %v770, 4
        %v773 = vor.u32 %v769, %v772
        %v774 = vsel %vm757, %v765, %v773
        %v776 = vshrl.u32 %v623, 16
        %v778 = vrot.slane %v776, 3
        %v779 = vshll.u32 %v623, 16
        %v781 = vrot.slane %v779, 4
        %v782 = vor.u32 %v778, %v781
        %v783 = vsel %vm757, %v782, %v782
        %v785 = vshrl.u32 %v727, 16
        %v787 = vrot.slane %v785, 3
        %v788 = vshll.u32 %v727, 16
        %v790 = vrot.slane %v788, 4
        %v791 = vor.u32 %v787, %v790
        %v793 = vshrl.u32 %v729, 16
        %v795 = vrot.slane %v793, 3
        %v796 = vshll.u32 %v729, 16
        %v798 = vrot.slane %v796, 4
        %v799 = vor.u32 %v795, %v798
        %v800 = vsel %vm757, %v791, %v799
        %v802 = vshrl.u32 %v588, 16
        %v804 = vrot.slane %v802, 3
        %v805 = vshll.u32 %v588, 16
        %v807 = vrot.slane %v805, 4
        %v808 = vor.u32 %v804, %v807
        %v810 = vshrl.u32 %v589, 16
        %v812 = vrot.slane %v810, 3
        %v813 = vshll.u32 %v589, 16
        %v815 = vrot.slane %v813, 4
        %v816 = vor.u32 %v812, %v815
        %v817 = vsel %vm757, %v808, %v816
        %v819 = vshrl.u32 %v631, 16
        %v821 = vrot.slane %v819, 3
        %v822 = vshll.u32 %v631, 16
        %v824 = vrot.slane %v822, 4
        %v825 = vor.u32 %v821, %v824
        %v826 = vsel %vm757, %v825, %v825
        %v828 = vshrl.u32 %v730, 16
        %v830 = vrot.slane %v828, 3
        %v831 = vshll.u32 %v730, 16
        %v833 = vrot.slane %v831, 4
        %v834 = vor.u32 %v830, %v833
        %v836 = vshrl.u32 %v732, 16
        %v838 = vrot.slane %v836, 3
        %v839 = vshll.u32 %v732, 16
        %v841 = vrot.slane %v839, 4
        %v842 = vor.u32 %v838, %v841
        %v843 = vsel %vm757, %v834, %v842
        %v845 = vshrl.u32 %v590, 16
        %v847 = vrot.slane %v845, 3
        %v848 = vshll.u32 %v590, 16
        %v850 = vrot.slane %v848, 4
        %v851 = vor.u32 %v847, %v850
        %v853 = vshrl.u32 %v591, 16
        %v855 = vrot.slane %v853, 3
        %v856 = vshll.u32 %v591, 16
        %v858 = vrot.slane %v856, 4
        %v859 = vor.u32 %v855, %v858
        %v860 = vsel %vm757, %v851, %v859
        %v862 = vshrl.u32 %v639, 16
        %v864 = vrot.slane %v862, 3
        %v865 = vshll.u32 %v639, 16
        %v867 = vrot.slane %v865, 4
        %v868 = vor.u32 %v864, %v867
        %v869 = vsel %vm757, %v868, %v868
        %v871 = vshrl.u32 %v733, 16
        %v873 = vrot.slane %v871, 3
        %v874 = vshll.u32 %v733, 16
        %v876 = vrot.slane %v874, 4
        %v877 = vor.u32 %v873, %v876
        %v879 = vshrl.u32 %v735, 16
        %v881 = vrot.slane %v879, 3
        %v882 = vshll.u32 %v735, 16
        %v884 = vrot.slane %v882, 4
        %v885 = vor.u32 %v881, %v884
        %v886 = vsel %vm757, %v877, %v885
        %v888 = vshrl.u32 %v592, 16
        %v890 = vrot.slane %v888, 3
        %v891 = vshll.u32 %v592, 16
        %v893 = vrot.slane %v891, 4
        %v894 = vor.u32 %v890, %v893
        %v896 = vshrl.u32 %v593, 16
        %v898 = vrot.slane %v896, 3
        %v899 = vshll.u32 %v593, 16
        %v901 = vrot.slane %v899, 4
        %v902 = vor.u32 %v898, %v901
        %v903 = vsel %vm757, %v894, %v902
        %v905 = vshrl.u32 %v647, 16
        %v907 = vrot.slane %v905, 3
        %v908 = vshll.u32 %v647, 16
        %v910 = vrot.slane %v908, 4
        %v911 = vor.u32 %v907, %v910
        %v912 = vsel %vm757, %v911, %v911
        %v914 = vshrl.u32 %v736, 16
        %v916 = vrot.slane %v914, 3
        %v917 = vshll.u32 %v736, 16
        %v919 = vrot.slane %v917, 4
        %v920 = vor.u32 %v916, %v919
        %v922 = vshrl.u32 %v738, 16
        %v924 = vrot.slane %v922, 3
        %v925 = vshll.u32 %v738, 16
        %v927 = vrot.slane %v925, 4
        %v928 = vor.u32 %v924, %v927
        %v929 = vsel %vm757, %v920, %v928
        %v931 = vshrl.u32 %v594, 16
        %v933 = vrot.slane %v931, 3
        %v934 = vshll.u32 %v594, 16
        %v936 = vrot.slane %v934, 4
        %v937 = vor.u32 %v933, %v936
        %v939 = vshrl.u32 %v595, 16
        %v941 = vrot.slane %v939, 3
        %v942 = vshll.u32 %v595, 16
        %v944 = vrot.slane %v942, 4
        %v945 = vor.u32 %v941, %v944
        %v946 = vsel %vm757, %v937, %v945
        %v948 = vshrl.u32 %v655, 16
        %v950 = vrot.slane %v948, 3
        %v951 = vshll.u32 %v655, 16
        %v953 = vrot.slane %v951, 4
        %v954 = vor.u32 %v950, %v953
        %v955 = vsel %vm757, %v954, %v954
        %v957 = vshrl.u32 %v739, 16
        %v959 = vrot.slane %v957, 3
        %v960 = vshll.u32 %v739, 16
        %v962 = vrot.slane %v960, 4
        %v963 = vor.u32 %v959, %v962
        %v965 = vshrl.u32 %v741, 16
        %v967 = vrot.slane %v965, 3
        %v968 = vshll.u32 %v741, 16
        %v970 = vrot.slane %v968, 4
        %v971 = vor.u32 %v967, %v970
        %v972 = vsel %vm757, %v963, %v971
        %v974 = vshrl.u32 %v596, 16
        %v976 = vrot.slane %v974, 3
        %v977 = vshll.u32 %v596, 16
        %v979 = vrot.slane %v977, 4
        %v980 = vor.u32 %v976, %v979
        %v982 = vshrl.u32 %v597, 16
        %v984 = vrot.slane %v982, 3
        %v985 = vshll.u32 %v597, 16
        %v987 = vrot.slane %v985, 4
        %v988 = vor.u32 %v984, %v987
        %v989 = vsel %vm757, %v980, %v988
        %v991 = vshrl.u32 %v663, 16
        %v993 = vrot.slane %v991, 3
        %v994 = vshll.u32 %v663, 16
        %v996 = vrot.slane %v994, 4
        %v997 = vor.u32 %v993, %v996
        %v998 = vsel %vm757, %v997, %v997
        %v1000 = vshrl.u32 %v742, 16
        %v1002 = vrot.slane %v1000, 3
        %v1003 = vshll.u32 %v742, 16
        %v1005 = vrot.slane %v1003, 4
        %v1006 = vor.u32 %v1002, %v1005
        %v1008 = vshrl.u32 %v744, 16
        %v1010 = vrot.slane %v1008, 3
        %v1011 = vshll.u32 %v744, 16
        %v1013 = vrot.slane %v1011, 4
        %v1014 = vor.u32 %v1010, %v1013
        %v1015 = vsel %vm757, %v1006, %v1014
        %v1017 = vshrl.u32 %v598, 16
        %v1019 = vrot.slane %v1017, 3
        %v1020 = vshll.u32 %v598, 16
        %v1022 = vrot.slane %v1020, 4
        %v1023 = vor.u32 %v1019, %v1022
        %v1025 = vshrl.u32 %v599, 16
        %v1027 = vrot.slane %v1025, 3
        %v1028 = vshll.u32 %v599, 16
        %v1030 = vrot.slane %v1028, 4
        %v1031 = vor.u32 %v1027, %v1030
        %v1032 = vsel %vm757, %v1023, %v1031
        %v1034 = vshrl.u32 %v671, 16
        %v1036 = vrot.slane %v1034, 3
        %v1037 = vshll.u32 %v671, 16
        %v1039 = vrot.slane %v1037, 4
        %v1040 = vor.u32 %v1036, %v1039
        %v1041 = vsel %vm757, %v1040, %v1040
        %v1043 = vshrl.u32 %v745, 16
        %v1045 = vrot.slane %v1043, 3
        %v1046 = vshll.u32 %v745, 16
        %v1048 = vrot.slane %v1046, 4
        %v1049 = vor.u32 %v1045, %v1048
        %v1051 = vshrl.u32 %v747, 16
        %v1053 = vrot.slane %v1051, 3
        %v1054 = vshll.u32 %v747, 16
        %v1056 = vrot.slane %v1054, 4
        %v1057 = vor.u32 %v1053, %v1056
        %v1058 = vsel %vm757, %v1049, %v1057
        %v1060 = vshrl.u32 %v600, 16
        %v1062 = vrot.slane %v1060, 3
        %v1063 = vshll.u32 %v600, 16
        %v1065 = vrot.slane %v1063, 4
        %v1066 = vor.u32 %v1062, %v1065
        %v1068 = vshrl.u32 %v601, 16
        %v1070 = vrot.slane %v1068, 3
        %v1071 = vshll.u32 %v601, 16
        %v1073 = vrot.slane %v1071, 4
        %v1074 = vor.u32 %v1070, %v1073
        %v1075 = vsel %vm757, %v1066, %v1074
        %v1077 = vshrl.u32 %v679, 16
        %v1079 = vrot.slane %v1077, 3
        %v1080 = vshll.u32 %v679, 16
        %v1082 = vrot.slane %v1080, 4
        %v1083 = vor.u32 %v1079, %v1082
        %v1084 = vsel %vm757, %v1083, %v1083
        %v1086 = vshrl.u32 %v748, 16
        %v1088 = vrot.slane %v1086, 3
        %v1089 = vshll.u32 %v748, 16
        %v1091 = vrot.slane %v1089, 4
        %v1092 = vor.u32 %v1088, %v1091
        %v1094 = vshrl.u32 %v750, 16
        %v1096 = vrot.slane %v1094, 3
        %v1097 = vshll.u32 %v750, 16
        %v1099 = vrot.slane %v1097, 4
        %v1100 = vor.u32 %v1096, %v1099
        %v1101 = vsel %vm757, %v1092, %v1100
        %v1103 = vshrl.u32 %v602, 16
        %v1105 = vrot.slane %v1103, 3
        %v1106 = vshll.u32 %v602, 16
        %v1108 = vrot.slane %v1106, 4
        %v1109 = vor.u32 %v1105, %v1108
        %v1111 = vshrl.u32 %v603, 16
        %v1113 = vrot.slane %v1111, 3
        %v1114 = vshll.u32 %v603, 16
        %v1116 = vrot.slane %v1114, 4
        %v1117 = vor.u32 %v1113, %v1116
        %v1118 = vsel %vm757, %v1109, %v1117
        %v1120 = vshrl.u32 %v687, 16
        %v1122 = vrot.slane %v1120, 3
        %v1123 = vshll.u32 %v687, 16
        %v1125 = vrot.slane %v1123, 4
        %v1126 = vor.u32 %v1122, %v1125
        %v1127 = vsel %vm757, %v1126, %v1126
        %v1129 = vshrl.u32 %v751, 16
        %v1131 = vrot.slane %v1129, 3
        %v1132 = vshll.u32 %v751, 16
        %v1134 = vrot.slane %v1132, 4
        %v1135 = vor.u32 %v1131, %v1134
        %v1137 = vshrl.u32 %v753, 16
        %v1139 = vrot.slane %v1137, 3
        %v1140 = vshll.u32 %v753, 16
        %v1142 = vrot.slane %v1140, 4
        %v1143 = vor.u32 %v1139, %v1142
        %v1144 = vsel %vm757, %v1135, %v1143
        %v1146 = vshrl.u32 %v604, 16
        %v1148 = vrot.slane %v1146, 3
        %v1149 = vshll.u32 %v604, 16
        %v1151 = vrot.slane %v1149, 4
        %v1152 = vor.u32 %v1148, %v1151
        %v1154 = vshrl.u32 %v605, 16
        %v1156 = vrot.slane %v1154, 3
        %v1157 = vshll.u32 %v605, 16
        %v1159 = vrot.slane %v1157, 4
        %v1160 = vor.u32 %v1156, %v1159
        %v1161 = vsel %vm757, %v1152, %v1160
        %v1163 = vshrl.u32 %v695, 16
        %v1165 = vrot.slane %v1163, 3
        %v1166 = vshll.u32 %v695, 16
        %v1168 = vrot.slane %v1166, 4
        %v1169 = vor.u32 %v1165, %v1168
        %v1170 = vsel %vm757, %v1169, %v1169
        %v1172 = vshrl.u32 %v754, 16
        %v1174 = vrot.slane %v1172, 3
        %v1175 = vshll.u32 %v754, 16
        %v1177 = vrot.slane %v1175, 4
        %v1178 = vor.u32 %v1174, %v1177
        %v1180 = vshrl.u32 %v756, 16
        %v1182 = vrot.slane %v1180, 3
        %v1183 = vshll.u32 %v756, 16
        %v1185 = vrot.slane %v1183, 4
        %v1186 = vor.u32 %v1182, %v1185
        %v1187 = vsel %vm757, %v1178, %v1186
        %v1218 = vld [vmem:[#allocation9] sm:$0xff]
        %v1219 = vld [vmem:[#allocation9 + $0x8] sm:$0xff]
        %v1220 = vld [vmem:[#allocation9 + $0x10] sm:$0xff]
        %v1221 = vld [vmem:[#allocation9 + $0x18] sm:$0xff]
        %v1222 = vld [vmem:[#allocation9 + $0x20] sm:$0xff]
        %v1223 = vld [vmem:[#allocation9 + $0x28] sm:$0xff]
        %v1224 = vld [vmem:[#allocation9 + $0x30] sm:$0xff]
        %v1225 = vld [vmem:[#allocation9 + $0x38] sm:$0xff]
        %v1226 = vld [vmem:[#allocation9 + $0x40] sm:$0xff]
        %v1227 = vld [vmem:[#allocation9 + $0x48] sm:$0xff]
        %v1228 = vld [vmem:[#allocation9 + $0x50] sm:$0xff]
        %v1229 = vld [vmem:[#allocation9 + $0x58] sm:$0xff]
        %v1230 = vld [vmem:[#allocation9 + $0x60] sm:$0xff]
        %v1231 = vld [vmem:[#allocation9 + $0x68] sm:$0xff]
        %v1232 = vld [vmem:[#allocation9 + $0x70] sm:$0xff]
        %v1233 = vld [vmem:[#allocation9 + $0x78] sm:$0xff]
        %v1234 = vld [vmem:[#allocation9 + $0x80] sm:$0xff]
        %v1235 = vld [vmem:[#allocation9 + $0x88] sm:$0xff]
        %v1236 = vld [vmem:[#allocation9 + $0x90] sm:$0xff]
        %v1237 = vld [vmem:[#allocation9 + $0x98] sm:$0xff]
        %v1238 = vld [vmem:[#allocation9 + $0xa0] sm:$0xff]
        %v1239 = vld [vmem:[#allocation9 + $0xa8] sm:$0xff]
        %v1240 = vld [vmem:[#allocation9 + $0xb0] sm:$0xff]
        %v1241 = vld [vmem:[#allocation9 + $0xb8] sm:$0xff]
        %v1242 = vld [vmem:[#allocation9 + $0xc0] sm:$0xff]
        %v1243 = vld [vmem:[#allocation9 + $0xc8] sm:$0xff]
        %v1244 = vld [vmem:[#allocation9 + $0xd0] sm:$0xff]
        %v1245 = vld [vmem:[#allocation9 + $0xd8] sm:$0xff]
        %v1246 = vld [vmem:[#allocation9 + $0xe0] sm:$0xff]
        %v1247 = vld [vmem:[#allocation9 + $0xe8] sm:$0xff]
        %v1248 = vld [vmem:[#allocation9 + $0xf0] sm:$0xff]
        %v1249 = vld [vmem:[#allocation9 + $0xf8] sm:$0xff]
        %v1250 = vld [vmem:[#allocation9 + $0x100] sm:$0xff]
        %v1251 = vld [vmem:[#allocation9 + $0x108] sm:$0xff]
        %v1252 = vld [vmem:[#allocation9 + $0x110] sm:$0xff]
        %v1253 = vld [vmem:[#allocation9 + $0x118] sm:$0xff]
        %v1254 = vld [vmem:[#allocation9 + $0x120] sm:$0xff]
        %v1255 = vld [vmem:[#allocation9 + $0x128] sm:$0xff]
        %v1256 = vld [vmem:[#allocation9 + $0x130] sm:$0xff]
        %v1257 = vld [vmem:[#allocation9 + $0x138] sm:$0xff]
        %v1258 = vld [vmem:[#allocation9 + $0x140] sm:$0xff]
        %v1259 = vld [vmem:[#allocation9 + $0x148] sm:$0xff]
        %v1260 = vld [vmem:[#allocation9 + $0x150] sm:$0xff]
        %v1261 = vld [vmem:[#allocation9 + $0x158] sm:$0xff]
        %v1262 = vld [vmem:[#allocation9 + $0x160] sm:$0xff]
        %v1263 = vld [vmem:[#allocation9 + $0x168] sm:$0xff]
        %v1264 = vld [vmem:[#allocation9 + $0x170] sm:$0xff]
        %v1265 = vld [vmem:[#allocation9 + $0x178] sm:$0xff]
        %v1314 = vunpack.c.l.b16 %v1218
        %v1315 = vunpack.c.h.b16 %v1218
        %v1316 = vunpack.c.l.b16 %v1219
        %v1317 = vunpack.c.h.b16 %v1219
        %v1318 = vunpack.c.l.b16 %v1220
        %v1319 = vunpack.c.h.b16 %v1220
        %v1320 = vunpack.c.l.b16 %v1221
        %v1321 = vunpack.c.h.b16 %v1221
        %v1322 = vunpack.c.l.b16 %v1222
        %v1323 = vunpack.c.h.b16 %v1222
        %v1324 = vunpack.c.l.b16 %v1223
        %v1325 = vunpack.c.h.b16 %v1223
        %v1326 = vunpack.c.l.b16 %v1224
        %v1327 = vunpack.c.h.b16 %v1224
        %v1328 = vunpack.c.l.b16 %v1225
        %v1329 = vunpack.c.h.b16 %v1225
        %v1330 = vunpack.c.l.b16 %v1226
        %v1331 = vunpack.c.h.b16 %v1226
        %v1332 = vunpack.c.l.b16 %v1227
        %v1333 = vunpack.c.h.b16 %v1227
        %v1334 = vunpack.c.l.b16 %v1228
        %v1335 = vunpack.c.h.b16 %v1228
        %v1336 = vunpack.c.l.b16 %v1229
        %v1337 = vunpack.c.h.b16 %v1229
        %v1338 = vunpack.c.l.b16 %v1230
        %v1339 = vunpack.c.h.b16 %v1230
        %v1340 = vunpack.c.l.b16 %v1231
        %v1341 = vunpack.c.h.b16 %v1231
        %v1342 = vunpack.c.l.b16 %v1232
        %v1343 = vunpack.c.h.b16 %v1232
        %v1344 = vunpack.c.l.b16 %v1233
        %v1345 = vunpack.c.h.b16 %v1233
        %v1346 = vunpack.c.l.b16 %v1234
        %v1347 = vunpack.c.h.b16 %v1234
        %v1348 = vunpack.c.l.b16 %v1235
        %v1349 = vunpack.c.h.b16 %v1235
        %v1350 = vunpack.c.l.b16 %v1236
        %v1351 = vunpack.c.h.b16 %v1236
        %v1352 = vunpack.c.l.b16 %v1237
        %v1353 = vunpack.c.h.b16 %v1237
        %v1354 = vunpack.c.l.b16 %v1238
        %v1355 = vunpack.c.h.b16 %v1238
        %v1356 = vunpack.c.l.b16 %v1239
        %v1357 = vunpack.c.h.b16 %v1239
        %v1358 = vunpack.c.l.b16 %v1240
        %v1359 = vunpack.c.h.b16 %v1240
        %v1360 = vunpack.c.l.b16 %v1241
        %v1361 = vunpack.c.h.b16 %v1241
        %v1362 = vunpack.c.l.b16 %v1242
        %v1363 = vunpack.c.h.b16 %v1242
        %v1364 = vunpack.c.l.b16 %v1243
        %v1365 = vunpack.c.h.b16 %v1243
        %v1366 = vunpack.c.l.b16 %v1244
        %v1367 = vunpack.c.h.b16 %v1244
        %v1368 = vunpack.c.l.b16 %v1245
        %v1369 = vunpack.c.h.b16 %v1245
        %v1370 = vunpack.c.l.b16 %v1246
        %v1371 = vunpack.c.h.b16 %v1246
        %v1372 = vunpack.c.l.b16 %v1247
        %v1373 = vunpack.c.h.b16 %v1247
        %v1374 = vunpack.c.l.b16 %v1248
        %v1375 = vunpack.c.h.b16 %v1248
        %v1376 = vunpack.c.l.b16 %v1249
        %v1377 = vunpack.c.h.b16 %v1249
        %v1378 = vunpack.c.l.b16 %v1250
        %v1379 = vunpack.c.h.b16 %v1250
        %v1380 = vunpack.c.l.b16 %v1251
        %v1381 = vunpack.c.h.b16 %v1251
        %v1382 = vunpack.c.l.b16 %v1252
        %v1383 = vunpack.c.h.b16 %v1252
        %v1384 = vunpack.c.l.b16 %v1253
        %v1385 = vunpack.c.h.b16 %v1253
        %v1386 = vunpack.c.l.b16 %v1254
        %v1387 = vunpack.c.h.b16 %v1254
        %v1388 = vunpack.c.l.b16 %v1255
        %v1389 = vunpack.c.h.b16 %v1255
        %v1390 = vunpack.c.l.b16 %v1256
        %v1391 = vunpack.c.h.b16 %v1256
        %v1392 = vunpack.c.l.b16 %v1257
        %v1393 = vunpack.c.h.b16 %v1257
        %v1394 = vunpack.c.l.b16 %v1258
        %v1395 = vunpack.c.h.b16 %v1258
        %v1396 = vunpack.c.l.b16 %v1259
        %v1397 = vunpack.c.h.b16 %v1259
        %v1398 = vunpack.c.l.b16 %v1260
        %v1399 = vunpack.c.h.b16 %v1260
        %v1400 = vunpack.c.l.b16 %v1261
        %v1401 = vunpack.c.h.b16 %v1261
        %v1402 = vunpack.c.l.b16 %v1262
        %v1403 = vunpack.c.h.b16 %v1262
        %v1404 = vunpack.c.l.b16 %v1263
        %v1405 = vunpack.c.h.b16 %v1263
        %v1406 = vunpack.c.l.b16 %v1264
        %v1407 = vunpack.c.h.b16 %v1264
        %v1408 = vunpack.c.l.b16 %v1265
        %v1409 = vunpack.c.h.b16 %v1265
        %v1410 = vpack.c.b16 %v1316, %v1314
        %v1411 = vpack.c.b16 %v1317, %v1315
        %v1412 = vpack.c.b16 %v1320, %v1318
        %v1413 = vpack.c.b16 %v1321, %v1319
        %v1414 = vpack.c.b16 %v1324, %v1322
        %v1415 = vpack.c.b16 %v1325, %v1323
        %v1416 = vpack.c.b16 %v1328, %v1326
        %v1417 = vpack.c.b16 %v1329, %v1327
        %v1418 = vpack.c.b16 %v1332, %v1330
        %v1419 = vpack.c.b16 %v1333, %v1331
        %v1420 = vpack.c.b16 %v1336, %v1334
        %v1421 = vpack.c.b16 %v1337, %v1335
        %v1422 = vpack.c.b16 %v1340, %v1338
        %v1423 = vpack.c.b16 %v1341, %v1339
        %v1424 = vpack.c.b16 %v1344, %v1342
        %v1425 = vpack.c.b16 %v1345, %v1343
        %v1426 = vpack.c.b16 %v1348, %v1346
        %v1427 = vpack.c.b16 %v1349, %v1347
        %v1428 = vpack.c.b16 %v1352, %v1350
        %v1429 = vpack.c.b16 %v1353, %v1351
        %v1430 = vpack.c.b16 %v1356, %v1354
        %v1431 = vpack.c.b16 %v1357, %v1355
        %v1432 = vpack.c.b16 %v1360, %v1358
        %v1433 = vpack.c.b16 %v1361, %v1359
        %v1434 = vpack.c.b16 %v1364, %v1362
        %v1435 = vpack.c.b16 %v1365, %v1363
        %v1436 = vpack.c.b16 %v1368, %v1366
        %v1437 = vpack.c.b16 %v1369, %v1367
        %v1438 = vpack.c.b16 %v1372, %v1370
        %v1439 = vpack.c.b16 %v1373, %v1371
        %v1440 = vpack.c.b16 %v1376, %v1374
        %v1441 = vpack.c.b16 %v1377, %v1375
        %v1442 = vpack.c.b16 %v1380, %v1378
        %v1443 = vpack.c.b16 %v1381, %v1379
        %v1444 = vpack.c.b16 %v1384, %v1382
        %v1445 = vpack.c.b16 %v1385, %v1383
        %v1446 = vpack.c.b16 %v1388, %v1386
        %v1447 = vpack.c.b16 %v1389, %v1387
        %v1448 = vpack.c.b16 %v1392, %v1390
        %v1449 = vpack.c.b16 %v1393, %v1391
        %v1450 = vpack.c.b16 %v1396, %v1394
        %v1451 = vpack.c.b16 %v1397, %v1395
        %v1452 = vpack.c.b16 %v1400, %v1398
        %v1453 = vpack.c.b16 %v1401, %v1399
        %v1454 = vpack.c.b16 %v1404, %v1402
        %v1455 = vpack.c.b16 %v1405, %v1403
        %v1456 = vpack.c.b16 %v1408, %v1406
        %v1457 = vpack.c.b16 %v1409, %v1407
        %1506 = vmatprep.subr.bf16.mxu0 %v1425
        %1507 = vmatpush1.bf16.msra.mxu0 %v1424
        %1508 = vmatprep.subr.bf16.mxu0 %v1423
        %1509 = vmatpush1.bf16.msra.mxu0 %v1422
        %1510 = vmatprep.subr.bf16.mxu0 %v1421
        %1511 = vmatpush1.bf16.msra.mxu0 %v1420
        %1512 = vmatprep.subr.bf16.mxu0 %v1419
        %1513 = vmatpush1.bf16.msra.mxu0 %v1418
        %1514 = vmatprep.subr.bf16.mxu0 %v1417
        %1515 = vmatpush1.bf16.msra.mxu0 %v1416
        %1516 = vmatprep.subr.bf16.mxu0 %v1415
        %1517 = vmatpush1.bf16.msra.mxu0 %v1414
        %1518 = vmatprep.subr.bf16.mxu0 %v1413
        %1519 = vmatpush1.bf16.msra.mxu0 %v1412
        %1520 = vmatprep.subr.bf16.mxu0 %v1411
        %1521 = vmatpush1.bf16.msra.mxu0 %v1410
        %1522 = vmatprep.subr.bf16.mxu0 %v1441
        %1523 = vmatpush2.bf16.msra.mxu0 %v1440
        %1524 = vmatprep.subr.bf16.mxu0 %v1439
        %1525 = vmatpush2.bf16.msra.mxu0 %v1438
        %1526 = vmatprep.subr.bf16.mxu0 %v1437
        %1527 = vmatpush2.bf16.msra.mxu0 %v1436
        %1528 = vmatprep.subr.bf16.mxu0 %v1435
        %1529 = vmatpush2.bf16.msra.mxu0 %v1434
        %1530 = vmatprep.subr.bf16.mxu0 %v1433
        %1531 = vmatpush2.bf16.msra.mxu0 %v1432
        %1532 = vmatprep.subr.bf16.mxu0 %v1431
        %1533 = vmatpush2.bf16.msra.mxu0 %v1430
        %1534 = vmatprep.subr.bf16.mxu0 %v1429
        %1535 = vmatpush2.bf16.msra.mxu0 %v1428
        %1536 = vmatprep.subr.bf16.mxu0 %v1427
        %1537 = vmatpush2.bf16.msra.mxu0 %v1426
        %1538 = vmatprep.mubr.bf16.mxu0 %v783
        %1539 = vmatmul.mubr.bf16.gmra.mxu0 %v774
        %v1540 = vpop.f32.mrf.mxu0
        %v1541 = vadd.f32 0.0, %v1540
        %v1542 = vpop.f32.mrf.mxu0
        %v1543 = vpop.f32.mrf.mxu0
        %v1544 = vadd.f32 0.0, %v1543
        %v1545 = vpop.f32.mrf.mxu0
        %1546 = vmatprep.mubr.bf16.mxu0 %v826
        %1547 = vmatmul.mubr.bf16.gmra.mxu0 %v817
        %v1548 = vpop.f32.mrf.mxu0
        %v1549 = vadd.f32 0.0, %v1548
        %v1550 = vpop.f32.mrf.mxu0
        %v1551 = vadd.f32 0.0, %v1550
        %v1552 = vpop.f32.mrf.mxu0
        %v1553 = vadd.f32 0.0, %v1552
        %v1554 = vpop.f32.mrf.mxu0
        %v1555 = vadd.f32 0.0, %v1554
        %1556 = vmatprep.mubr.bf16.mxu0 %v869
        %1557 = vmatmul.mubr.bf16.gmra.mxu0 %v860
        %v1558 = vpop.f32.mrf.mxu0
        %v1559 = vadd.f32 0.0, %v1558
        %v1560 = vpop.f32.mrf.mxu0
        %v1561 = vadd.f32 0.0, %v1560
        %v1562 = vpop.f32.mrf.mxu0
        %v1563 = vadd.f32 0.0, %v1562
        %v1564 = vpop.f32.mrf.mxu0
        %v1565 = vadd.f32 0.0, %v1564
        %1566 = vmatprep.mubr.bf16.mxu0 %v912
        %1567 = vmatmul.mubr.bf16.gmra.mxu0 %v903
        %v1568 = vpop.f32.mrf.mxu0
        %v1569 = vadd.f32 0.0, %v1568
        %v1570 = vpop.f32.mrf.mxu0
        %v1571 = vadd.f32 0.0, %v1570
        %v1572 = vpop.f32.mrf.mxu0
        %v1573 = vadd.f32 0.0, %v1572
        %v1574 = vpop.f32.mrf.mxu0
        %v1575 = vadd.f32 0.0, %v1574
        %1576 = vmatprep.mubr.bf16.mxu0 %v955
        %1577 = vmatmul.mubr.bf16.gmra.mxu0 %v946
        %v1578 = vpop.f32.mrf.mxu0
        %v1579 = vadd.f32 0.0, %v1578
        %v1580 = vpop.f32.mrf.mxu0
        %v1581 = vadd.f32 0.0, %v1580
        %v1582 = vpop.f32.mrf.mxu0
        %v1583 = vadd.f32 0.0, %v1582
        %v1584 = vpop.f32.mrf.mxu0
        %v1585 = vadd.f32 0.0, %v1584
        %1586 = vmatprep.mubr.bf16.mxu0 %v998
        %1587 = vmatmul.mubr.bf16.gmra.mxu0 %v989
        %v1588 = vpop.f32.mrf.mxu0
        %v1589 = vadd.f32 0.0, %v1588
        %v1590 = vpop.f32.mrf.mxu0
        %v1591 = vadd.f32 0.0, %v1590
        %v1592 = vpop.f32.mrf.mxu0
        %v1593 = vadd.f32 0.0, %v1592
        %v1594 = vpop.f32.mrf.mxu0
        %v1595 = vadd.f32 0.0, %v1594
        %1596 = vmatprep.mubr.bf16.mxu0 %v1041
        %1597 = vmatmul.mubr.bf16.gmra.mxu0 %v1032
        %v1598 = vpop.f32.mrf.mxu0
        %v1599 = vadd.f32 0.0, %v1598
        %v1600 = vpop.f32.mrf.mxu0
        %v1601 = vadd.f32 0.0, %v1600
        %v1602 = vpop.f32.mrf.mxu0
        %v1603 = vadd.f32 0.0, %v1602
        %v1604 = vpop.f32.mrf.mxu0
        %v1605 = vadd.f32 0.0, %v1604
        %1606 = vmatprep.mubr.bf16.mxu0 %v1084
        %1607 = vmatmul.mubr.bf16.gmra.mxu0 %v1075
        %v1608 = vpop.f32.mrf.mxu0
        %v1609 = vadd.f32 0.0, %v1608
        %v1610 = vpop.f32.mrf.mxu0
        %v1611 = vadd.f32 0.0, %v1610
        %v1612 = vpop.f32.mrf.mxu0
        %v1613 = vadd.f32 0.0, %v1612
        %v1614 = vpop.f32.mrf.mxu0
        %v1615 = vadd.f32 0.0, %v1614
        %1616 = vmatprep.mubr.bf16.mxu0 %v1127
        %1617 = vmatmul.mubr.bf16.gmra.mxu0 %v1118
        %v1618 = vpop.f32.mrf.mxu0
        %v1619 = vadd.f32 0.0, %v1618
        %v1620 = vpop.f32.mrf.mxu0
        %v1621 = vadd.f32 0.0, %v1620
        %v1622 = vpop.f32.mrf.mxu0
        %v1623 = vadd.f32 0.0, %v1622
        %v1624 = vpop.f32.mrf.mxu0
        %v1625 = vadd.f32 0.0, %v1624
        %1626 = vmatprep.mubr.bf16.mxu0 %v1170
        %1627 = vmatmul.mubr.bf16.gmra.mxu0 %v1161
        %v1628 = vpop.f32.mrf.mxu0
        %v1629 = vadd.f32 0.0, %v1628
        %v1630 = vpop.f32.mrf.mxu0
        %v1631 = vpop.f32.mrf.mxu0
        %v1632 = vadd.f32 0.0, %v1631
        %v1633 = vpop.f32.mrf.mxu0
        %1634 = vdwg.mxu0
        %1635 = vmatprep.subr.bf16.mxu0 %v1457
        %1636 = vmatpush1.bf16.msra.mxu0 %v1456
        %1637 = vmatprep.subr.bf16.mxu0 %v1455
        %1638 = vmatpush1.bf16.msra.mxu0 %v1454
        %1639 = vmatprep.subr.bf16.mxu0 %v1453
        %1640 = vmatpush1.bf16.msra.mxu0 %v1452
        %1641 = vmatprep.subr.bf16.mxu0 %v1451
        %1642 = vmatpush1.bf16.msra.mxu0 %v1450
        %1643 = vmatprep.subr.bf16.mxu0 %v1449
        %1644 = vmatpush1.bf16.msra.mxu0 %v1448
        %1645 = vmatprep.subr.bf16.mxu0 %v1447
        %1646 = vmatpush1.bf16.msra.mxu0 %v1446
        %1647 = vmatprep.subr.bf16.mxu0 %v1445
        %1648 = vmatpush1.bf16.msra.mxu0 %v1444
        %1649 = vmatprep.subr.bf16.mxu0 %v1443
        %1650 = vmatpush1.bf16.msra.mxu0 %v1442
        %1651 = vmatprep.subr.bf16.mxu0 0
        %1652 = vmatpush2.bf16.msra.mxu0 0
        %1653 = vmatprep.subr.bf16.mxu0 0
        %1654 = vmatpush2.bf16.msra.mxu0 0
        %1655 = vmatprep.subr.bf16.mxu0 0
        %1656 = vmatpush2.bf16.msra.mxu0 0
        %1657 = vmatprep.subr.bf16.mxu0 0
        %1658 = vmatpush2.bf16.msra.mxu0 0
        %1659 = vmatprep.subr.bf16.mxu0 0
        %1660 = vmatpush2.bf16.msra.mxu0 0
        %1661 = vmatprep.subr.bf16.mxu0 0
        %1662 = vmatpush2.bf16.msra.mxu0 0
        %1663 = vmatprep.subr.bf16.mxu0 0
        %1664 = vmatpush2.bf16.msra.mxu0 0
        %1665 = vmatprep.subr.bf16.mxu0 0
        %1666 = vmatpush2.bf16.msra.mxu0 0
        %1667 = vmatprep.mubr.bf16.mxu0 0
        %1668 = vmatmul.mubr.bf16.gmra.mxu0 %v800
        %v1669 = vpop.f32.mrf.mxu0
        %v1670 = vadd.f32 %v1541, %v1669
        %v1671 = vpop.f32.mrf.mxu0
        %v1672 = vpop.f32.mrf.mxu0
        %v1673 = vadd.f32 %v1544, %v1672
        %v1674 = vpop.f32.mrf.mxu0
        %1675 = vmatprep.mubr.bf16.mxu0 0
        %1676 = vmatmul.mubr.bf16.gmra.mxu0 %v843
        %v1677 = vpop.f32.mrf.mxu0
        %v1678 = vadd.f32 %v1549, %v1677
        %v1679 = vpop.f32.mrf.mxu0
        %v1680 = vadd.f32 %v1551, %v1679
        %v1681 = vpop.f32.mrf.mxu0
        %v1682 = vadd.f32 %v1553, %v1681
        %v1683 = vpop.f32.mrf.mxu0
        %v1684 = vadd.f32 %v1555, %v1683
        %1685 = vmatprep.mubr.bf16.mxu0 0
        %1686 = vmatmul.mubr.bf16.gmra.mxu0 %v886
        %v1687 = vpop.f32.mrf.mxu0
        %v1688 = vadd.f32 %v1559, %v1687
        %v1689 = vpop.f32.mrf.mxu0
        %v1690 = vadd.f32 %v1561, %v1689
        %v1691 = vpop.f32.mrf.mxu0
        %v1692 = vadd.f32 %v1563, %v1691
        %v1693 = vpop.f32.mrf.mxu0
        %v1694 = vadd.f32 %v1565, %v1693
        %1695 = vmatprep.mubr.bf16.mxu0 0
        %1696 = vmatmul.mubr.bf16.gmra.mxu0 %v929
        %v1697 = vpop.f32.mrf.mxu0
        %v1698 = vadd.f32 %v1569, %v1697
        %v1699 = vpop.f32.mrf.mxu0
        %v1700 = vadd.f32 %v1571, %v1699
        %v1701 = vpop.f32.mrf.mxu0
        %v1702 = vadd.f32 %v1573, %v1701
        %v1703 = vpop.f32.mrf.mxu0
        %v1704 = vadd.f32 %v1575, %v1703
        %1705 = vmatprep.mubr.bf16.mxu0 0
        %1706 = vmatmul.mubr.bf16.gmra.mxu0 %v972
        %v1707 = vpop.f32.mrf.mxu0
        %v1708 = vadd.f32 %v1579, %v1707
        %v1709 = vpop.f32.mrf.mxu0
        %v1710 = vadd.f32 %v1581, %v1709
        %v1711 = vpop.f32.mrf.mxu0
        %v1712 = vadd.f32 %v1583, %v1711
        %v1713 = vpop.f32.mrf.mxu0
        %v1714 = vadd.f32 %v1585, %v1713
        %1715 = vmatprep.mubr.bf16.mxu0 0
        %1716 = vmatmul.mubr.bf16.gmra.mxu0 %v1015
        %v1717 = vpop.f32.mrf.mxu0
        %v1718 = vadd.f32 %v1589, %v1717
        %v1719 = vpop.f32.mrf.mxu0
        %v1720 = vadd.f32 %v1591, %v1719
        %v1721 = vpop.f32.mrf.mxu0
        %v1722 = vadd.f32 %v1593, %v1721
        %v1723 = vpop.f32.mrf.mxu0
        %v1724 = vadd.f32 %v1595, %v1723
        %1725 = vmatprep.mubr.bf16.mxu0 0
        %1726 = vmatmul.mubr.bf16.gmra.mxu0 %v1058
        %v1727 = vpop.f32.mrf.mxu0
        %v1728 = vadd.f32 %v1599, %v1727
        %v1729 = vpop.f32.mrf.mxu0
        %v1730 = vadd.f32 %v1601, %v1729
        %v1731 = vpop.f32.mrf.mxu0
        %v1732 = vadd.f32 %v1603, %v1731
        %v1733 = vpop.f32.mrf.mxu0
        %v1734 = vadd.f32 %v1605, %v1733
        %1735 = vmatprep.mubr.bf16.mxu0 0
        %1736 = vmatmul.mubr.bf16.gmra.mxu0 %v1101
        %v1737 = vpop.f32.mrf.mxu0
        %v1738 = vadd.f32 %v1609, %v1737
        %v1739 = vpop.f32.mrf.mxu0
        %v1740 = vadd.f32 %v1611, %v1739
        %v1741 = vpop.f32.mrf.mxu0
        %v1742 = vadd.f32 %v1613, %v1741
        %v1743 = vpop.f32.mrf.mxu0
        %v1744 = vadd.f32 %v1615, %v1743
        %1745 = vmatprep.mubr.bf16.mxu0 0
        %1746 = vmatmul.mubr.bf16.gmra.mxu0 %v1144
        %v1747 = vpop.f32.mrf.mxu0
        %v1748 = vadd.f32 %v1619, %v1747
        %v1749 = vpop.f32.mrf.mxu0
        %v1750 = vadd.f32 %v1621, %v1749
        %v1751 = vpop.f32.mrf.mxu0
        %v1752 = vadd.f32 %v1623, %v1751
        %v1753 = vpop.f32.mrf.mxu0
        %v1754 = vadd.f32 %v1625, %v1753
        %1755 = vmatprep.mubr.bf16.mxu0 0
        %1756 = vmatmul.mubr.bf16.gmra.mxu0 %v1187
        %v1757 = vpop.f32.mrf.mxu0
        %v1758 = vadd.f32 %v1629, %v1757
        %v1759 = vpop.f32.mrf.mxu0
        %v1760 = vpop.f32.mrf.mxu0
        %v1761 = vadd.f32 %v1632, %v1760
        %v1762 = vpop.f32.mrf.mxu0
        %1763 = vdwg.mxu0
        %v1765 = vlaneseq
        %v1766 = vshrl.u32 %v1765, 7
        %v1767 = vsub.s32 0, %v1766
        %v1768 = vrot.slane %v485, %v1767
        %v1769 = vlaneseq
        %v1770 = vshrl.u32 %v1769, 7
        %v1771 = vsub.s32 1, %v1770
        %v1772 = vrot.slane %v485, %v1771
        %v1775 = vadd.f32 %v1768, %v1670
        %v1776 = vadd.f32 %v1768, %v1673
        %v1777 = vadd.f32 %v1768, %v1678
        %v1778 = vadd.f32 %v1772, %v1680
        %v1779 = vadd.f32 %v1768, %v1682
        %v1780 = vadd.f32 %v1772, %v1684
        %v1781 = vadd.f32 %v1768, %v1688
        %v1782 = vadd.f32 %v1772, %v1690
        %v1783 = vadd.f32 %v1768, %v1692
        %v1784 = vadd.f32 %v1772, %v1694
        %v1785 = vadd.f32 %v1768, %v1698
        %v1786 = vadd.f32 %v1772, %v1700
        %v1787 = vadd.f32 %v1768, %v1702
        %v1788 = vadd.f32 %v1772, %v1704
        %v1789 = vadd.f32 %v1768, %v1708
        %v1790 = vadd.f32 %v1772, %v1710
        %v1791 = vadd.f32 %v1768, %v1712
        %v1792 = vadd.f32 %v1772, %v1714
        %v1793 = vadd.f32 %v1768, %v1718
        %v1794 = vadd.f32 %v1772, %v1720
        %v1795 = vadd.f32 %v1768, %v1722
        %v1796 = vadd.f32 %v1772, %v1724
        %v1797 = vadd.f32 %v1768, %v1728
        %v1798 = vadd.f32 %v1772, %v1730
        %v1799 = vadd.f32 %v1768, %v1732
        %v1800 = vadd.f32 %v1772, %v1734
        %v1801 = vadd.f32 %v1768, %v1738
        %v1802 = vadd.f32 %v1772, %v1740
        %v1803 = vadd.f32 %v1768, %v1742
        %v1804 = vadd.f32 %v1772, %v1744
        %v1805 = vadd.f32 %v1768, %v1748
        %v1806 = vadd.f32 %v1772, %v1750
        %v1807 = vadd.f32 %v1768, %v1752
        %v1808 = vadd.f32 %v1772, %v1754
        %v1809 = vadd.f32 %v1768, %v1758
        %v1810 = vadd.f32 %v1768, %v1761
        %s1811 = scalar_lea.vmem [#allocation2], 16
        %v1812 = vld [vmem:[%s1811] sm:$0x8]
        %v1813 = vld [vmem:[%s1811 + $0x4] sm:$0xf]
        %v1814 = vld [vmem:[%s1811 + $0x8] sm:$0xf]
        %v1815 = vld [vmem:[%s1811 + $0x10] sm:$0x8]
        %v1816 = vld [vmem:[%s1811 + $0x14] sm:$0xf]
        %v1817 = vld [vmem:[%s1811 + $0x18] sm:$0xf]
        %v1818 = vld [vmem:[%s1811 + $0x20] sm:$0x8]
        %v1819 = vld [vmem:[%s1811 + $0x24] sm:$0xf]
        %v1820 = vld [vmem:[%s1811 + $0x28] sm:$0xf]
        %v1821 = vld [vmem:[%s1811 + $0x30] sm:$0x8]
        %v1822 = vld [vmem:[%s1811 + $0x34] sm:$0xf]
        %v1823 = vld [vmem:[%s1811 + $0x38] sm:$0xf]
        %v1824 = vld [vmem:[%s1811 + $0x40] sm:$0x8]
        %v1825 = vld [vmem:[%s1811 + $0x44] sm:$0xf]
        %v1826 = vld [vmem:[%s1811 + $0x48] sm:$0xf]
        %v1827 = vld [vmem:[%s1811 + $0x50] sm:$0x8]
        %v1828 = vld [vmem:[%s1811 + $0x54] sm:$0xf]
        %v1829 = vld [vmem:[%s1811 + $0x58] sm:$0xf]
        %v1830 = vld [vmem:[%s1811 + $0x60] sm:$0x8]
        %v1831 = vld [vmem:[%s1811 + $0x64] sm:$0xf]
        %v1832 = vld [vmem:[%s1811 + $0x68] sm:$0xf]
        %v1833 = vld [vmem:[%s1811 + $0x70] sm:$0x8]
        %v1834 = vld [vmem:[%s1811 + $0x74] sm:$0xf]
        %v1835 = vld [vmem:[%s1811 + $0x78] sm:$0xf]
        %v1836 = vld [vmem:[%s1811 + $0x80] sm:$0x8]
        %v1837 = vld [vmem:[%s1811 + $0x84] sm:$0xf]
        %v1838 = vld [vmem:[%s1811 + $0x88] sm:$0xf]
        %v1839 = vld [vmem:[%s1811 + $0x90] sm:$0x8]
        %v1840 = vld [vmem:[%s1811 + $0x94] sm:$0xf]
        %v1841 = vld [vmem:[%s1811 + $0x98] sm:$0xf]
        %v1842 = vld [vmem:[%s1811 + $0xc] sm:$0x1]
        %v1843 = vld [vmem:[%s1811 + $0x1c] sm:$0x1]
        %v1844 = vld [vmem:[%s1811 + $0x2c] sm:$0x1]
        %v1845 = vld [vmem:[%s1811 + $0x3c] sm:$0x1]
        %v1846 = vld [vmem:[%s1811 + $0x4c] sm:$0x1]
        %v1847 = vld [vmem:[%s1811 + $0x5c] sm:$0x1]
        %v1848 = vld [vmem:[%s1811 + $0x6c] sm:$0x1]
        %v1849 = vld [vmem:[%s1811 + $0x7c] sm:$0x1]
        %v1850 = vld [vmem:[%s1811 + $0x8c] sm:$0x1]
        %v1851 = vld [vmem:[%s1811 + $0x9c] sm:$0x1]
        %v1882 = vunpack.c.l.b16 %v1812
        %v1883 = vunpack.c.l.b16 %v1813
        %v1884 = vunpack.c.l.b16 %v1814
        %v1885 = vunpack.c.l.b16 %v1815
        %v1886 = vunpack.c.l.b16 %v1816
        %v1887 = vunpack.c.l.b16 %v1817
        %v1888 = vunpack.c.l.b16 %v1818
        %v1889 = vunpack.c.l.b16 %v1819
        %v1890 = vunpack.c.l.b16 %v1820
        %v1891 = vunpack.c.l.b16 %v1821
        %v1892 = vunpack.c.l.b16 %v1822
        %v1893 = vunpack.c.l.b16 %v1823
        %v1894 = vunpack.c.l.b16 %v1824
        %v1895 = vunpack.c.l.b16 %v1825
        %v1896 = vunpack.c.l.b16 %v1826
        %v1897 = vunpack.c.l.b16 %v1827
        %v1898 = vunpack.c.l.b16 %v1828
        %v1899 = vunpack.c.l.b16 %v1829
        %v1900 = vunpack.c.l.b16 %v1830
        %v1901 = vunpack.c.l.b16 %v1831
        %v1902 = vunpack.c.l.b16 %v1832
        %v1903 = vunpack.c.l.b16 %v1833
        %v1904 = vunpack.c.l.b16 %v1834
        %v1905 = vunpack.c.l.b16 %v1835
        %v1906 = vunpack.c.l.b16 %v1836
        %v1907 = vunpack.c.l.b16 %v1837
        %v1908 = vunpack.c.l.b16 %v1838
        %v1909 = vunpack.c.l.b16 %v1839
        %v1910 = vunpack.c.l.b16 %v1840
        %v1911 = vunpack.c.l.b16 %v1841
        %v1912 = vpack.c.b16 %v1883, %v1882
        %v1913 = vpack.c.b16 %v1884, %v1884
        %v1914 = vpack.c.b16 %v1886, %v1885
        %v1915 = vpack.c.b16 %v1887, %v1887
        %v1916 = vpack.c.b16 %v1889, %v1888
        %v1917 = vpack.c.b16 %v1890, %v1890
        %v1918 = vpack.c.b16 %v1892, %v1891
        %v1919 = vpack.c.b16 %v1893, %v1893
        %v1920 = vpack.c.b16 %v1895, %v1894
        %v1921 = vpack.c.b16 %v1896, %v1896
        %v1922 = vpack.c.b16 %v1898, %v1897
        %v1923 = vpack.c.b16 %v1899, %v1899
        %v1924 = vpack.c.b16 %v1901, %v1900
        %v1925 = vpack.c.b16 %v1902, %v1902
        %v1926 = vpack.c.b16 %v1904, %v1903
        %v1927 = vpack.c.b16 %v1905, %v1905
        %v1928 = vpack.c.b16 %v1907, %v1906
        %v1929 = vpack.c.b16 %v1908, %v1908
        %v1930 = vpack.c.b16 %v1910, %v1909
        %v1931 = vpack.c.b16 %v1911, %v1911
        %v1932 = vpack.c.b16 %v1884, %v1883
        %v1933 = vpack.c.b16 %v1887, %v1886
        %v1934 = vpack.c.b16 %v1890, %v1889
        %v1935 = vpack.c.b16 %v1893, %v1892
        %v1936 = vpack.c.b16 %v1896, %v1895
        %v1937 = vpack.c.b16 %v1899, %v1898
        %v1938 = vpack.c.b16 %v1902, %v1901
        %v1939 = vpack.c.b16 %v1905, %v1904
        %v1940 = vpack.c.b16 %v1908, %v1907
        %v1941 = vpack.c.b16 %v1911, %v1910
        %v1943 = vshrl.u32 %v1932, 16
        %v1945 = vrot.slane %v1943, 4
        %v1946 = vshll.u32 %v1932, 16
        %v1948 = vrot.slane %v1946, 5
        %v1949 = vor.u32 %v1945, %v1948
        %v1951 = vshrl.u32 %v1933, 16
        %v1953 = vrot.slane %v1951, 4
        %v1954 = vshll.u32 %v1933, 16
        %v1956 = vrot.slane %v1954, 5
        %v1957 = vor.u32 %v1953, %v1956
        %v1959 = vshrl.u32 %v1934, 16
        %v1961 = vrot.slane %v1959, 4
        %v1962 = vshll.u32 %v1934, 16
        %v1964 = vrot.slane %v1962, 5
        %v1965 = vor.u32 %v1961, %v1964
        %v1967 = vshrl.u32 %v1935, 16
        %v1969 = vrot.slane %v1967, 4
        %v1970 = vshll.u32 %v1935, 16
        %v1972 = vrot.slane %v1970, 5
        %v1973 = vor.u32 %v1969, %v1972
        %v1975 = vshrl.u32 %v1936, 16
        %v1977 = vrot.slane %v1975, 4
        %v1978 = vshll.u32 %v1936, 16
        %v1980 = vrot.slane %v1978, 5
        %v1981 = vor.u32 %v1977, %v1980
        %v1983 = vshrl.u32 %v1937, 16
        %v1985 = vrot.slane %v1983, 4
        %v1986 = vshll.u32 %v1937, 16
        %v1988 = vrot.slane %v1986, 5
        %v1989 = vor.u32 %v1985, %v1988
        %v1991 = vshrl.u32 %v1938, 16
        %v1993 = vrot.slane %v1991, 4
        %v1994 = vshll.u32 %v1938, 16
        %v1996 = vrot.slane %v1994, 5
        %v1997 = vor.u32 %v1993, %v1996
        %v1999 = vshrl.u32 %v1939, 16
        %v2001 = vrot.slane %v1999, 4
        %v2002 = vshll.u32 %v1939, 16
        %v2004 = vrot.slane %v2002, 5
        %v2005 = vor.u32 %v2001, %v2004
        %v2007 = vshrl.u32 %v1940, 16
        %v2009 = vrot.slane %v2007, 4
        %v2010 = vshll.u32 %v1940, 16
        %v2012 = vrot.slane %v2010, 5
        %v2013 = vor.u32 %v2009, %v2012
        %v2015 = vshrl.u32 %v1941, 16
        %v2017 = vrot.slane %v2015, 4
        %v2018 = vshll.u32 %v1941, 16
        %v2020 = vrot.slane %v2018, 5
        %v2021 = vor.u32 %v2017, %v2020
        %v2032 = vunpack.c.l.b16 %v1842
        %v2033 = vunpack.c.l.b16 %v1843
        %v2034 = vunpack.c.l.b16 %v1844
        %v2035 = vunpack.c.l.b16 %v1845
        %v2036 = vunpack.c.l.b16 %v1846
        %v2037 = vunpack.c.l.b16 %v1847
        %v2038 = vunpack.c.l.b16 %v1848
        %v2039 = vunpack.c.l.b16 %v1849
        %v2040 = vunpack.c.l.b16 %v1850
        %v2041 = vunpack.c.l.b16 %v1851
        %v2042 = vpack.c.b16 %v2032, %v2032
        %v2043 = vpack.c.b16 %v2033, %v2033
        %v2044 = vpack.c.b16 %v2034, %v2034
        %v2045 = vpack.c.b16 %v2035, %v2035
        %v2046 = vpack.c.b16 %v2036, %v2036
        %v2047 = vpack.c.b16 %v2037, %v2037
        %v2048 = vpack.c.b16 %v2038, %v2038
        %v2049 = vpack.c.b16 %v2039, %v2039
        %v2050 = vpack.c.b16 %v2040, %v2040
        %v2051 = vpack.c.b16 %v2041, %v2041
        %v2052 = vrot.slane %v1932, 5
        %v2053 = vrot.slane %v2042, 5
        %v2054 = vsel %vm726, %v2052, %v2053
        %v2055 = vrot.slane %v1933, 5
        %v2056 = vrot.slane %v2043, 5
        %v2057 = vsel %vm726, %v2055, %v2056
        %v2058 = vrot.slane %v1934, 5
        %v2059 = vrot.slane %v2044, 5
        %v2060 = vsel %vm726, %v2058, %v2059
        %v2061 = vrot.slane %v1935, 5
        %v2062 = vrot.slane %v2045, 5
        %v2063 = vsel %vm726, %v2061, %v2062
        %v2064 = vrot.slane %v1936, 5
        %v2065 = vrot.slane %v2046, 5
        %v2066 = vsel %vm726, %v2064, %v2065
        %v2067 = vrot.slane %v1937, 5
        %v2068 = vrot.slane %v2047, 5
        %v2069 = vsel %vm726, %v2067, %v2068
        %v2070 = vrot.slane %v1938, 5
        %v2071 = vrot.slane %v2048, 5
        %v2072 = vsel %vm726, %v2070, %v2071
        %v2073 = vrot.slane %v1939, 5
        %v2074 = vrot.slane %v2049, 5
        %v2075 = vsel %vm726, %v2073, %v2074
        %v2076 = vrot.slane %v1940, 5
        %v2077 = vrot.slane %v2050, 5
        %v2078 = vsel %vm726, %v2076, %v2077
        %v2079 = vrot.slane %v1941, 5
        %v2080 = vrot.slane %v2051, 5
        %v2081 = vsel %vm726, %v2079, %v2080
        %v2083 = vshrl.u32 %v1912, 16
        %v2085 = vrot.slane %v2083, 3
        %v2086 = vshll.u32 %v1912, 16
        %v2088 = vrot.slane %v2086, 4
        %v2089 = vor.u32 %v2085, %v2088
        %v2091 = vshrl.u32 %v1913, 16
        %v2093 = vrot.slane %v2091, 3
        %v2094 = vshll.u32 %v1913, 16
        %v2096 = vrot.slane %v2094, 4
        %v2097 = vor.u32 %v2093, %v2096
        %v2098 = vsel %vm757, %v2089, %v2097
        %v2100 = vshrl.u32 %v1949, 16
        %v2102 = vrot.slane %v2100, 3
        %v2103 = vshll.u32 %v1949, 16
        %v2105 = vrot.slane %v2103, 4
        %v2106 = vor.u32 %v2102, %v2105
        %v2107 = vsel %vm757, %v2106, %v2106
        %v2109 = vshrl.u32 %v2052, 16
        %v2111 = vrot.slane %v2109, 3
        %v2112 = vshll.u32 %v2052, 16
        %v2114 = vrot.slane %v2112, 4
        %v2115 = vor.u32 %v2111, %v2114
        %v2117 = vshrl.u32 %v2054, 16
        %v2119 = vrot.slane %v2117, 3
        %v2120 = vshll.u32 %v2054, 16
        %v2122 = vrot.slane %v2120, 4
        %v2123 = vor.u32 %v2119, %v2122
        %v2124 = vsel %vm757, %v2115, %v2123
        %v2126 = vshrl.u32 %v1914, 16
        %v2128 = vrot.slane %v2126, 3
        %v2129 = vshll.u32 %v1914, 16
        %v2131 = vrot.slane %v2129, 4
        %v2132 = vor.u32 %v2128, %v2131
        %v2134 = vshrl.u32 %v1915, 16
        %v2136 = vrot.slane %v2134, 3
        %v2137 = vshll.u32 %v1915, 16
        %v2139 = vrot.slane %v2137, 4
        %v2140 = vor.u32 %v2136, %v2139
        %v2141 = vsel %vm757, %v2132, %v2140
        %v2143 = vshrl.u32 %v1957, 16
        %v2145 = vrot.slane %v2143, 3
        %v2146 = vshll.u32 %v1957, 16
        %v2148 = vrot.slane %v2146, 4
        %v2149 = vor.u32 %v2145, %v2148
        %v2150 = vsel %vm757, %v2149, %v2149
        %v2152 = vshrl.u32 %v2055, 16
        %v2154 = vrot.slane %v2152, 3
        %v2155 = vshll.u32 %v2055, 16
        %v2157 = vrot.slane %v2155, 4
        %v2158 = vor.u32 %v2154, %v2157
        %v2160 = vshrl.u32 %v2057, 16
        %v2162 = vrot.slane %v2160, 3
        %v2163 = vshll.u32 %v2057, 16
        %v2165 = vrot.slane %v2163, 4
        %v2166 = vor.u32 %v2162, %v2165
        %v2167 = vsel %vm757, %v2158, %v2166
        %v2169 = vshrl.u32 %v1916, 16
        %v2171 = vrot.slane %v2169, 3
        %v2172 = vshll.u32 %v1916, 16
        %v2174 = vrot.slane %v2172, 4
        %v2175 = vor.u32 %v2171, %v2174
        %v2177 = vshrl.u32 %v1917, 16
        %v2179 = vrot.slane %v2177, 3
        %v2180 = vshll.u32 %v1917, 16
        %v2182 = vrot.slane %v2180, 4
        %v2183 = vor.u32 %v2179, %v2182
        %v2184 = vsel %vm757, %v2175, %v2183
        %v2186 = vshrl.u32 %v1965, 16
        %v2188 = vrot.slane %v2186, 3
        %v2189 = vshll.u32 %v1965, 16
        %v2191 = vrot.slane %v2189, 4
        %v2192 = vor.u32 %v2188, %v2191
        %v2193 = vsel %vm757, %v2192, %v2192
        %v2195 = vshrl.u32 %v2058, 16
        %v2197 = vrot.slane %v2195, 3
        %v2198 = vshll.u32 %v2058, 16
        %v2200 = vrot.slane %v2198, 4
        %v2201 = vor.u32 %v2197, %v2200
        %v2203 = vshrl.u32 %v2060, 16
        %v2205 = vrot.slane %v2203, 3
        %v2206 = vshll.u32 %v2060, 16
        %v2208 = vrot.slane %v2206, 4
        %v2209 = vor.u32 %v2205, %v2208
        %v2210 = vsel %vm757, %v2201, %v2209
        %v2212 = vshrl.u32 %v1918, 16
        %v2214 = vrot.slane %v2212, 3
        %v2215 = vshll.u32 %v1918, 16
        %v2217 = vrot.slane %v2215, 4
        %v2218 = vor.u32 %v2214, %v2217
        %v2220 = vshrl.u32 %v1919, 16
        %v2222 = vrot.slane %v2220, 3
        %v2223 = vshll.u32 %v1919, 16
        %v2225 = vrot.slane %v2223, 4
        %v2226 = vor.u32 %v2222, %v2225
        %v2227 = vsel %vm757, %v2218, %v2226
        %v2229 = vshrl.u32 %v1973, 16
        %v2231 = vrot.slane %v2229, 3
        %v2232 = vshll.u32 %v1973, 16
        %v2234 = vrot.slane %v2232, 4
        %v2235 = vor.u32 %v2231, %v2234
        %v2236 = vsel %vm757, %v2235, %v2235
        %v2238 = vshrl.u32 %v2061, 16
        %v2240 = vrot.slane %v2238, 3
        %v2241 = vshll.u32 %v2061, 16
        %v2243 = vrot.slane %v2241, 4
        %v2244 = vor.u32 %v2240, %v2243
        %v2246 = vshrl.u32 %v2063, 16
        %v2248 = vrot.slane %v2246, 3
        %v2249 = vshll.u32 %v2063, 16
        %v2251 = vrot.slane %v2249, 4
        %v2252 = vor.u32 %v2248, %v2251
        %v2253 = vsel %vm757, %v2244, %v2252
        %v2255 = vshrl.u32 %v1920, 16
        %v2257 = vrot.slane %v2255, 3
        %v2258 = vshll.u32 %v1920, 16
        %v2260 = vrot.slane %v2258, 4
        %v2261 = vor.u32 %v2257, %v2260
        %v2263 = vshrl.u32 %v1921, 16
        %v2265 = vrot.slane %v2263, 3
        %v2266 = vshll.u32 %v1921, 16
        %v2268 = vrot.slane %v2266, 4
        %v2269 = vor.u32 %v2265, %v2268
        %v2270 = vsel %vm757, %v2261, %v2269
        %v2272 = vshrl.u32 %v1981, 16
        %v2274 = vrot.slane %v2272, 3
        %v2275 = vshll.u32 %v1981, 16
        %v2277 = vrot.slane %v2275, 4
        %v2278 = vor.u32 %v2274, %v2277
        %v2279 = vsel %vm757, %v2278, %v2278
        %v2281 = vshrl.u32 %v2064, 16
        %v2283 = vrot.slane %v2281, 3
        %v2284 = vshll.u32 %v2064, 16
        %v2286 = vrot.slane %v2284, 4
        %v2287 = vor.u32 %v2283, %v2286
        %v2289 = vshrl.u32 %v2066, 16
        %v2291 = vrot.slane %v2289, 3
        %v2292 = vshll.u32 %v2066, 16
        %v2294 = vrot.slane %v2292, 4
        %v2295 = vor.u32 %v2291, %v2294
        %v2296 = vsel %vm757, %v2287, %v2295
        %v2298 = vshrl.u32 %v1922, 16
        %v2300 = vrot.slane %v2298, 3
        %v2301 = vshll.u32 %v1922, 16
        %v2303 = vrot.slane %v2301, 4
        %v2304 = vor.u32 %v2300, %v2303
        %v2306 = vshrl.u32 %v1923, 16
        %v2308 = vrot.slane %v2306, 3
        %v2309 = vshll.u32 %v1923, 16
        %v2311 = vrot.slane %v2309, 4
        %v2312 = vor.u32 %v2308, %v2311
        %v2313 = vsel %vm757, %v2304, %v2312
        %v2315 = vshrl.u32 %v1989, 16
        %v2317 = vrot.slane %v2315, 3
        %v2318 = vshll.u32 %v1989, 16
        %v2320 = vrot.slane %v2318, 4
        %v2321 = vor.u32 %v2317, %v2320
        %v2322 = vsel %vm757, %v2321, %v2321
        %v2324 = vshrl.u32 %v2067, 16
        %v2326 = vrot.slane %v2324, 3
        %v2327 = vshll.u32 %v2067, 16
        %v2329 = vrot.slane %v2327, 4
        %v2330 = vor.u32 %v2326, %v2329
        %v2332 = vshrl.u32 %v2069, 16
        %v2334 = vrot.slane %v2332, 3
        %v2335 = vshll.u32 %v2069, 16
        %v2337 = vrot.slane %v2335, 4
        %v2338 = vor.u32 %v2334, %v2337
        %v2339 = vsel %vm757, %v2330, %v2338
        %v2341 = vshrl.u32 %v1924, 16
        %v2343 = vrot.slane %v2341, 3
        %v2344 = vshll.u32 %v1924, 16
        %v2346 = vrot.slane %v2344, 4
        %v2347 = vor.u32 %v2343, %v2346
        %v2349 = vshrl.u32 %v1925, 16
        %v2351 = vrot.slane %v2349, 3
        %v2352 = vshll.u32 %v1925, 16
        %v2354 = vrot.slane %v2352, 4
        %v2355 = vor.u32 %v2351, %v2354
        %v2356 = vsel %vm757, %v2347, %v2355
        %v2358 = vshrl.u32 %v1997, 16
        %v2360 = vrot.slane %v2358, 3
        %v2361 = vshll.u32 %v1997, 16
        %v2363 = vrot.slane %v2361, 4
        %v2364 = vor.u32 %v2360, %v2363
        %v2365 = vsel %vm757, %v2364, %v2364
        %v2367 = vshrl.u32 %v2070, 16
        %v2369 = vrot.slane %v2367, 3
        %v2370 = vshll.u32 %v2070, 16
        %v2372 = vrot.slane %v2370, 4
        %v2373 = vor.u32 %v2369, %v2372
        %v2375 = vshrl.u32 %v2072, 16
        %v2377 = vrot.slane %v2375, 3
        %v2378 = vshll.u32 %v2072, 16
        %v2380 = vrot.slane %v2378, 4
        %v2381 = vor.u32 %v2377, %v2380
        %v2382 = vsel %vm757, %v2373, %v2381
        %v2384 = vshrl.u32 %v1926, 16
        %v2386 = vrot.slane %v2384, 3
        %v2387 = vshll.u32 %v1926, 16
        %v2389 = vrot.slane %v2387, 4
        %v2390 = vor.u32 %v2386, %v2389
        %v2392 = vshrl.u32 %v1927, 16
        %v2394 = vrot.slane %v2392, 3
        %v2395 = vshll.u32 %v1927, 16
        %v2397 = vrot.slane %v2395, 4
        %v2398 = vor.u32 %v2394, %v2397
        %v2399 = vsel %vm757, %v2390, %v2398
        %v2401 = vshrl.u32 %v2005, 16
        %v2403 = vrot.slane %v2401, 3
        %v2404 = vshll.u32 %v2005, 16
        %v2406 = vrot.slane %v2404, 4
        %v2407 = vor.u32 %v2403, %v2406
        %v2408 = vsel %vm757, %v2407, %v2407
        %v2410 = vshrl.u32 %v2073, 16
        %v2412 = vrot.slane %v2410, 3
        %v2413 = vshll.u32 %v2073, 16
        %v2415 = vrot.slane %v2413, 4
        %v2416 = vor.u32 %v2412, %v2415
        %v2418 = vshrl.u32 %v2075, 16
        %v2420 = vrot.slane %v2418, 3
        %v2421 = vshll.u32 %v2075, 16
        %v2423 = vrot.slane %v2421, 4
        %v2424 = vor.u32 %v2420, %v2423
        %v2425 = vsel %vm757, %v2416, %v2424
        %v2427 = vshrl.u32 %v1928, 16
        %v2429 = vrot.slane %v2427, 3
        %v2430 = vshll.u32 %v1928, 16
        %v2432 = vrot.slane %v2430, 4
        %v2433 = vor.u32 %v2429, %v2432
        %v2435 = vshrl.u32 %v1929, 16
        %v2437 = vrot.slane %v2435, 3
        %v2438 = vshll.u32 %v1929, 16
        %v2440 = vrot.slane %v2438, 4
        %v2441 = vor.u32 %v2437, %v2440
        %v2442 = vsel %vm757, %v2433, %v2441
        %v2444 = vshrl.u32 %v2013, 16
        %v2446 = vrot.slane %v2444, 3
        %v2447 = vshll.u32 %v2013, 16
        %v2449 = vrot.slane %v2447, 4
        %v2450 = vor.u32 %v2446, %v2449
        %v2451 = vsel %vm757, %v2450, %v2450
        %v2453 = vshrl.u32 %v2076, 16
        %v2455 = vrot.slane %v2453, 3
        %v2456 = vshll.u32 %v2076, 16
        %v2458 = vrot.slane %v2456, 4
        %v2459 = vor.u32 %v2455, %v2458
        %v2461 = vshrl.u32 %v2078, 16
        %v2463 = vrot.slane %v2461, 3
        %v2464 = vshll.u32 %v2078, 16
        %v2466 = vrot.slane %v2464, 4
        %v2467 = vor.u32 %v2463, %v2466
        %v2468 = vsel %vm757, %v2459, %v2467
        %v2470 = vshrl.u32 %v1930, 16
        %v2472 = vrot.slane %v2470, 3
        %v2473 = vshll.u32 %v1930, 16
        %v2475 = vrot.slane %v2473, 4
        %v2476 = vor.u32 %v2472, %v2475
        %v2478 = vshrl.u32 %v1931, 16
        %v2480 = vrot.slane %v2478, 3
        %v2481 = vshll.u32 %v1931, 16
        %v2483 = vrot.slane %v2481, 4
        %v2484 = vor.u32 %v2480, %v2483
        %v2485 = vsel %vm757, %v2476, %v2484
        %v2487 = vshrl.u32 %v2021, 16
        %v2489 = vrot.slane %v2487, 3
        %v2490 = vshll.u32 %v2021, 16
        %v2492 = vrot.slane %v2490, 4
        %v2493 = vor.u32 %v2489, %v2492
        %v2494 = vsel %vm757, %v2493, %v2493
        %v2496 = vshrl.u32 %v2079, 16
        %v2498 = vrot.slane %v2496, 3
        %v2499 = vshll.u32 %v2079, 16
        %v2501 = vrot.slane %v2499, 4
        %v2502 = vor.u32 %v2498, %v2501
        %v2504 = vshrl.u32 %v2081, 16
        %v2506 = vrot.slane %v2504, 3
        %v2507 = vshll.u32 %v2081, 16
        %v2509 = vrot.slane %v2507, 4
        %v2510 = vor.u32 %v2506, %v2509
        %v2511 = vsel %vm757, %v2502, %v2510
        %s2542 = scalar_lea.vmem [#allocation9], 384
        %v2543 = vld [vmem:[%s2542] sm:$0xff]
        %v2544 = vld [vmem:[%s2542 + $0x8] sm:$0xff]
        %v2545 = vld [vmem:[%s2542 + $0x10] sm:$0xff]
        %v2546 = vld [vmem:[%s2542 + $0x18] sm:$0xff]
        %v2547 = vld [vmem:[%s2542 + $0x20] sm:$0xff]
        %v2548 = vld [vmem:[%s2542 + $0x28] sm:$0xff]
        %v2549 = vld [vmem:[%s2542 + $0x30] sm:$0xff]
        %v2550 = vld [vmem:[%s2542 + $0x38] sm:$0xff]
        %v2551 = vld [vmem:[%s2542 + $0x40] sm:$0xff]
        %v2552 = vld [vmem:[%s2542 + $0x48] sm:$0xff]
        %v2553 = vld [vmem:[%s2542 + $0x50] sm:$0xff]
        %v2554 = vld [vmem:[%s2542 + $0x58] sm:$0xff]
        %v2555 = vld [vmem:[%s2542 + $0x60] sm:$0xff]
        %v2556 = vld [vmem:[%s2542 + $0x68] sm:$0xff]
        %v2557 = vld [vmem:[%s2542 + $0x70] sm:$0xff]
        %v2558 = vld [vmem:[%s2542 + $0x78] sm:$0xff]
        %v2559 = vld [vmem:[%s2542 + $0x80] sm:$0xff]
        %v2560 = vld [vmem:[%s2542 + $0x88] sm:$0xff]
        %v2561 = vld [vmem:[%s2542 + $0x90] sm:$0xff]
        %v2562 = vld [vmem:[%s2542 + $0x98] sm:$0xff]
        %v2563 = vld [vmem:[%s2542 + $0xa0] sm:$0xff]
        %v2564 = vld [vmem:[%s2542 + $0xa8] sm:$0xff]
        %v2565 = vld [vmem:[%s2542 + $0xb0] sm:$0xff]
        %v2566 = vld [vmem:[%s2542 + $0xb8] sm:$0xff]
        %v2567 = vld [vmem:[%s2542 + $0xc0] sm:$0xff]
        %v2568 = vld [vmem:[%s2542 + $0xc8] sm:$0xff]
        %v2569 = vld [vmem:[%s2542 + $0xd0] sm:$0xff]
        %v2570 = vld [vmem:[%s2542 + $0xd8] sm:$0xff]
        %v2571 = vld [vmem:[%s2542 + $0xe0] sm:$0xff]
        %v2572 = vld [vmem:[%s2542 + $0xe8] sm:$0xff]
        %v2573 = vld [vmem:[%s2542 + $0xf0] sm:$0xff]
        %v2574 = vld [vmem:[%s2542 + $0xf8] sm:$0xff]
        %v2575 = vld [vmem:[%s2542 + $0x100] sm:$0xff]
        %v2576 = vld [vmem:[%s2542 + $0x108] sm:$0xff]
        %v2577 = vld [vmem:[%s2542 + $0x110] sm:$0xff]
        %v2578 = vld [vmem:[%s2542 + $0x118] sm:$0xff]
        %v2579 = vld [vmem:[%s2542 + $0x120] sm:$0xff]
        %v2580 = vld [vmem:[%s2542 + $0x128] sm:$0xff]
        %v2581 = vld [vmem:[%s2542 + $0x130] sm:$0xff]
        %v2582 = vld [vmem:[%s2542 + $0x138] sm:$0xff]
        %v2583 = vld [vmem:[%s2542 + $0x140] sm:$0xff]
        %v2584 = vld [vmem:[%s2542 + $0x148] sm:$0xff]
        %v2585 = vld [vmem:[%s2542 + $0x150] sm:$0xff]
        %v2586 = vld [vmem:[%s2542 + $0x158] sm:$0xff]
        %v2587 = vld [vmem:[%s2542 + $0x160] sm:$0xff]
        %v2588 = vld [vmem:[%s2542 + $0x168] sm:$0xff]
        %v2589 = vld [vmem:[%s2542 + $0x170] sm:$0xff]
        %v2590 = vld [vmem:[%s2542 + $0x178] sm:$0xff]
        %v2639 = vunpack.c.l.b16 %v2543
        %v2640 = vunpack.c.h.b16 %v2543
        %v2641 = vunpack.c.l.b16 %v2544
        %v2642 = vunpack.c.h.b16 %v2544
        %v2643 = vunpack.c.l.b16 %v2545
        %v2644 = vunpack.c.h.b16 %v2545
        %v2645 = vunpack.c.l.b16 %v2546
        %v2646 = vunpack.c.h.b16 %v2546
        %v2647 = vunpack.c.l.b16 %v2547
        %v2648 = vunpack.c.h.b16 %v2547
        %v2649 = vunpack.c.l.b16 %v2548
        %v2650 = vunpack.c.h.b16 %v2548
        %v2651 = vunpack.c.l.b16 %v2549
        %v2652 = vunpack.c.h.b16 %v2549
        %v2653 = vunpack.c.l.b16 %v2550
        %v2654 = vunpack.c.h.b16 %v2550
        %v2655 = vunpack.c.l.b16 %v2551
        %v2656 = vunpack.c.h.b16 %v2551
        %v2657 = vunpack.c.l.b16 %v2552
        %v2658 = vunpack.c.h.b16 %v2552
        %v2659 = vunpack.c.l.b16 %v2553
        %v2660 = vunpack.c.h.b16 %v2553
        %v2661 = vunpack.c.l.b16 %v2554
        %v2662 = vunpack.c.h.b16 %v2554
        %v2663 = vunpack.c.l.b16 %v2555
        %v2664 = vunpack.c.h.b16 %v2555
        %v2665 = vunpack.c.l.b16 %v2556
        %v2666 = vunpack.c.h.b16 %v2556
        %v2667 = vunpack.c.l.b16 %v2557
        %v2668 = vunpack.c.h.b16 %v2557
        %v2669 = vunpack.c.l.b16 %v2558
        %v2670 = vunpack.c.h.b16 %v2558
        %v2671 = vunpack.c.l.b16 %v2559
        %v2672 = vunpack.c.h.b16 %v2559
        %v2673 = vunpack.c.l.b16 %v2560
        %v2674 = vunpack.c.h.b16 %v2560
        %v2675 = vunpack.c.l.b16 %v2561
        %v2676 = vunpack.c.h.b16 %v2561
        %v2677 = vunpack.c.l.b16 %v2562
        %v2678 = vunpack.c.h.b16 %v2562
        %v2679 = vunpack.c.l.b16 %v2563
        %v2680 = vunpack.c.h.b16 %v2563
        %v2681 = vunpack.c.l.b16 %v2564
        %v2682 = vunpack.c.h.b16 %v2564
        %v2683 = vunpack.c.l.b16 %v2565
        %v2684 = vunpack.c.h.b16 %v2565
        %v2685 = vunpack.c.l.b16 %v2566
        %v2686 = vunpack.c.h.b16 %v2566
        %v2687 = vunpack.c.l.b16 %v2567
        %v2688 = vunpack.c.h.b16 %v2567
        %v2689 = vunpack.c.l.b16 %v2568
        %v2690 = vunpack.c.h.b16 %v2568
        %v2691 = vunpack.c.l.b16 %v2569
        %v2692 = vunpack.c.h.b16 %v2569
        %v2693 = vunpack.c.l.b16 %v2570
        %v2694 = vunpack.c.h.b16 %v2570
        %v2695 = vunpack.c.l.b16 %v2571
        %v2696 = vunpack.c.h.b16 %v2571
        %v2697 = vunpack.c.l.b16 %v2572
        %v2698 = vunpack.c.h.b16 %v2572
        %v2699 = vunpack.c.l.b16 %v2573
        %v2700 = vunpack.c.h.b16 %v2573
        %v2701 = vunpack.c.l.b16 %v2574
        %v2702 = vunpack.c.h.b16 %v2574
        %v2703 = vunpack.c.l.b16 %v2575
        %v2704 = vunpack.c.h.b16 %v2575
        %v2705 = vunpack.c.l.b16 %v2576
        %v2706 = vunpack.c.h.b16 %v2576
        %v2707 = vunpack.c.l.b16 %v2577
        %v2708 = vunpack.c.h.b16 %v2577
        %v2709 = vunpack.c.l.b16 %v2578
        %v2710 = vunpack.c.h.b16 %v2578
        %v2711 = vunpack.c.l.b16 %v2579
        %v2712 = vunpack.c.h.b16 %v2579
        %v2713 = vunpack.c.l.b16 %v2580
        %v2714 = vunpack.c.h.b16 %v2580
        %v2715 = vunpack.c.l.b16 %v2581
        %v2716 = vunpack.c.h.b16 %v2581
        %v2717 = vunpack.c.l.b16 %v2582
        %v2718 = vunpack.c.h.b16 %v2582
        %v2719 = vunpack.c.l.b16 %v2583
        %v2720 = vunpack.c.h.b16 %v2583
        %v2721 = vunpack.c.l.b16 %v2584
        %v2722 = vunpack.c.h.b16 %v2584
        %v2723 = vunpack.c.l.b16 %v2585
        %v2724 = vunpack.c.h.b16 %v2585
        %v2725 = vunpack.c.l.b16 %v2586
        %v2726 = vunpack.c.h.b16 %v2586
        %v2727 = vunpack.c.l.b16 %v2587
        %v2728 = vunpack.c.h.b16 %v2587
        %v2729 = vunpack.c.l.b16 %v2588
        %v2730 = vunpack.c.h.b16 %v2588
        %v2731 = vunpack.c.l.b16 %v2589
        %v2732 = vunpack.c.h.b16 %v2589
        %v2733 = vunpack.c.l.b16 %v2590
        %v2734 = vunpack.c.h.b16 %v2590
        %v2735 = vpack.c.b16 %v2641, %v2639
        %v2736 = vpack.c.b16 %v2642, %v2640
        %v2737 = vpack.c.b16 %v2645, %v2643
        %v2738 = vpack.c.b16 %v2646, %v2644
        %v2739 = vpack.c.b16 %v2649, %v2647
        %v2740 = vpack.c.b16 %v2650, %v2648
        %v2741 = vpack.c.b16 %v2653, %v2651
        %v2742 = vpack.c.b16 %v2654, %v2652
        %v2743 = vpack.c.b16 %v2657, %v2655
        %v2744 = vpack.c.b16 %v2658, %v2656
        %v2745 = vpack.c.b16 %v2661, %v2659
        %v2746 = vpack.c.b16 %v2662, %v2660
        %v2747 = vpack.c.b16 %v2665, %v2663
        %v2748 = vpack.c.b16 %v2666, %v2664
        %v2749 = vpack.c.b16 %v2669, %v2667
        %v2750 = vpack.c.b16 %v2670, %v2668
        %v2751 = vpack.c.b16 %v2673, %v2671
        %v2752 = vpack.c.b16 %v2674, %v2672
        %v2753 = vpack.c.b16 %v2677, %v2675
        %v2754 = vpack.c.b16 %v2678, %v2676
        %v2755 = vpack.c.b16 %v2681, %v2679
        %v2756 = vpack.c.b16 %v2682, %v2680
        %v2757 = vpack.c.b16 %v2685, %v2683
        %v2758 = vpack.c.b16 %v2686, %v2684
        %v2759 = vpack.c.b16 %v2689, %v2687
        %v2760 = vpack.c.b16 %v2690, %v2688
        %v2761 = vpack.c.b16 %v2693, %v2691
        %v2762 = vpack.c.b16 %v2694, %v2692
        %v2763 = vpack.c.b16 %v2697, %v2695
        %v2764 = vpack.c.b16 %v2698, %v2696
        %v2765 = vpack.c.b16 %v2701, %v2699
        %v2766 = vpack.c.b16 %v2702, %v2700
        %v2767 = vpack.c.b16 %v2705, %v2703
        %v2768 = vpack.c.b16 %v2706, %v2704
        %v2769 = vpack.c.b16 %v2709, %v2707
        %v2770 = vpack.c.b16 %v2710, %v2708
        %v2771 = vpack.c.b16 %v2713, %v2711
        %v2772 = vpack.c.b16 %v2714, %v2712
        %v2773 = vpack.c.b16 %v2717, %v2715
        %v2774 = vpack.c.b16 %v2718, %v2716
        %v2775 = vpack.c.b16 %v2721, %v2719
        %v2776 = vpack.c.b16 %v2722, %v2720
        %v2777 = vpack.c.b16 %v2725, %v2723
        %v2778 = vpack.c.b16 %v2726, %v2724
        %v2779 = vpack.c.b16 %v2729, %v2727
        %v2780 = vpack.c.b16 %v2730, %v2728
        %v2781 = vpack.c.b16 %v2733, %v2731
        %v2782 = vpack.c.b16 %v2734, %v2732
        %2831 = vmatprep.subr.bf16.mxu0 %v2750
        %2832 = vmatpush1.bf16.msra.mxu0 %v2749
        %2833 = vmatprep.subr.bf16.mxu0 %v2748
        %2834 = vmatpush1.bf16.msra.mxu0 %v2747
        %2835 = vmatprep.subr.bf16.mxu0 %v2746
        %2836 = vmatpush1.bf16.msra.mxu0 %v2745
        %2837 = vmatprep.subr.bf16.mxu0 %v2744
        %2838 = vmatpush1.bf16.msra.mxu0 %v2743
        %2839 = vmatprep.subr.bf16.mxu0 %v2742
        %2840 = vmatpush1.bf16.msra.mxu0 %v2741
        %2841 = vmatprep.subr.bf16.mxu0 %v2740
        %2842 = vmatpush1.bf16.msra.mxu0 %v2739
        %2843 = vmatprep.subr.bf16.mxu0 %v2738
        %2844 = vmatpush1.bf16.msra.mxu0 %v2737
        %2845 = vmatprep.subr.bf16.mxu0 %v2736
        %2846 = vmatpush1.bf16.msra.mxu0 %v2735
        %2847 = vmatprep.subr.bf16.mxu0 %v2766
        %2848 = vmatpush2.bf16.msra.mxu0 %v2765
        %2849 = vmatprep.subr.bf16.mxu0 %v2764
        %2850 = vmatpush2.bf16.msra.mxu0 %v2763
        %2851 = vmatprep.subr.bf16.mxu0 %v2762
        %2852 = vmatpush2.bf16.msra.mxu0 %v2761
        %2853 = vmatprep.subr.bf16.mxu0 %v2760
        %2854 = vmatpush2.bf16.msra.mxu0 %v2759
        %2855 = vmatprep.subr.bf16.mxu0 %v2758
        %2856 = vmatpush2.bf16.msra.mxu0 %v2757
        %2857 = vmatprep.subr.bf16.mxu0 %v2756
        %2858 = vmatpush2.bf16.msra.mxu0 %v2755
        %2859 = vmatprep.subr.bf16.mxu0 %v2754
        %2860 = vmatpush2.bf16.msra.mxu0 %v2753
        %2861 = vmatprep.subr.bf16.mxu0 %v2752
        %2862 = vmatpush2.bf16.msra.mxu0 %v2751
        %2863 = vmatprep.mubr.bf16.mxu0 %v2107
        %2864 = vmatmul.mubr.bf16.gmra.mxu0 %v2098
        %v2865 = vpop.f32.mrf.mxu0
        %v2866 = vadd.f32 0.0, %v2865
        %v2867 = vpop.f32.mrf.mxu0
        %v2868 = vpop.f32.mrf.mxu0
        %v2869 = vadd.f32 0.0, %v2868
        %v2870 = vpop.f32.mrf.mxu0
        %2871 = vmatprep.mubr.bf16.mxu0 %v2150
        %2872 = vmatmul.mubr.bf16.gmra.mxu0 %v2141
        %v2873 = vpop.f32.mrf.mxu0
        %v2874 = vadd.f32 0.0, %v2873
        %v2875 = vpop.f32.mrf.mxu0
        %v2876 = vadd.f32 0.0, %v2875
        %v2877 = vpop.f32.mrf.mxu0
        %v2878 = vadd.f32 0.0, %v2877
        %v2879 = vpop.f32.mrf.mxu0
        %v2880 = vadd.f32 0.0, %v2879
        %2881 = vmatprep.mubr.bf16.mxu0 %v2193
        %2882 = vmatmul.mubr.bf16.gmra.mxu0 %v2184
        %v2883 = vpop.f32.mrf.mxu0
        %v2884 = vadd.f32 0.0, %v2883
        %v2885 = vpop.f32.mrf.mxu0
        %v2886 = vadd.f32 0.0, %v2885
        %v2887 = vpop.f32.mrf.mxu0
        %v2888 = vadd.f32 0.0, %v2887
        %v2889 = vpop.f32.mrf.mxu0
        %v2890 = vadd.f32 0.0, %v2889
        %2891 = vmatprep.mubr.bf16.mxu0 %v2236
        %2892 = vmatmul.mubr.bf16.gmra.mxu0 %v2227
        %v2893 = vpop.f32.mrf.mxu0
        %v2894 = vadd.f32 0.0, %v2893
        %v2895 = vpop.f32.mrf.mxu0
        %v2896 = vadd.f32 0.0, %v2895
        %v2897 = vpop.f32.mrf.mxu0
        %v2898 = vadd.f32 0.0, %v2897
        %v2899 = vpop.f32.mrf.mxu0
        %v2900 = vadd.f32 0.0, %v2899
        %2901 = vmatprep.mubr.bf16.mxu0 %v2279
        %2902 = vmatmul.mubr.bf16.gmra.mxu0 %v2270
        %v2903 = vpop.f32.mrf.mxu0
        %v2904 = vadd.f32 0.0, %v2903
        %v2905 = vpop.f32.mrf.mxu0
        %v2906 = vadd.f32 0.0, %v2905
        %v2907 = vpop.f32.mrf.mxu0
        %v2908 = vadd.f32 0.0, %v2907
        %v2909 = vpop.f32.mrf.mxu0
        %v2910 = vadd.f32 0.0, %v2909
        %2911 = vmatprep.mubr.bf16.mxu0 %v2322
        %2912 = vmatmul.mubr.bf16.gmra.mxu0 %v2313
        %v2913 = vpop.f32.mrf.mxu0
        %v2914 = vadd.f32 0.0, %v2913
        %v2915 = vpop.f32.mrf.mxu0
        %v2916 = vadd.f32 0.0, %v2915
        %v2917 = vpop.f32.mrf.mxu0
        %v2918 = vadd.f32 0.0, %v2917
        %v2919 = vpop.f32.mrf.mxu0
        %v2920 = vadd.f32 0.0, %v2919
        %2921 = vmatprep.mubr.bf16.mxu0 %v2365
        %2922 = vmatmul.mubr.bf16.gmra.mxu0 %v2356
        %v2923 = vpop.f32.mrf.mxu0
        %v2924 = vadd.f32 0.0, %v2923
        %v2925 = vpop.f32.mrf.mxu0
        %v2926 = vadd.f32 0.0, %v2925
        %v2927 = vpop.f32.mrf.mxu0
        %v2928 = vadd.f32 0.0, %v2927
        %v2929 = vpop.f32.mrf.mxu0
        %v2930 = vadd.f32 0.0, %v2929
        %2931 = vmatprep.mubr.bf16.mxu0 %v2408
        %2932 = vmatmul.mubr.bf16.gmra.mxu0 %v2399
        %v2933 = vpop.f32.mrf.mxu0
        %v2934 = vadd.f32 0.0, %v2933
        %v2935 = vpop.f32.mrf.mxu0
        %v2936 = vadd.f32 0.0, %v2935
        %v2937 = vpop.f32.mrf.mxu0
        %v2938 = vadd.f32 0.0, %v2937
        %v2939 = vpop.f32.mrf.mxu0
        %v2940 = vadd.f32 0.0, %v2939
        %2941 = vmatprep.mubr.bf16.mxu0 %v2451
        %2942 = vmatmul.mubr.bf16.gmra.mxu0 %v2442
        %v2943 = vpop.f32.mrf.mxu0
        %v2944 = vadd.f32 0.0, %v2943
        %v2945 = vpop.f32.mrf.mxu0
        %v2946 = vadd.f32 0.0, %v2945
        %v2947 = vpop.f32.mrf.mxu0
        %v2948 = vadd.f32 0.0, %v2947
        %v2949 = vpop.f32.mrf.mxu0
        %v2950 = vadd.f32 0.0, %v2949
        %2951 = vmatprep.mubr.bf16.mxu0 %v2494
        %2952 = vmatmul.mubr.bf16.gmra.mxu0 %v2485
        %v2953 = vpop.f32.mrf.mxu0
        %v2954 = vadd.f32 0.0, %v2953
        %v2955 = vpop.f32.mrf.mxu0
        %v2956 = vpop.f32.mrf.mxu0
        %v2957 = vadd.f32 0.0, %v2956
        %v2958 = vpop.f32.mrf.mxu0
        %2959 = vdwg.mxu0
        %2960 = vmatprep.subr.bf16.mxu0 %v2782
        %2961 = vmatpush1.bf16.msra.mxu0 %v2781
        %2962 = vmatprep.subr.bf16.mxu0 %v2780
        %2963 = vmatpush1.bf16.msra.mxu0 %v2779
        %2964 = vmatprep.subr.bf16.mxu0 %v2778
        %2965 = vmatpush1.bf16.msra.mxu0 %v2777
        %2966 = vmatprep.subr.bf16.mxu0 %v2776
        %2967 = vmatpush1.bf16.msra.mxu0 %v2775
        %2968 = vmatprep.subr.bf16.mxu0 %v2774
        %2969 = vmatpush1.bf16.msra.mxu0 %v2773
        %2970 = vmatprep.subr.bf16.mxu0 %v2772
        %2971 = vmatpush1.bf16.msra.mxu0 %v2771
        %2972 = vmatprep.subr.bf16.mxu0 %v2770
        %2973 = vmatpush1.bf16.msra.mxu0 %v2769
        %2974 = vmatprep.subr.bf16.mxu0 %v2768
        %2975 = vmatpush1.bf16.msra.mxu0 %v2767
        %2976 = vmatprep.subr.bf16.mxu0 0
        %2977 = vmatpush2.bf16.msra.mxu0 0
        %2978 = vmatprep.subr.bf16.mxu0 0
        %2979 = vmatpush2.bf16.msra.mxu0 0
        %2980 = vmatprep.subr.bf16.mxu0 0
        %2981 = vmatpush2.bf16.msra.mxu0 0
        %2982 = vmatprep.subr.bf16.mxu0 0
        %2983 = vmatpush2.bf16.msra.mxu0 0
        %2984 = vmatprep.subr.bf16.mxu0 0
        %2985 = vmatpush2.bf16.msra.mxu0 0
        %2986 = vmatprep.subr.bf16.mxu0 0
        %2987 = vmatpush2.bf16.msra.mxu0 0
        %2988 = vmatprep.subr.bf16.mxu0 0
        %2989 = vmatpush2.bf16.msra.mxu0 0
        %2990 = vmatprep.subr.bf16.mxu0 0
        %2991 = vmatpush2.bf16.msra.mxu0 0
        %2992 = vmatprep.mubr.bf16.mxu0 0
        %2993 = vmatmul.mubr.bf16.gmra.mxu0 %v2124
        %v2994 = vpop.f32.mrf.mxu0
        %v2995 = vadd.f32 %v2866, %v2994
        %v2996 = vpop.f32.mrf.mxu0
        %v2997 = vpop.f32.mrf.mxu0
        %v2998 = vadd.f32 %v2869, %v2997
        %v2999 = vpop.f32.mrf.mxu0
        %3000 = vmatprep.mubr.bf16.mxu0 0
        %3001 = vmatmul.mubr.bf16.gmra.mxu0 %v2167
        %v3002 = vpop.f32.mrf.mxu0
        %v3003 = vadd.f32 %v2874, %v3002
        %v3004 = vpop.f32.mrf.mxu0
        %v3005 = vadd.f32 %v2876, %v3004
        %v3006 = vpop.f32.mrf.mxu0
        %v3007 = vadd.f32 %v2878, %v3006
        %v3008 = vpop.f32.mrf.mxu0
        %v3009 = vadd.f32 %v2880, %v3008
        %3010 = vmatprep.mubr.bf16.mxu0 0
        %3011 = vmatmul.mubr.bf16.gmra.mxu0 %v2210
        %v3012 = vpop.f32.mrf.mxu0
        %v3013 = vadd.f32 %v2884, %v3012
        %v3014 = vpop.f32.mrf.mxu0
        %v3015 = vadd.f32 %v2886, %v3014
        %v3016 = vpop.f32.mrf.mxu0
        %v3017 = vadd.f32 %v2888, %v3016
        %v3018 = vpop.f32.mrf.mxu0
        %v3019 = vadd.f32 %v2890, %v3018
        %3020 = vmatprep.mubr.bf16.mxu0 0
        %3021 = vmatmul.mubr.bf16.gmra.mxu0 %v2253
        %v3022 = vpop.f32.mrf.mxu0
        %v3023 = vadd.f32 %v2894, %v3022
        %v3024 = vpop.f32.mrf.mxu0
        %v3025 = vadd.f32 %v2896, %v3024
        %v3026 = vpop.f32.mrf.mxu0
        %v3027 = vadd.f32 %v2898, %v3026
        %v3028 = vpop.f32.mrf.mxu0
        %v3029 = vadd.f32 %v2900, %v3028
        %3030 = vmatprep.mubr.bf16.mxu0 0
        %3031 = vmatmul.mubr.bf16.gmra.mxu0 %v2296
        %v3032 = vpop.f32.mrf.mxu0
        %v3033 = vadd.f32 %v2904, %v3032
        %v3034 = vpop.f32.mrf.mxu0
        %v3035 = vadd.f32 %v2906, %v3034
        %v3036 = vpop.f32.mrf.mxu0
        %v3037 = vadd.f32 %v2908, %v3036
        %v3038 = vpop.f32.mrf.mxu0
        %v3039 = vadd.f32 %v2910, %v3038
        %3040 = vmatprep.mubr.bf16.mxu0 0
        %3041 = vmatmul.mubr.bf16.gmra.mxu0 %v2339
        %v3042 = vpop.f32.mrf.mxu0
        %v3043 = vadd.f32 %v2914, %v3042
        %v3044 = vpop.f32.mrf.mxu0
        %v3045 = vadd.f32 %v2916, %v3044
        %v3046 = vpop.f32.mrf.mxu0
        %v3047 = vadd.f32 %v2918, %v3046
        %v3048 = vpop.f32.mrf.mxu0
        %v3049 = vadd.f32 %v2920, %v3048
        %3050 = vmatprep.mubr.bf16.mxu0 0
        %3051 = vmatmul.mubr.bf16.gmra.mxu0 %v2382
        %v3052 = vpop.f32.mrf.mxu0
        %v3053 = vadd.f32 %v2924, %v3052
        %v3054 = vpop.f32.mrf.mxu0
        %v3055 = vadd.f32 %v2926, %v3054
        %v3056 = vpop.f32.mrf.mxu0
        %v3057 = vadd.f32 %v2928, %v3056
        %v3058 = vpop.f32.mrf.mxu0
        %v3059 = vadd.f32 %v2930, %v3058
        %3060 = vmatprep.mubr.bf16.mxu0 0
        %3061 = vmatmul.mubr.bf16.gmra.mxu0 %v2425
        %v3062 = vpop.f32.mrf.mxu0
        %v3063 = vadd.f32 %v2934, %v3062
        %v3064 = vpop.f32.mrf.mxu0
        %v3065 = vadd.f32 %v2936, %v3064
        %v3066 = vpop.f32.mrf.mxu0
        %v3067 = vadd.f32 %v2938, %v3066
        %v3068 = vpop.f32.mrf.mxu0
        %v3069 = vadd.f32 %v2940, %v3068
        %3070 = vmatprep.mubr.bf16.mxu0 0
        %3071 = vmatmul.mubr.bf16.gmra.mxu0 %v2468
        %v3072 = vpop.f32.mrf.mxu0
        %v3073 = vadd.f32 %v2944, %v3072
        %v3074 = vpop.f32.mrf.mxu0
        %v3075 = vadd.f32 %v2946, %v3074
        %v3076 = vpop.f32.mrf.mxu0
        %v3077 = vadd.f32 %v2948, %v3076
        %v3078 = vpop.f32.mrf.mxu0
        %v3079 = vadd.f32 %v2950, %v3078
        %3080 = vmatprep.mubr.bf16.mxu0 0
        %3081 = vmatmul.mubr.bf16.gmra.mxu0 %v2511
        %v3082 = vpop.f32.mrf.mxu0
        %v3083 = vadd.f32 %v2954, %v3082
        %v3084 = vpop.f32.mrf.mxu0
        %v3085 = vpop.f32.mrf.mxu0
        %v3086 = vadd.f32 %v2957, %v3085
        %v3087 = vpop.f32.mrf.mxu0
        %3088 = vdwg.mxu0
        %v3089 = vadd.f32 %v1775, %v2995
        %v3090 = vadd.f32 %v1776, %v2998
        %v3091 = vadd.f32 %v1777, %v3003
        %v3092 = vadd.f32 %v1778, %v3005
        %v3093 = vadd.f32 %v1779, %v3007
        %v3094 = vadd.f32 %v1780, %v3009
        %v3095 = vadd.f32 %v1781, %v3013
        %v3096 = vadd.f32 %v1782, %v3015
        %v3097 = vadd.f32 %v1783, %v3017
        %v3098 = vadd.f32 %v1784, %v3019
        %v3099 = vadd.f32 %v1785, %v3023
        %v3100 = vadd.f32 %v1786, %v3025
        %v3101 = vadd.f32 %v1787, %v3027
        %v3102 = vadd.f32 %v1788, %v3029
        %v3103 = vadd.f32 %v1789, %v3033
        %v3104 = vadd.f32 %v1790, %v3035
        %v3105 = vadd.f32 %v1791, %v3037
        %v3106 = vadd.f32 %v1792, %v3039
        %v3107 = vadd.f32 %v1793, %v3043
        %v3108 = vadd.f32 %v1794, %v3045
        %v3109 = vadd.f32 %v1795, %v3047
        %v3110 = vadd.f32 %v1796, %v3049
        %v3111 = vadd.f32 %v1797, %v3053
        %v3112 = vadd.f32 %v1798, %v3055
        %v3113 = vadd.f32 %v1799, %v3057
        %v3114 = vadd.f32 %v1800, %v3059
        %v3115 = vadd.f32 %v1801, %v3063
        %v3116 = vadd.f32 %v1802, %v3065
        %v3117 = vadd.f32 %v1803, %v3067
        %v3118 = vadd.f32 %v1804, %v3069
        %v3119 = vadd.f32 %v1805, %v3073
        %v3120 = vadd.f32 %v1806, %v3075
        %v3121 = vadd.f32 %v1807, %v3077
        %v3122 = vadd.f32 %v1808, %v3079
        %v3123 = vadd.f32 %v1809, %v3083
        %v3124 = vadd.f32 %v1810, %v3086
        %s3125 = scalar_lea.vmem [#allocation2], 32
        %v3126 = vld [vmem:[%s3125] sm:$0x8]
        %v3127 = vld [vmem:[%s3125 + $0x4] sm:$0xf]
        %v3128 = vld [vmem:[%s3125 + $0x8] sm:$0xf]
        %v3129 = vld [vmem:[%s3125 + $0x10] sm:$0x8]
        %v3130 = vld [vmem:[%s3125 + $0x14] sm:$0xf]
        %v3131 = vld [vmem:[%s3125 + $0x18] sm:$0xf]
        %v3132 = vld [vmem:[%s3125 + $0x20] sm:$0x8]
        %v3133 = vld [vmem:[%s3125 + $0x24] sm:$0xf]
        %v3134 = vld [vmem:[%s3125 + $0x28] sm:$0xf]
        %v3135 = vld [vmem:[%s3125 + $0x30] sm:$0x8]
        %v3136 = vld [vmem:[%s3125 + $0x34] sm:$0xf]
        %v3137 = vld [vmem:[%s3125 + $0x38] sm:$0xf]
        %v3138 = vld [vmem:[%s3125 + $0x40] sm:$0x8]
        %v3139 = vld [vmem:[%s3125 + $0x44] sm:$0xf]
        %v3140 = vld [vmem:[%s3125 + $0x48] sm:$0xf]
        %v3141 = vld [vmem:[%s3125 + $0x50] sm:$0x8]
        %v3142 = vld [vmem:[%s3125 + $0x54] sm:$0xf]
        %v3143 = vld [vmem:[%s3125 + $0x58] sm:$0xf]
        %v3144 = vld [vmem:[%s3125 + $0x60] sm:$0x8]
        %v3145 = vld [vmem:[%s3125 + $0x64] sm:$0xf]
        %v3146 = vld [vmem:[%s3125 + $0x68] sm:$0xf]
        %v3147 = vld [vmem:[%s3125 + $0x70] sm:$0x8]
        %v3148 = vld [vmem:[%s3125 + $0x74] sm:$0xf]
        %v3149 = vld [vmem:[%s3125 + $0x78] sm:$0xf]
        %v3150 = vld [vmem:[%s3125 + $0x80] sm:$0x8]
        %v3151 = vld [vmem:[%s3125 + $0x84] sm:$0xf]
        %v3152 = vld [vmem:[%s3125 + $0x88] sm:$0xf]
        %v3153 = vld [vmem:[%s3125 + $0x90] sm:$0x8]
        %v3154 = vld [vmem:[%s3125 + $0x94] sm:$0xf]
        %v3155 = vld [vmem:[%s3125 + $0x98] sm:$0xf]
        %v3156 = vld [vmem:[%s3125 + $0xc] sm:$0x1]
        %v3157 = vld [vmem:[%s3125 + $0x1c] sm:$0x1]
        %v3158 = vld [vmem:[%s3125 + $0x2c] sm:$0x1]
        %v3159 = vld [vmem:[%s3125 + $0x3c] sm:$0x1]
        %v3160 = vld [vmem:[%s3125 + $0x4c] sm:$0x1]
        %v3161 = vld [vmem:[%s3125 + $0x5c] sm:$0x1]
        %v3162 = vld [vmem:[%s3125 + $0x6c] sm:$0x1]
        %v3163 = vld [vmem:[%s3125 + $0x7c] sm:$0x1]
        %v3164 = vld [vmem:[%s3125 + $0x8c] sm:$0x1]
        %v3165 = vld [vmem:[%s3125 + $0x9c] sm:$0x1]
        %v3196 = vunpack.c.l.b16 %v3126
        %v3197 = vunpack.c.l.b16 %v3127
        %v3198 = vunpack.c.l.b16 %v3128
        %v3199 = vunpack.c.l.b16 %v3129
        %v3200 = vunpack.c.l.b16 %v3130
        %v3201 = vunpack.c.l.b16 %v3131
        %v3202 = vunpack.c.l.b16 %v3132
        %v3203 = vunpack.c.l.b16 %v3133
        %v3204 = vunpack.c.l.b16 %v3134
        %v3205 = vunpack.c.l.b16 %v3135
        %v3206 = vunpack.c.l.b16 %v3136
        %v3207 = vunpack.c.l.b16 %v3137
        %v3208 = vunpack.c.l.b16 %v3138
        %v3209 = vunpack.c.l.b16 %v3139
        %v3210 = vunpack.c.l.b16 %v3140
        %v3211 = vunpack.c.l.b16 %v3141
        %v3212 = vunpack.c.l.b16 %v3142
        %v3213 = vunpack.c.l.b16 %v3143
        %v3214 = vunpack.c.l.b16 %v3144
        %v3215 = vunpack.c.l.b16 %v3145
        %v3216 = vunpack.c.l.b16 %v3146
        %v3217 = vunpack.c.l.b16 %v3147
        %v3218 = vunpack.c.l.b16 %v3148
        %v3219 = vunpack.c.l.b16 %v3149
        %v3220 = vunpack.c.l.b16 %v3150
        %v3221 = vunpack.c.l.b16 %v3151
        %v3222 = vunpack.c.l.b16 %v3152
        %v3223 = vunpack.c.l.b16 %v3153
        %v3224 = vunpack.c.l.b16 %v3154
        %v3225 = vunpack.c.l.b16 %v3155
        %v3226 = vpack.c.b16 %v3197, %v3196
        %v3227 = vpack.c.b16 %v3198, %v3198
        %v3228 = vpack.c.b16 %v3200, %v3199
        %v3229 = vpack.c.b16 %v3201, %v3201
        %v3230 = vpack.c.b16 %v3203, %v3202
        %v3231 = vpack.c.b16 %v3204, %v3204
        %v3232 = vpack.c.b16 %v3206, %v3205
        %v3233 = vpack.c.b16 %v3207, %v3207
        %v3234 = vpack.c.b16 %v3209, %v3208
        %v3235 = vpack.c.b16 %v3210, %v3210
        %v3236 = vpack.c.b16 %v3212, %v3211
        %v3237 = vpack.c.b16 %v3213, %v3213
        %v3238 = vpack.c.b16 %v3215, %v3214
        %v3239 = vpack.c.b16 %v3216, %v3216
        %v3240 = vpack.c.b16 %v3218, %v3217
        %v3241 = vpack.c.b16 %v3219, %v3219
        %v3242 = vpack.c.b16 %v3221, %v3220
        %v3243 = vpack.c.b16 %v3222, %v3222
        %v3244 = vpack.c.b16 %v3224, %v3223
        %v3245 = vpack.c.b16 %v3225, %v3225
        %v3246 = vpack.c.b16 %v3198, %v3197
        %v3247 = vpack.c.b16 %v3201, %v3200
        %v3248 = vpack.c.b16 %v3204, %v3203
        %v3249 = vpack.c.b16 %v3207, %v3206
        %v3250 = vpack.c.b16 %v3210, %v3209
        %v3251 = vpack.c.b16 %v3213, %v3212
        %v3252 = vpack.c.b16 %v3216, %v3215
        %v3253 = vpack.c.b16 %v3219, %v3218
        %v3254 = vpack.c.b16 %v3222, %v3221
        %v3255 = vpack.c.b16 %v3225, %v3224
        %v3257 = vshrl.u32 %v3246, 16
        %v3259 = vrot.slane %v3257, 4
        %v3260 = vshll.u32 %v3246, 16
        %v3262 = vrot.slane %v3260, 5
        %v3263 = vor.u32 %v3259, %v3262
        %v3265 = vshrl.u32 %v3247, 16
        %v3267 = vrot.slane %v3265, 4
        %v3268 = vshll.u32 %v3247, 16
        %v3270 = vrot.slane %v3268, 5
        %v3271 = vor.u32 %v3267, %v3270
        %v3273 = vshrl.u32 %v3248, 16
        %v3275 = vrot.slane %v3273, 4
        %v3276 = vshll.u32 %v3248, 16
        %v3278 = vrot.slane %v3276, 5
        %v3279 = vor.u32 %v3275, %v3278
        %v3281 = vshrl.u32 %v3249, 16
        %v3283 = vrot.slane %v3281, 4
        %v3284 = vshll.u32 %v3249, 16
        %v3286 = vrot.slane %v3284, 5
        %v3287 = vor.u32 %v3283, %v3286
        %v3289 = vshrl.u32 %v3250, 16
        %v3291 = vrot.slane %v3289, 4
        %v3292 = vshll.u32 %v3250, 16
        %v3294 = vrot.slane %v3292, 5
        %v3295 = vor.u32 %v3291, %v3294
        %v3297 = vshrl.u32 %v3251, 16
        %v3299 = vrot.slane %v3297, 4
        %v3300 = vshll.u32 %v3251, 16
        %v3302 = vrot.slane %v3300, 5
        %v3303 = vor.u32 %v3299, %v3302
        %v3305 = vshrl.u32 %v3252, 16
        %v3307 = vrot.slane %v3305, 4
        %v3308 = vshll.u32 %v3252, 16
        %v3310 = vrot.slane %v3308, 5
        %v3311 = vor.u32 %v3307, %v3310
        %v3313 = vshrl.u32 %v3253, 16
        %v3315 = vrot.slane %v3313, 4
        %v3316 = vshll.u32 %v3253, 16
        %v3318 = vrot.slane %v3316, 5
        %v3319 = vor.u32 %v3315, %v3318
        %v3321 = vshrl.u32 %v3254, 16
        %v3323 = vrot.slane %v3321, 4
        %v3324 = vshll.u32 %v3254, 16
        %v3326 = vrot.slane %v3324, 5
        %v3327 = vor.u32 %v3323, %v3326
        %v3329 = vshrl.u32 %v3255, 16
        %v3331 = vrot.slane %v3329, 4
        %v3332 = vshll.u32 %v3255, 16
        %v3334 = vrot.slane %v3332, 5
        %v3335 = vor.u32 %v3331, %v3334
        %v3346 = vunpack.c.l.b16 %v3156
        %v3347 = vunpack.c.l.b16 %v3157
        %v3348 = vunpack.c.l.b16 %v3158
        %v3349 = vunpack.c.l.b16 %v3159
        %v3350 = vunpack.c.l.b16 %v3160
        %v3351 = vunpack.c.l.b16 %v3161
        %v3352 = vunpack.c.l.b16 %v3162
        %v3353 = vunpack.c.l.b16 %v3163
        %v3354 = vunpack.c.l.b16 %v3164
        %v3355 = vunpack.c.l.b16 %v3165
        %v3356 = vpack.c.b16 %v3346, %v3346
        %v3357 = vpack.c.b16 %v3347, %v3347
        %v3358 = vpack.c.b16 %v3348, %v3348
        %v3359 = vpack.c.b16 %v3349, %v3349
        %v3360 = vpack.c.b16 %v3350, %v3350
        %v3361 = vpack.c.b16 %v3351, %v3351
        %v3362 = vpack.c.b16 %v3352, %v3352
        %v3363 = vpack.c.b16 %v3353, %v3353
        %v3364 = vpack.c.b16 %v3354, %v3354
        %v3365 = vpack.c.b16 %v3355, %v3355
        %v3366 = vrot.slane %v3246, 5
        %v3367 = vrot.slane %v3356, 5
        %v3368 = vsel %vm726, %v3366, %v3367
        %v3369 = vrot.slane %v3247, 5
        %v3370 = vrot.slane %v3357, 5
        %v3371 = vsel %vm726, %v3369, %v3370
        %v3372 = vrot.slane %v3248, 5
        %v3373 = vrot.slane %v3358, 5
        %v3374 = vsel %vm726, %v3372, %v3373
        %v3375 = vrot.slane %v3249, 5
        %v3376 = vrot.slane %v3359, 5
        %v3377 = vsel %vm726, %v3375, %v3376
        %v3378 = vrot.slane %v3250, 5
        %v3379 = vrot.slane %v3360, 5
        %v3380 = vsel %vm726, %v3378, %v3379
        %v3381 = vrot.slane %v3251, 5
        %v3382 = vrot.slane %v3361, 5
        %v3383 = vsel %vm726, %v3381, %v3382
        %v3384 = vrot.slane %v3252, 5
        %v3385 = vrot.slane %v3362, 5
        %v3386 = vsel %vm726, %v3384, %v3385
        %v3387 = vrot.slane %v3253, 5
        %v3388 = vrot.slane %v3363, 5
        %v3389 = vsel %vm726, %v3387, %v3388
        %v3390 = vrot.slane %v3254, 5
        %v3391 = vrot.slane %v3364, 5
        %v3392 = vsel %vm726, %v3390, %v3391
        %v3393 = vrot.slane %v3255, 5
        %v3394 = vrot.slane %v3365, 5
        %v3395 = vsel %vm726, %v3393, %v3394
        %v3397 = vshrl.u32 %v3226, 16
        %v3399 = vrot.slane %v3397, 3
        %v3400 = vshll.u32 %v3226, 16
        %v3402 = vrot.slane %v3400, 4
        %v3403 = vor.u32 %v3399, %v3402
        %v3405 = vshrl.u32 %v3227, 16
        %v3407 = vrot.slane %v3405, 3
        %v3408 = vshll.u32 %v3227, 16
        %v3410 = vrot.slane %v3408, 4
        %v3411 = vor.u32 %v3407, %v3410
        %v3412 = vsel %vm757, %v3403, %v3411
        %v3414 = vshrl.u32 %v3263, 16
        %v3416 = vrot.slane %v3414, 3
        %v3417 = vshll.u32 %v3263, 16
        %v3419 = vrot.slane %v3417, 4
        %v3420 = vor.u32 %v3416, %v3419
        %v3421 = vsel %vm757, %v3420, %v3420
        %v3423 = vshrl.u32 %v3366, 16
        %v3425 = vrot.slane %v3423, 3
        %v3426 = vshll.u32 %v3366, 16
        %v3428 = vrot.slane %v3426, 4
        %v3429 = vor.u32 %v3425, %v3428
        %v3431 = vshrl.u32 %v3368, 16
        %v3433 = vrot.slane %v3431, 3
        %v3434 = vshll.u32 %v3368, 16
        %v3436 = vrot.slane %v3434, 4
        %v3437 = vor.u32 %v3433, %v3436
        %v3438 = vsel %vm757, %v3429, %v3437
        %v3440 = vshrl.u32 %v3228, 16
        %v3442 = vrot.slane %v3440, 3
        %v3443 = vshll.u32 %v3228, 16
        %v3445 = vrot.slane %v3443, 4
        %v3446 = vor.u32 %v3442, %v3445
        %v3448 = vshrl.u32 %v3229, 16
        %v3450 = vrot.slane %v3448, 3
        %v3451 = vshll.u32 %v3229, 16
        %v3453 = vrot.slane %v3451, 4
        %v3454 = vor.u32 %v3450, %v3453
        %v3455 = vsel %vm757, %v3446, %v3454
        %v3457 = vshrl.u32 %v3271, 16
        %v3459 = vrot.slane %v3457, 3
        %v3460 = vshll.u32 %v3271, 16
        %v3462 = vrot.slane %v3460, 4
        %v3463 = vor.u32 %v3459, %v3462
        %v3464 = vsel %vm757, %v3463, %v3463
        %v3466 = vshrl.u32 %v3369, 16
        %v3468 = vrot.slane %v3466, 3
        %v3469 = vshll.u32 %v3369, 16
        %v3471 = vrot.slane %v3469, 4
        %v3472 = vor.u32 %v3468, %v3471
        %v3474 = vshrl.u32 %v3371, 16
        %v3476 = vrot.slane %v3474, 3
        %v3477 = vshll.u32 %v3371, 16
        %v3479 = vrot.slane %v3477, 4
        %v3480 = vor.u32 %v3476, %v3479
        %v3481 = vsel %vm757, %v3472, %v3480
        %v3483 = vshrl.u32 %v3230, 16
        %v3485 = vrot.slane %v3483, 3
        %v3486 = vshll.u32 %v3230, 16
        %v3488 = vrot.slane %v3486, 4
        %v3489 = vor.u32 %v3485, %v3488
        %v3491 = vshrl.u32 %v3231, 16
        %v3493 = vrot.slane %v3491, 3
        %v3494 = vshll.u32 %v3231, 16
        %v3496 = vrot.slane %v3494, 4
        %v3497 = vor.u32 %v3493, %v3496
        %v3498 = vsel %vm757, %v3489, %v3497
        %v3500 = vshrl.u32 %v3279, 16
        %v3502 = vrot.slane %v3500, 3
        %v3503 = vshll.u32 %v3279, 16
        %v3505 = vrot.slane %v3503, 4
        %v3506 = vor.u32 %v3502, %v3505
        %v3507 = vsel %vm757, %v3506, %v3506
        %v3509 = vshrl.u32 %v3372, 16
        %v3511 = vrot.slane %v3509, 3
        %v3512 = vshll.u32 %v3372, 16
        %v3514 = vrot.slane %v3512, 4
        %v3515 = vor.u32 %v3511, %v3514
        %v3517 = vshrl.u32 %v3374, 16
        %v3519 = vrot.slane %v3517, 3
        %v3520 = vshll.u32 %v3374, 16
        %v3522 = vrot.slane %v3520, 4
        %v3523 = vor.u32 %v3519, %v3522
        %v3524 = vsel %vm757, %v3515, %v3523
        %v3526 = vshrl.u32 %v3232, 16
        %v3528 = vrot.slane %v3526, 3
        %v3529 = vshll.u32 %v3232, 16
        %v3531 = vrot.slane %v3529, 4
        %v3532 = vor.u32 %v3528, %v3531
        %v3534 = vshrl.u32 %v3233, 16
        %v3536 = vrot.slane %v3534, 3
        %v3537 = vshll.u32 %v3233, 16
        %v3539 = vrot.slane %v3537, 4
        %v3540 = vor.u32 %v3536, %v3539
        %v3541 = vsel %vm757, %v3532, %v3540
        %v3543 = vshrl.u32 %v3287, 16
        %v3545 = vrot.slane %v3543, 3
        %v3546 = vshll.u32 %v3287, 16
        %v3548 = vrot.slane %v3546, 4
        %v3549 = vor.u32 %v3545, %v3548
        %v3550 = vsel %vm757, %v3549, %v3549
        %v3552 = vshrl.u32 %v3375, 16
        %v3554 = vrot.slane %v3552, 3
        %v3555 = vshll.u32 %v3375, 16
        %v3557 = vrot.slane %v3555, 4
        %v3558 = vor.u32 %v3554, %v3557
        %v3560 = vshrl.u32 %v3377, 16
        %v3562 = vrot.slane %v3560, 3
        %v3563 = vshll.u32 %v3377, 16
        %v3565 = vrot.slane %v3563, 4
        %v3566 = vor.u32 %v3562, %v3565
        %v3567 = vsel %vm757, %v3558, %v3566
        %v3569 = vshrl.u32 %v3234, 16
        %v3571 = vrot.slane %v3569, 3
        %v3572 = vshll.u32 %v3234, 16
        %v3574 = vrot.slane %v3572, 4
        %v3575 = vor.u32 %v3571, %v3574
        %v3577 = vshrl.u32 %v3235, 16
        %v3579 = vrot.slane %v3577, 3
        %v3580 = vshll.u32 %v3235, 16
        %v3582 = vrot.slane %v3580, 4
        %v3583 = vor.u32 %v3579, %v3582
        %v3584 = vsel %vm757, %v3575, %v3583
        %v3586 = vshrl.u32 %v3295, 16
        %v3588 = vrot.slane %v3586, 3
        %v3589 = vshll.u32 %v3295, 16
        %v3591 = vrot.slane %v3589, 4
        %v3592 = vor.u32 %v3588, %v3591
        %v3593 = vsel %vm757, %v3592, %v3592
        %v3595 = vshrl.u32 %v3378, 16
        %v3597 = vrot.slane %v3595, 3
        %v3598 = vshll.u32 %v3378, 16
        %v3600 = vrot.slane %v3598, 4
        %v3601 = vor.u32 %v3597, %v3600
        %v3603 = vshrl.u32 %v3380, 16
        %v3605 = vrot.slane %v3603, 3
        %v3606 = vshll.u32 %v3380, 16
        %v3608 = vrot.slane %v3606, 4
        %v3609 = vor.u32 %v3605, %v3608
        %v3610 = vsel %vm757, %v3601, %v3609
        %v3612 = vshrl.u32 %v3236, 16
        %v3614 = vrot.slane %v3612, 3
        %v3615 = vshll.u32 %v3236, 16
        %v3617 = vrot.slane %v3615, 4
        %v3618 = vor.u32 %v3614, %v3617
        %v3620 = vshrl.u32 %v3237, 16
        %v3622 = vrot.slane %v3620, 3
        %v3623 = vshll.u32 %v3237, 16
        %v3625 = vrot.slane %v3623, 4
        %v3626 = vor.u32 %v3622, %v3625
        %v3627 = vsel %vm757, %v3618, %v3626
        %v3629 = vshrl.u32 %v3303, 16
        %v3631 = vrot.slane %v3629, 3
        %v3632 = vshll.u32 %v3303, 16
        %v3634 = vrot.slane %v3632, 4
        %v3635 = vor.u32 %v3631, %v3634
        %v3636 = vsel %vm757, %v3635, %v3635
        %v3638 = vshrl.u32 %v3381, 16
        %v3640 = vrot.slane %v3638, 3
        %v3641 = vshll.u32 %v3381, 16
        %v3643 = vrot.slane %v3641, 4
        %v3644 = vor.u32 %v3640, %v3643
        %v3646 = vshrl.u32 %v3383, 16
        %v3648 = vrot.slane %v3646, 3
        %v3649 = vshll.u32 %v3383, 16
        %v3651 = vrot.slane %v3649, 4
        %v3652 = vor.u32 %v3648, %v3651
        %v3653 = vsel %vm757, %v3644, %v3652
        %v3655 = vshrl.u32 %v3238, 16
        %v3657 = vrot.slane %v3655, 3
        %v3658 = vshll.u32 %v3238, 16
        %v3660 = vrot.slane %v3658, 4
        %v3661 = vor.u32 %v3657, %v3660
        %v3663 = vshrl.u32 %v3239, 16
        %v3665 = vrot.slane %v3663, 3
        %v3666 = vshll.u32 %v3239, 16
        %v3668 = vrot.slane %v3666, 4
        %v3669 = vor.u32 %v3665, %v3668
        %v3670 = vsel %vm757, %v3661, %v3669
        %v3672 = vshrl.u32 %v3311, 16
        %v3674 = vrot.slane %v3672, 3
        %v3675 = vshll.u32 %v3311, 16
        %v3677 = vrot.slane %v3675, 4
        %v3678 = vor.u32 %v3674, %v3677
        %v3679 = vsel %vm757, %v3678, %v3678
        %v3681 = vshrl.u32 %v3384, 16
        %v3683 = vrot.slane %v3681, 3
        %v3684 = vshll.u32 %v3384, 16
        %v3686 = vrot.slane %v3684, 4
        %v3687 = vor.u32 %v3683, %v3686
        %v3689 = vshrl.u32 %v3386, 16
        %v3691 = vrot.slane %v3689, 3
        %v3692 = vshll.u32 %v3386, 16
        %v3694 = vrot.slane %v3692, 4
        %v3695 = vor.u32 %v3691, %v3694
        %v3696 = vsel %vm757, %v3687, %v3695
        %v3698 = vshrl.u32 %v3240, 16
        %v3700 = vrot.slane %v3698, 3
        %v3701 = vshll.u32 %v3240, 16
        %v3703 = vrot.slane %v3701, 4
        %v3704 = vor.u32 %v3700, %v3703
        %v3706 = vshrl.u32 %v3241, 16
        %v3708 = vrot.slane %v3706, 3
        %v3709 = vshll.u32 %v3241, 16
        %v3711 = vrot.slane %v3709, 4
        %v3712 = vor.u32 %v3708, %v3711
        %v3713 = vsel %vm757, %v3704, %v3712
        %v3715 = vshrl.u32 %v3319, 16
        %v3717 = vrot.slane %v3715, 3
        %v3718 = vshll.u32 %v3319, 16
        %v3720 = vrot.slane %v3718, 4
        %v3721 = vor.u32 %v3717, %v3720
        %v3722 = vsel %vm757, %v3721, %v3721
        %v3724 = vshrl.u32 %v3387, 16
        %v3726 = vrot.slane %v3724, 3
        %v3727 = vshll.u32 %v3387, 16
        %v3729 = vrot.slane %v3727, 4
        %v3730 = vor.u32 %v3726, %v3729
        %v3732 = vshrl.u32 %v3389, 16
        %v3734 = vrot.slane %v3732, 3
        %v3735 = vshll.u32 %v3389, 16
        %v3737 = vrot.slane %v3735, 4
        %v3738 = vor.u32 %v3734, %v3737
        %v3739 = vsel %vm757, %v3730, %v3738
        %v3741 = vshrl.u32 %v3242, 16
        %v3743 = vrot.slane %v3741, 3
        %v3744 = vshll.u32 %v3242, 16
        %v3746 = vrot.slane %v3744, 4
        %v3747 = vor.u32 %v3743, %v3746
        %v3749 = vshrl.u32 %v3243, 16
        %v3751 = vrot.slane %v3749, 3
        %v3752 = vshll.u32 %v3243, 16
        %v3754 = vrot.slane %v3752, 4
        %v3755 = vor.u32 %v3751, %v3754
        %v3756 = vsel %vm757, %v3747, %v3755
        %v3758 = vshrl.u32 %v3327, 16
        %v3760 = vrot.slane %v3758, 3
        %v3761 = vshll.u32 %v3327, 16
        %v3763 = vrot.slane %v3761, 4
        %v3764 = vor.u32 %v3760, %v3763
        %v3765 = vsel %vm757, %v3764, %v3764
        %v3767 = vshrl.u32 %v3390, 16
        %v3769 = vrot.slane %v3767, 3
        %v3770 = vshll.u32 %v3390, 16
        %v3772 = vrot.slane %v3770, 4
        %v3773 = vor.u32 %v3769, %v3772
        %v3775 = vshrl.u32 %v3392, 16
        %v3777 = vrot.slane %v3775, 3
        %v3778 = vshll.u32 %v3392, 16
        %v3780 = vrot.slane %v3778, 4
        %v3781 = vor.u32 %v3777, %v3780
        %v3782 = vsel %vm757, %v3773, %v3781
        %v3784 = vshrl.u32 %v3244, 16
        %v3786 = vrot.slane %v3784, 3
        %v3787 = vshll.u32 %v3244, 16
        %v3789 = vrot.slane %v3787, 4
        %v3790 = vor.u32 %v3786, %v3789
        %v3792 = vshrl.u32 %v3245, 16
        %v3794 = vrot.slane %v3792, 3
        %v3795 = vshll.u32 %v3245, 16
        %v3797 = vrot.slane %v3795, 4
        %v3798 = vor.u32 %v3794, %v3797
        %v3799 = vsel %vm757, %v3790, %v3798
        %v3801 = vshrl.u32 %v3335, 16
        %v3803 = vrot.slane %v3801, 3
        %v3804 = vshll.u32 %v3335, 16
        %v3806 = vrot.slane %v3804, 4
        %v3807 = vor.u32 %v3803, %v3806
        %v3808 = vsel %vm757, %v3807, %v3807
        %v3810 = vshrl.u32 %v3393, 16
        %v3812 = vrot.slane %v3810, 3
        %v3813 = vshll.u32 %v3393, 16
        %v3815 = vrot.slane %v3813, 4
        %v3816 = vor.u32 %v3812, %v3815
        %v3818 = vshrl.u32 %v3395, 16
        %v3820 = vrot.slane %v3818, 3
        %v3821 = vshll.u32 %v3395, 16
        %v3823 = vrot.slane %v3821, 4
        %v3824 = vor.u32 %v3820, %v3823
        %v3825 = vsel %vm757, %v3816, %v3824
        %s3856 = scalar_lea.vmem [#allocation9], 768
        %v3857 = vld [vmem:[%s3856] sm:$0xff]
        %v3858 = vld [vmem:[%s3856 + $0x8] sm:$0xff]
        %v3859 = vld [vmem:[%s3856 + $0x10] sm:$0xff]
        %v3860 = vld [vmem:[%s3856 + $0x18] sm:$0xff]
        %v3861 = vld [vmem:[%s3856 + $0x20] sm:$0xff]
        %v3862 = vld [vmem:[%s3856 + $0x28] sm:$0xff]
        %v3863 = vld [vmem:[%s3856 + $0x30] sm:$0xff]
        %v3864 = vld [vmem:[%s3856 + $0x38] sm:$0xff]
        %v3865 = vld [vmem:[%s3856 + $0x40] sm:$0xff]
        %v3866 = vld [vmem:[%s3856 + $0x48] sm:$0xff]
        %v3867 = vld [vmem:[%s3856 + $0x50] sm:$0xff]
        %v3868 = vld [vmem:[%s3856 + $0x58] sm:$0xff]
        %v3869 = vld [vmem:[%s3856 + $0x60] sm:$0xff]
        %v3870 = vld [vmem:[%s3856 + $0x68] sm:$0xff]
        %v3871 = vld [vmem:[%s3856 + $0x70] sm:$0xff]
        %v3872 = vld [vmem:[%s3856 + $0x78] sm:$0xff]
        %v3873 = vld [vmem:[%s3856 + $0x80] sm:$0xff]
        %v3874 = vld [vmem:[%s3856 + $0x88] sm:$0xff]
        %v3875 = vld [vmem:[%s3856 + $0x90] sm:$0xff]
        %v3876 = vld [vmem:[%s3856 + $0x98] sm:$0xff]
        %v3877 = vld [vmem:[%s3856 + $0xa0] sm:$0xff]
        %v3878 = vld [vmem:[%s3856 + $0xa8] sm:$0xff]
        %v3879 = vld [vmem:[%s3856 + $0xb0] sm:$0xff]
        %v3880 = vld [vmem:[%s3856 + $0xb8] sm:$0xff]
        %v3881 = vld [vmem:[%s3856 + $0xc0] sm:$0xff]
        %v3882 = vld [vmem:[%s3856 + $0xc8] sm:$0xff]
        %v3883 = vld [vmem:[%s3856 + $0xd0] sm:$0xff]
        %v3884 = vld [vmem:[%s3856 + $0xd8] sm:$0xff]
        %v3885 = vld [vmem:[%s3856 + $0xe0] sm:$0xff]
        %v3886 = vld [vmem:[%s3856 + $0xe8] sm:$0xff]
        %v3887 = vld [vmem:[%s3856 + $0xf0] sm:$0xff]
        %v3888 = vld [vmem:[%s3856 + $0xf8] sm:$0xff]
        %v3889 = vld [vmem:[%s3856 + $0x100] sm:$0xff]
        %v3890 = vld [vmem:[%s3856 + $0x108] sm:$0xff]
        %v3891 = vld [vmem:[%s3856 + $0x110] sm:$0xff]
        %v3892 = vld [vmem:[%s3856 + $0x118] sm:$0xff]
        %v3893 = vld [vmem:[%s3856 + $0x120] sm:$0xff]
        %v3894 = vld [vmem:[%s3856 + $0x128] sm:$0xff]
        %v3895 = vld [vmem:[%s3856 + $0x130] sm:$0xff]
        %v3896 = vld [vmem:[%s3856 + $0x138] sm:$0xff]
        %v3897 = vld [vmem:[%s3856 + $0x140] sm:$0xff]
        %v3898 = vld [vmem:[%s3856 + $0x148] sm:$0xff]
        %v3899 = vld [vmem:[%s3856 + $0x150] sm:$0xff]
        %v3900 = vld [vmem:[%s3856 + $0x158] sm:$0xff]
        %v3901 = vld [vmem:[%s3856 + $0x160] sm:$0xff]
        %v3902 = vld [vmem:[%s3856 + $0x168] sm:$0xff]
        %v3903 = vld [vmem:[%s3856 + $0x170] sm:$0xff]
        %v3904 = vld [vmem:[%s3856 + $0x178] sm:$0xff]
        %v3953 = vunpack.c.l.b16 %v3857
        %v3954 = vunpack.c.h.b16 %v3857
        %v3955 = vunpack.c.l.b16 %v3858
        %v3956 = vunpack.c.h.b16 %v3858
        %v3957 = vunpack.c.l.b16 %v3859
        %v3958 = vunpack.c.h.b16 %v3859
        %v3959 = vunpack.c.l.b16 %v3860
        %v3960 = vunpack.c.h.b16 %v3860
        %v3961 = vunpack.c.l.b16 %v3861
        %v3962 = vunpack.c.h.b16 %v3861
        %v3963 = vunpack.c.l.b16 %v3862
        %v3964 = vunpack.c.h.b16 %v3862
        %v3965 = vunpack.c.l.b16 %v3863
        %v3966 = vunpack.c.h.b16 %v3863
        %v3967 = vunpack.c.l.b16 %v3864
        %v3968 = vunpack.c.h.b16 %v3864
        %v3969 = vunpack.c.l.b16 %v3865
        %v3970 = vunpack.c.h.b16 %v3865
        %v3971 = vunpack.c.l.b16 %v3866
        %v3972 = vunpack.c.h.b16 %v3866
        %v3973 = vunpack.c.l.b16 %v3867
        %v3974 = vunpack.c.h.b16 %v3867
        %v3975 = vunpack.c.l.b16 %v3868
        %v3976 = vunpack.c.h.b16 %v3868
        %v3977 = vunpack.c.l.b16 %v3869
        %v3978 = vunpack.c.h.b16 %v3869
        %v3979 = vunpack.c.l.b16 %v3870
        %v3980 = vunpack.c.h.b16 %v3870
        %v3981 = vunpack.c.l.b16 %v3871
        %v3982 = vunpack.c.h.b16 %v3871
        %v3983 = vunpack.c.l.b16 %v3872
        %v3984 = vunpack.c.h.b16 %v3872
        %v3985 = vunpack.c.l.b16 %v3873
        %v3986 = vunpack.c.h.b16 %v3873
        %v3987 = vunpack.c.l.b16 %v3874
        %v3988 = vunpack.c.h.b16 %v3874
        %v3989 = vunpack.c.l.b16 %v3875
        %v3990 = vunpack.c.h.b16 %v3875
        %v3991 = vunpack.c.l.b16 %v3876
        %v3992 = vunpack.c.h.b16 %v3876
        %v3993 = vunpack.c.l.b16 %v3877
        %v3994 = vunpack.c.h.b16 %v3877
        %v3995 = vunpack.c.l.b16 %v3878
        %v3996 = vunpack.c.h.b16 %v3878
        %v3997 = vunpack.c.l.b16 %v3879
        %v3998 = vunpack.c.h.b16 %v3879
        %v3999 = vunpack.c.l.b16 %v3880
        %v4000 = vunpack.c.h.b16 %v3880
        %v4001 = vunpack.c.l.b16 %v3881
        %v4002 = vunpack.c.h.b16 %v3881
        %v4003 = vunpack.c.l.b16 %v3882
        %v4004 = vunpack.c.h.b16 %v3882
        %v4005 = vunpack.c.l.b16 %v3883
        %v4006 = vunpack.c.h.b16 %v3883
        %v4007 = vunpack.c.l.b16 %v3884
        %v4008 = vunpack.c.h.b16 %v3884
        %v4009 = vunpack.c.l.b16 %v3885
        %v4010 = vunpack.c.h.b16 %v3885
        %v4011 = vunpack.c.l.b16 %v3886
        %v4012 = vunpack.c.h.b16 %v3886
        %v4013 = vunpack.c.l.b16 %v3887
        %v4014 = vunpack.c.h.b16 %v3887
        %v4015 = vunpack.c.l.b16 %v3888
        %v4016 = vunpack.c.h.b16 %v3888
        %v4017 = vunpack.c.l.b16 %v3889
        %v4018 = vunpack.c.h.b16 %v3889
        %v4019 = vunpack.c.l.b16 %v3890
        %v4020 = vunpack.c.h.b16 %v3890
        %v4021 = vunpack.c.l.b16 %v3891
        %v4022 = vunpack.c.h.b16 %v3891
        %v4023 = vunpack.c.l.b16 %v3892
        %v4024 = vunpack.c.h.b16 %v3892
        %v4025 = vunpack.c.l.b16 %v3893
        %v4026 = vunpack.c.h.b16 %v3893
        %v4027 = vunpack.c.l.b16 %v3894
        %v4028 = vunpack.c.h.b16 %v3894
        %v4029 = vunpack.c.l.b16 %v3895
        %v4030 = vunpack.c.h.b16 %v3895
        %v4031 = vunpack.c.l.b16 %v3896
        %v4032 = vunpack.c.h.b16 %v3896
        %v4033 = vunpack.c.l.b16 %v3897
        %v4034 = vunpack.c.h.b16 %v3897
        %v4035 = vunpack.c.l.b16 %v3898
        %v4036 = vunpack.c.h.b16 %v3898
        %v4037 = vunpack.c.l.b16 %v3899
        %v4038 = vunpack.c.h.b16 %v3899
        %v4039 = vunpack.c.l.b16 %v3900
        %v4040 = vunpack.c.h.b16 %v3900
        %v4041 = vunpack.c.l.b16 %v3901
        %v4042 = vunpack.c.h.b16 %v3901
        %v4043 = vunpack.c.l.b16 %v3902
        %v4044 = vunpack.c.h.b16 %v3902
        %v4045 = vunpack.c.l.b16 %v3903
        %v4046 = vunpack.c.h.b16 %v3903
        %v4047 = vunpack.c.l.b16 %v3904
        %v4048 = vunpack.c.h.b16 %v3904
        %v4049 = vpack.c.b16 %v3955, %v3953
        %v4050 = vpack.c.b16 %v3956, %v3954
        %v4051 = vpack.c.b16 %v3959, %v3957
        %v4052 = vpack.c.b16 %v3960, %v3958
        %v4053 = vpack.c.b16 %v3963, %v3961
        %v4054 = vpack.c.b16 %v3964, %v3962
        %v4055 = vpack.c.b16 %v3967, %v3965
        %v4056 = vpack.c.b16 %v3968, %v3966
        %v4057 = vpack.c.b16 %v3971, %v3969
        %v4058 = vpack.c.b16 %v3972, %v3970
        %v4059 = vpack.c.b16 %v3975, %v3973
        %v4060 = vpack.c.b16 %v3976, %v3974
        %v4061 = vpack.c.b16 %v3979, %v3977
        %v4062 = vpack.c.b16 %v3980, %v3978
        %v4063 = vpack.c.b16 %v3983, %v3981
        %v4064 = vpack.c.b16 %v3984, %v3982
        %v4065 = vpack.c.b16 %v3987, %v3985
        %v4066 = vpack.c.b16 %v3988, %v3986
        %v4067 = vpack.c.b16 %v3991, %v3989
        %v4068 = vpack.c.b16 %v3992, %v3990
        %v4069 = vpack.c.b16 %v3995, %v3993
        %v4070 = vpack.c.b16 %v3996, %v3994
        %v4071 = vpack.c.b16 %v3999, %v3997
        %v4072 = vpack.c.b16 %v4000, %v3998
        %v4073 = vpack.c.b16 %v4003, %v4001
        %v4074 = vpack.c.b16 %v4004, %v4002
        %v4075 = vpack.c.b16 %v4007, %v4005
        %v4076 = vpack.c.b16 %v4008, %v4006
        %v4077 = vpack.c.b16 %v4011, %v4009
        %v4078 = vpack.c.b16 %v4012, %v4010
        %v4079 = vpack.c.b16 %v4015, %v4013
        %v4080 = vpack.c.b16 %v4016, %v4014
        %v4081 = vpack.c.b16 %v4019, %v4017
        %v4082 = vpack.c.b16 %v4020, %v4018
        %v4083 = vpack.c.b16 %v4023, %v4021
        %v4084 = vpack.c.b16 %v4024, %v4022
        %v4085 = vpack.c.b16 %v4027, %v4025
        %v4086 = vpack.c.b16 %v4028, %v4026
        %v4087 = vpack.c.b16 %v4031, %v4029
        %v4088 = vpack.c.b16 %v4032, %v4030
        %v4089 = vpack.c.b16 %v4035, %v4033
        %v4090 = vpack.c.b16 %v4036, %v4034
        %v4091 = vpack.c.b16 %v4039, %v4037
        %v4092 = vpack.c.b16 %v4040, %v4038
        %v4093 = vpack.c.b16 %v4043, %v4041
        %v4094 = vpack.c.b16 %v4044, %v4042
        %v4095 = vpack.c.b16 %v4047, %v4045
        %v4096 = vpack.c.b16 %v4048, %v4046
        %4145 = vmatprep.subr.bf16.mxu0 %v4064
        %4146 = vmatpush1.bf16.msra.mxu0 %v4063
        %4147 = vmatprep.subr.bf16.mxu0 %v4062
        %4148 = vmatpush1.bf16.msra.mxu0 %v4061
        %4149 = vmatprep.subr.bf16.mxu0 %v4060
        %4150 = vmatpush1.bf16.msra.mxu0 %v4059
        %4151 = vmatprep.subr.bf16.mxu0 %v4058
        %4152 = vmatpush1.bf16.msra.mxu0 %v4057
        %4153 = vmatprep.subr.bf16.mxu0 %v4056
        %4154 = vmatpush1.bf16.msra.mxu0 %v4055
        %4155 = vmatprep.subr.bf16.mxu0 %v4054
        %4156 = vmatpush1.bf16.msra.mxu0 %v4053
        %4157 = vmatprep.subr.bf16.mxu0 %v4052
        %4158 = vmatpush1.bf16.msra.mxu0 %v4051
        %4159 = vmatprep.subr.bf16.mxu0 %v4050
        %4160 = vmatpush1.bf16.msra.mxu0 %v4049
        %4161 = vmatprep.subr.bf16.mxu0 %v4080
        %4162 = vmatpush2.bf16.msra.mxu0 %v4079
        %4163 = vmatprep.subr.bf16.mxu0 %v4078
        %4164 = vmatpush2.bf16.msra.mxu0 %v4077
        %4165 = vmatprep.subr.bf16.mxu0 %v4076
        %4166 = vmatpush2.bf16.msra.mxu0 %v4075
        %4167 = vmatprep.subr.bf16.mxu0 %v4074
        %4168 = vmatpush2.bf16.msra.mxu0 %v4073
        %4169 = vmatprep.subr.bf16.mxu0 %v4072
        %4170 = vmatpush2.bf16.msra.mxu0 %v4071
        %4171 = vmatprep.subr.bf16.mxu0 %v4070
        %4172 = vmatpush2.bf16.msra.mxu0 %v4069
        %4173 = vmatprep.subr.bf16.mxu0 %v4068
        %4174 = vmatpush2.bf16.msra.mxu0 %v4067
        %4175 = vmatprep.subr.bf16.mxu0 %v4066
        %4176 = vmatpush2.bf16.msra.mxu0 %v4065
        %4177 = vmatprep.mubr.bf16.mxu0 %v3421
        %4178 = vmatmul.mubr.bf16.gmra.mxu0 %v3412
        %v4179 = vpop.f32.mrf.mxu0
        %v4180 = vadd.f32 0.0, %v4179
        %v4181 = vpop.f32.mrf.mxu0
        %v4182 = vpop.f32.mrf.mxu0
        %v4183 = vadd.f32 0.0, %v4182
        %v4184 = vpop.f32.mrf.mxu0
        %4185 = vmatprep.mubr.bf16.mxu0 %v3464
        %4186 = vmatmul.mubr.bf16.gmra.mxu0 %v3455
        %v4187 = vpop.f32.mrf.mxu0
        %v4188 = vadd.f32 0.0, %v4187
        %v4189 = vpop.f32.mrf.mxu0
        %v4190 = vadd.f32 0.0, %v4189
        %v4191 = vpop.f32.mrf.mxu0
        %v4192 = vadd.f32 0.0, %v4191
        %v4193 = vpop.f32.mrf.mxu0
        %v4194 = vadd.f32 0.0, %v4193
        %4195 = vmatprep.mubr.bf16.mxu0 %v3507
        %4196 = vmatmul.mubr.bf16.gmra.mxu0 %v3498
        %v4197 = vpop.f32.mrf.mxu0
        %v4198 = vadd.f32 0.0, %v4197
        %v4199 = vpop.f32.mrf.mxu0
        %v4200 = vadd.f32 0.0, %v4199
        %v4201 = vpop.f32.mrf.mxu0
        %v4202 = vadd.f32 0.0, %v4201
        %v4203 = vpop.f32.mrf.mxu0
        %v4204 = vadd.f32 0.0, %v4203
        %4205 = vmatprep.mubr.bf16.mxu0 %v3550
        %4206 = vmatmul.mubr.bf16.gmra.mxu0 %v3541
        %v4207 = vpop.f32.mrf.mxu0
        %v4208 = vadd.f32 0.0, %v4207
        %v4209 = vpop.f32.mrf.mxu0
        %v4210 = vadd.f32 0.0, %v4209
        %v4211 = vpop.f32.mrf.mxu0
        %v4212 = vadd.f32 0.0, %v4211
        %v4213 = vpop.f32.mrf.mxu0
        %v4214 = vadd.f32 0.0, %v4213
        %4215 = vmatprep.mubr.bf16.mxu0 %v3593
        %4216 = vmatmul.mubr.bf16.gmra.mxu0 %v3584
        %v4217 = vpop.f32.mrf.mxu0
        %v4218 = vadd.f32 0.0, %v4217
        %v4219 = vpop.f32.mrf.mxu0
        %v4220 = vadd.f32 0.0, %v4219
        %v4221 = vpop.f32.mrf.mxu0
        %v4222 = vadd.f32 0.0, %v4221
        %v4223 = vpop.f32.mrf.mxu0
        %v4224 = vadd.f32 0.0, %v4223
        %4225 = vmatprep.mubr.bf16.mxu0 %v3636
        %4226 = vmatmul.mubr.bf16.gmra.mxu0 %v3627
        %v4227 = vpop.f32.mrf.mxu0
        %v4228 = vadd.f32 0.0, %v4227
        %v4229 = vpop.f32.mrf.mxu0
        %v4230 = vadd.f32 0.0, %v4229
        %v4231 = vpop.f32.mrf.mxu0
        %v4232 = vadd.f32 0.0, %v4231
        %v4233 = vpop.f32.mrf.mxu0
        %v4234 = vadd.f32 0.0, %v4233
        %4235 = vmatprep.mubr.bf16.mxu0 %v3679
        %4236 = vmatmul.mubr.bf16.gmra.mxu0 %v3670
        %v4237 = vpop.f32.mrf.mxu0
        %v4238 = vadd.f32 0.0, %v4237
        %v4239 = vpop.f32.mrf.mxu0
        %v4240 = vadd.f32 0.0, %v4239
        %v4241 = vpop.f32.mrf.mxu0
        %v4242 = vadd.f32 0.0, %v4241
        %v4243 = vpop.f32.mrf.mxu0
        %v4244 = vadd.f32 0.0, %v4243
        %4245 = vmatprep.mubr.bf16.mxu0 %v3722
        %4246 = vmatmul.mubr.bf16.gmra.mxu0 %v3713
        %v4247 = vpop.f32.mrf.mxu0
        %v4248 = vadd.f32 0.0, %v4247
        %v4249 = vpop.f32.mrf.mxu0
        %v4250 = vadd.f32 0.0, %v4249
        %v4251 = vpop.f32.mrf.mxu0
        %v4252 = vadd.f32 0.0, %v4251
        %v4253 = vpop.f32.mrf.mxu0
        %v4254 = vadd.f32 0.0, %v4253
        %4255 = vmatprep.mubr.bf16.mxu0 %v3765
        %4256 = vmatmul.mubr.bf16.gmra.mxu0 %v3756
        %v4257 = vpop.f32.mrf.mxu0
        %v4258 = vadd.f32 0.0, %v4257
        %v4259 = vpop.f32.mrf.mxu0
        %v4260 = vadd.f32 0.0, %v4259
        %v4261 = vpop.f32.mrf.mxu0
        %v4262 = vadd.f32 0.0, %v4261
        %v4263 = vpop.f32.mrf.mxu0
        %v4264 = vadd.f32 0.0, %v4263
        %4265 = vmatprep.mubr.bf16.mxu0 %v3808
        %4266 = vmatmul.mubr.bf16.gmra.mxu0 %v3799
        %v4267 = vpop.f32.mrf.mxu0
        %v4268 = vadd.f32 0.0, %v4267
        %v4269 = vpop.f32.mrf.mxu0
        %v4270 = vpop.f32.mrf.mxu0
        %v4271 = vadd.f32 0.0, %v4270
        %v4272 = vpop.f32.mrf.mxu0
        %4273 = vdwg.mxu0
        %4274 = vmatprep.subr.bf16.mxu0 %v4096
        %4275 = vmatpush1.bf16.msra.mxu0 %v4095
        %4276 = vmatprep.subr.bf16.mxu0 %v4094
        %4277 = vmatpush1.bf16.msra.mxu0 %v4093
        %4278 = vmatprep.subr.bf16.mxu0 %v4092
        %4279 = vmatpush1.bf16.msra.mxu0 %v4091
        %4280 = vmatprep.subr.bf16.mxu0 %v4090
        %4281 = vmatpush1.bf16.msra.mxu0 %v4089
        %4282 = vmatprep.subr.bf16.mxu0 %v4088
        %4283 = vmatpush1.bf16.msra.mxu0 %v4087
        %4284 = vmatprep.subr.bf16.mxu0 %v4086
        %4285 = vmatpush1.bf16.msra.mxu0 %v4085
        %4286 = vmatprep.subr.bf16.mxu0 %v4084
        %4287 = vmatpush1.bf16.msra.mxu0 %v4083
        %4288 = vmatprep.subr.bf16.mxu0 %v4082
        %4289 = vmatpush1.bf16.msra.mxu0 %v4081
        %4290 = vmatprep.subr.bf16.mxu0 0
        %4291 = vmatpush2.bf16.msra.mxu0 0
        %4292 = vmatprep.subr.bf16.mxu0 0
        %4293 = vmatpush2.bf16.msra.mxu0 0
        %4294 = vmatprep.subr.bf16.mxu0 0
        %4295 = vmatpush2.bf16.msra.mxu0 0
        %4296 = vmatprep.subr.bf16.mxu0 0
        %4297 = vmatpush2.bf16.msra.mxu0 0
        %4298 = vmatprep.subr.bf16.mxu0 0
        %4299 = vmatpush2.bf16.msra.mxu0 0
        %4300 = vmatprep.subr.bf16.mxu0 0
        %4301 = vmatpush2.bf16.msra.mxu0 0
        %4302 = vmatprep.subr.bf16.mxu0 0
        %4303 = vmatpush2.bf16.msra.mxu0 0
        %4304 = vmatprep.subr.bf16.mxu0 0
        %4305 = vmatpush2.bf16.msra.mxu0 0
        %4306 = vmatprep.mubr.bf16.mxu0 0
        %4307 = vmatmul.mubr.bf16.gmra.mxu0 %v3438
        %v4308 = vpop.f32.mrf.mxu0
        %v4309 = vadd.f32 %v4180, %v4308
        %v4310 = vpop.f32.mrf.mxu0
        %v4311 = vpop.f32.mrf.mxu0
        %v4312 = vadd.f32 %v4183, %v4311
        %v4313 = vpop.f32.mrf.mxu0
        %4314 = vmatprep.mubr.bf16.mxu0 0
        %4315 = vmatmul.mubr.bf16.gmra.mxu0 %v3481
        %v4316 = vpop.f32.mrf.mxu0
        %v4317 = vadd.f32 %v4188, %v4316
        %v4318 = vpop.f32.mrf.mxu0
        %v4319 = vadd.f32 %v4190, %v4318
        %v4320 = vpop.f32.mrf.mxu0
        %v4321 = vadd.f32 %v4192, %v4320
        %v4322 = vpop.f32.mrf.mxu0
        %v4323 = vadd.f32 %v4194, %v4322
        %4324 = vmatprep.mubr.bf16.mxu0 0
        %4325 = vmatmul.mubr.bf16.gmra.mxu0 %v3524
        %v4326 = vpop.f32.mrf.mxu0
        %v4327 = vadd.f32 %v4198, %v4326
        %v4328 = vpop.f32.mrf.mxu0
        %v4329 = vadd.f32 %v4200, %v4328
        %v4330 = vpop.f32.mrf.mxu0
        %v4331 = vadd.f32 %v4202, %v4330
        %v4332 = vpop.f32.mrf.mxu0
        %v4333 = vadd.f32 %v4204, %v4332
        %4334 = vmatprep.mubr.bf16.mxu0 0
        %4335 = vmatmul.mubr.bf16.gmra.mxu0 %v3567
        %v4336 = vpop.f32.mrf.mxu0
        %v4337 = vadd.f32 %v4208, %v4336
        %v4338 = vpop.f32.mrf.mxu0
        %v4339 = vadd.f32 %v4210, %v4338
        %v4340 = vpop.f32.mrf.mxu0
        %v4341 = vadd.f32 %v4212, %v4340
        %v4342 = vpop.f32.mrf.mxu0
        %v4343 = vadd.f32 %v4214, %v4342
        %4344 = vmatprep.mubr.bf16.mxu0 0
        %4345 = vmatmul.mubr.bf16.gmra.mxu0 %v3610
        %v4346 = vpop.f32.mrf.mxu0
        %v4347 = vadd.f32 %v4218, %v4346
        %v4348 = vpop.f32.mrf.mxu0
        %v4349 = vadd.f32 %v4220, %v4348
        %v4350 = vpop.f32.mrf.mxu0
        %v4351 = vadd.f32 %v4222, %v4350
        %v4352 = vpop.f32.mrf.mxu0
        %v4353 = vadd.f32 %v4224, %v4352
        %4354 = vmatprep.mubr.bf16.mxu0 0
        %4355 = vmatmul.mubr.bf16.gmra.mxu0 %v3653
        %v4356 = vpop.f32.mrf.mxu0
        %v4357 = vadd.f32 %v4228, %v4356
        %v4358 = vpop.f32.mrf.mxu0
        %v4359 = vadd.f32 %v4230, %v4358
        %v4360 = vpop.f32.mrf.mxu0
        %v4361 = vadd.f32 %v4232, %v4360
        %v4362 = vpop.f32.mrf.mxu0
        %v4363 = vadd.f32 %v4234, %v4362
        %4364 = vmatprep.mubr.bf16.mxu0 0
        %4365 = vmatmul.mubr.bf16.gmra.mxu0 %v3696
        %v4366 = vpop.f32.mrf.mxu0
        %v4367 = vadd.f32 %v4238, %v4366
        %v4368 = vpop.f32.mrf.mxu0
        %v4369 = vadd.f32 %v4240, %v4368
        %v4370 = vpop.f32.mrf.mxu0
        %v4371 = vadd.f32 %v4242, %v4370
        %v4372 = vpop.f32.mrf.mxu0
        %v4373 = vadd.f32 %v4244, %v4372
        %4374 = vmatprep.mubr.bf16.mxu0 0
        %4375 = vmatmul.mubr.bf16.gmra.mxu0 %v3739
        %v4376 = vpop.f32.mrf.mxu0
        %v4377 = vadd.f32 %v4248, %v4376
        %v4378 = vpop.f32.mrf.mxu0
        %v4379 = vadd.f32 %v4250, %v4378
        %v4380 = vpop.f32.mrf.mxu0
        %v4381 = vadd.f32 %v4252, %v4380
        %v4382 = vpop.f32.mrf.mxu0
        %v4383 = vadd.f32 %v4254, %v4382
        %4384 = vmatprep.mubr.bf16.mxu0 0
        %4385 = vmatmul.mubr.bf16.gmra.mxu0 %v3782
        %v4386 = vpop.f32.mrf.mxu0
        %v4387 = vadd.f32 %v4258, %v4386
        %v4388 = vpop.f32.mrf.mxu0
        %v4389 = vadd.f32 %v4260, %v4388
        %v4390 = vpop.f32.mrf.mxu0
        %v4391 = vadd.f32 %v4262, %v4390
        %v4392 = vpop.f32.mrf.mxu0
        %v4393 = vadd.f32 %v4264, %v4392
        %4394 = vmatprep.mubr.bf16.mxu0 0
        %4395 = vmatmul.mubr.bf16.gmra.mxu0 %v3825
        %v4396 = vpop.f32.mrf.mxu0
        %v4397 = vadd.f32 %v4268, %v4396
        %v4398 = vpop.f32.mrf.mxu0
        %v4399 = vpop.f32.mrf.mxu0
        %v4400 = vadd.f32 %v4271, %v4399
        %v4401 = vpop.f32.mrf.mxu0
        %4402 = vdwg.mxu0
        %v4403 = vadd.f32 %v3089, %v4309
        %v4404 = vadd.f32 %v3090, %v4312
        %v4405 = vadd.f32 %v3091, %v4317
        %v4406 = vadd.f32 %v3092, %v4319
        %v4407 = vadd.f32 %v3093, %v4321
        %v4408 = vadd.f32 %v3094, %v4323
        %v4409 = vadd.f32 %v3095, %v4327
        %v4410 = vadd.f32 %v3096, %v4329
        %v4411 = vadd.f32 %v3097, %v4331
        %v4412 = vadd.f32 %v3098, %v4333
        %v4413 = vadd.f32 %v3099, %v4337
        %v4414 = vadd.f32 %v3100, %v4339
        %v4415 = vadd.f32 %v3101, %v4341
        %v4416 = vadd.f32 %v3102, %v4343
        %v4417 = vadd.f32 %v3103, %v4347
        %v4418 = vadd.f32 %v3104, %v4349
        %v4419 = vadd.f32 %v3105, %v4351
        %v4420 = vadd.f32 %v3106, %v4353
        %v4421 = vadd.f32 %v3107, %v4357
        %v4422 = vadd.f32 %v3108, %v4359
        %v4423 = vadd.f32 %v3109, %v4361
        %v4424 = vadd.f32 %v3110, %v4363
        %v4425 = vadd.f32 %v3111, %v4367
        %v4426 = vadd.f32 %v3112, %v4369
        %v4427 = vadd.f32 %v3113, %v4371
        %v4428 = vadd.f32 %v3114, %v4373
        %v4429 = vadd.f32 %v3115, %v4377
        %v4430 = vadd.f32 %v3116, %v4379
        %v4431 = vadd.f32 %v3117, %v4381
        %v4432 = vadd.f32 %v3118, %v4383
        %v4433 = vadd.f32 %v3119, %v4387
        %v4434 = vadd.f32 %v3120, %v4389
        %v4435 = vadd.f32 %v3121, %v4391
        %v4436 = vadd.f32 %v3122, %v4393
        %v4437 = vadd.f32 %v3123, %v4397
        %v4438 = vadd.f32 %v3124, %v4400
        %v4439 = vmax.f32 %v4403, 0.0
        %v4440 = vmax.f32 %v4404, 0.0
        %v4441 = vmax.f32 %v4405, 0.0
        %v4442 = vmax.f32 %v4407, 0.0
        %v4443 = vmax.f32 %v4409, 0.0
        %v4444 = vmax.f32 %v4411, 0.0
        %v4445 = vmax.f32 %v4413, 0.0
        %v4446 = vmax.f32 %v4415, 0.0
        %v4447 = vmax.f32 %v4417, 0.0
        %v4448 = vmax.f32 %v4419, 0.0
        %v4449 = vmax.f32 %v4421, 0.0
        %v4450 = vmax.f32 %v4423, 0.0
        %v4451 = vmax.f32 %v4425, 0.0
        %v4452 = vmax.f32 %v4427, 0.0
        %v4453 = vmax.f32 %v4429, 0.0
        %v4454 = vmax.f32 %v4431, 0.0
        %v4455 = vmax.f32 %v4433, 0.0
        %v4456 = vmax.f32 %v4435, 0.0
        %v4457 = vmax.f32 %v4437, 0.0
        %v4458 = vmax.f32 %v4438, 0.0
        %v4459 = vpack.c.bf16 %v4440, %v4439
        %v4460 = vpack.c.bf16 %v4442, %v4441
        %v4461 = vpack.c.bf16 %v4444, %v4443
        %v4462 = vpack.c.bf16 %v4446, %v4445
        %v4463 = vpack.c.bf16 %v4448, %v4447
        %v4464 = vpack.c.bf16 %v4450, %v4449
        %v4465 = vpack.c.bf16 %v4452, %v4451
        %v4466 = vpack.c.bf16 %v4454, %v4453
        %v4467 = vpack.c.bf16 %v4456, %v4455
        %v4468 = vpack.c.bf16 %v4458, %v4457
        %v4479 = vunpack.c.l.b16 %v4459
        %v4480 = vunpack.c.h.b16 %v4459
        %v4481 = vunpack.c.l.b16 %v4460
        %v4482 = vunpack.c.h.b16 %v4460
        %v4483 = vunpack.c.l.b16 %v4461
        %v4484 = vunpack.c.h.b16 %v4461
        %v4485 = vunpack.c.l.b16 %v4462
        %v4486 = vunpack.c.h.b16 %v4462
        %v4487 = vunpack.c.l.b16 %v4463
        %v4488 = vunpack.c.h.b16 %v4463
        %v4489 = vunpack.c.l.b16 %v4464
        %v4490 = vunpack.c.h.b16 %v4464
        %v4491 = vunpack.c.l.b16 %v4465
        %v4492 = vunpack.c.h.b16 %v4465
        %v4493 = vunpack.c.l.b16 %v4466
        %v4494 = vunpack.c.h.b16 %v4466
        %v4495 = vunpack.c.l.b16 %v4467
        %v4496 = vunpack.c.h.b16 %v4467
        %v4497 = vunpack.c.l.b16 %v4468
        %v4498 = vunpack.c.h.b16 %v4468
        %v4499 = vpack.c.b16 %v4479, %v4479
        %v4500 = vpack.c.b16 %v4480, %v4480
        %v4501 = vpack.c.b16 %v4481, %v4481
        %v4502 = vpack.c.b16 %v4482, %v4482
        %v4503 = vpack.c.b16 %v4483, %v4483
        %v4504 = vpack.c.b16 %v4484, %v4484
        %v4505 = vpack.c.b16 %v4485, %v4485
        %v4506 = vpack.c.b16 %v4486, %v4486
        %v4507 = vpack.c.b16 %v4487, %v4487
        %v4508 = vpack.c.b16 %v4488, %v4488
        %v4509 = vpack.c.b16 %v4489, %v4489
        %v4510 = vpack.c.b16 %v4490, %v4490
        %v4511 = vpack.c.b16 %v4491, %v4491
        %v4512 = vpack.c.b16 %v4492, %v4492
        %v4513 = vpack.c.b16 %v4493, %v4493
        %v4514 = vpack.c.b16 %v4494, %v4494
        %v4515 = vpack.c.b16 %v4495, %v4495
        %v4516 = vpack.c.b16 %v4496, %v4496
        %v4517 = vpack.c.b16 %v4497, %v4497
        %v4518 = vpack.c.b16 %v4498, %v4498
        %4539 = vst [vmem:[#allocation3 + $0x4] sm:$0xf] %v4499
        %4540 = vst [vmem:[#allocation3 + $0x8] sm:$0xf] %v4500
        %4541 = vst [vmem:[#allocation3 + $0x14] sm:$0xf] %v4501
        %4542 = vst [vmem:[#allocation3 + $0x18] sm:$0xf] %v4502
        %4543 = vst [vmem:[#allocation3 + $0x24] sm:$0xf] %v4503
        %4544 = vst [vmem:[#allocation3 + $0x28] sm:$0xf] %v4504
        %4545 = vst [vmem:[#allocation3 + $0x34] sm:$0xf] %v4505
        %4546 = vst [vmem:[#allocation3 + $0x38] sm:$0xf] %v4506
        %4547 = vst [vmem:[#allocation3 + $0x44] sm:$0xf] %v4507
        %4548 = vst [vmem:[#allocation3 + $0x48] sm:$0xf] %v4508
        %4549 = vst [vmem:[#allocation3 + $0x54] sm:$0xf] %v4509
        %4550 = vst [vmem:[#allocation3 + $0x58] sm:$0xf] %v4510
        %4551 = vst [vmem:[#allocation3 + $0x64] sm:$0xf] %v4511
        %4552 = vst [vmem:[#allocation3 + $0x68] sm:$0xf] %v4512
        %4553 = vst [vmem:[#allocation3 + $0x74] sm:$0xf] %v4513
        %4554 = vst [vmem:[#allocation3 + $0x78] sm:$0xf] %v4514
        %4555 = vst [vmem:[#allocation3 + $0x84] sm:$0xf] %v4515
        %4556 = vst [vmem:[#allocation3 + $0x88] sm:$0xf] %v4516
        %4557 = vst [vmem:[#allocation3 + $0x94] sm:$0xf] %v4517
        %4558 = vst [vmem:[#allocation3 + $0x98] sm:$0xf] %v4518
        %vm4559 = vcmask 1043459
        %vm4560 = vsmask.f32 7950
        %vm4561 = vmand %vm4559, %vm4560
        %v4562 = vld [vmem:[#allocation3] sm:$0x8]
        %v4563 = vsel %vm4561, 0, %v4562
        %4564 = vst [vmem:[#allocation3] sm:$0x8] %v4563
        %v4565 = vld [vmem:[#allocation3 + $0x10] sm:$0x8]
        %v4566 = vsel %vm4561, 0, %v4565
        %4567 = vst [vmem:[#allocation3 + $0x10] sm:$0x8] %v4566
        %v4568 = vld [vmem:[#allocation3 + $0x20] sm:$0x8]
        %v4569 = vsel %vm4561, 0, %v4568
        %4570 = vst [vmem:[#allocation3 + $0x20] sm:$0x8] %v4569
        %v4571 = vld [vmem:[#allocation3 + $0x30] sm:$0x8]
        %v4572 = vsel %vm4561, 0, %v4571
        %4573 = vst [vmem:[#allocation3 + $0x30] sm:$0x8] %v4572
        %v4574 = vld [vmem:[#allocation3 + $0x40] sm:$0x8]
        %v4575 = vsel %vm4561, 0, %v4574
        %4576 = vst [vmem:[#allocation3 + $0x40] sm:$0x8] %v4575
        %v4577 = vld [vmem:[#allocation3 + $0x50] sm:$0x8]
        %v4578 = vsel %vm4561, 0, %v4577
        %4579 = vst [vmem:[#allocation3 + $0x50] sm:$0x8] %v4578
        %v4580 = vld [vmem:[#allocation3 + $0x60] sm:$0x8]
        %v4581 = vsel %vm4561, 0, %v4580
        %4582 = vst [vmem:[#allocation3 + $0x60] sm:$0x8] %v4581
        %v4583 = vld [vmem:[#allocation3 + $0x70] sm:$0x8]
        %v4584 = vsel %vm4561, 0, %v4583
        %4585 = vst [vmem:[#allocation3 + $0x70] sm:$0x8] %v4584
        %v4586 = vld [vmem:[#allocation3 + $0x80] sm:$0x8]
        %v4587 = vsel %vm4561, 0, %v4586
        %4588 = vst [vmem:[#allocation3 + $0x80] sm:$0x8] %v4587
        %v4589 = vld [vmem:[#allocation3 + $0x90] sm:$0x8]
        %v4590 = vsel %vm4561, 0, %v4589
        %4591 = vst [vmem:[#allocation3 + $0x90] sm:$0x8] %v4590
        %vm4592 = vcmask 1040384
        %vm4593 = vsmask.f32 256
        %vm4594 = vmand %vm4592, %vm4593
        %v4595 = vld [vmem:[#allocation3 + $0xc] sm:$0x1]
        %v4596 = vsel %vm4594, 0, %v4595
        %4597 = vst [vmem:[#allocation3 + $0xc] sm:$0x1] %v4596
        %v4598 = vld [vmem:[#allocation3 + $0x1c] sm:$0x1]
        %v4599 = vsel %vm4594, 0, %v4598
        %4600 = vst [vmem:[#allocation3 + $0x1c] sm:$0x1] %v4599
        %v4601 = vld [vmem:[#allocation3 + $0x2c] sm:$0x1]
        %v4602 = vsel %vm4594, 0, %v4601
        %4603 = vst [vmem:[#allocation3 + $0x2c] sm:$0x1] %v4602
        %v4604 = vld [vmem:[#allocation3 + $0x3c] sm:$0x1]
        %v4605 = vsel %vm4594, 0, %v4604
        %4606 = vst [vmem:[#allocation3 + $0x3c] sm:$0x1] %v4605
        %v4607 = vld [vmem:[#allocation3 + $0x4c] sm:$0x1]
        %v4608 = vsel %vm4594, 0, %v4607
        %4609 = vst [vmem:[#allocation3 + $0x4c] sm:$0x1] %v4608
        %v4610 = vld [vmem:[#allocation3 + $0x5c] sm:$0x1]
        %v4611 = vsel %vm4594, 0, %v4610
        %4612 = vst [vmem:[#allocation3 + $0x5c] sm:$0x1] %v4611
        %v4613 = vld [vmem:[#allocation3 + $0x6c] sm:$0x1]
        %v4614 = vsel %vm4594, 0, %v4613
        %4615 = vst [vmem:[#allocation3 + $0x6c] sm:$0x1] %v4614
        %v4616 = vld [vmem:[#allocation3 + $0x7c] sm:$0x1]
        %v4617 = vsel %vm4594, 0, %v4616
        %4618 = vst [vmem:[#allocation3 + $0x7c] sm:$0x1] %v4617
        %v4619 = vld [vmem:[#allocation3 + $0x8c] sm:$0x1]
        %v4620 = vsel %vm4594, 0, %v4619
        %4621 = vst [vmem:[#allocation3 + $0x8c] sm:$0x1] %v4620
        %v4622 = vld [vmem:[#allocation3 + $0x9c] sm:$0x1]
        %v4623 = vsel %vm4594, 0, %v4622
        %4624 = vst [vmem:[#allocation3 + $0x9c] sm:$0x1] %v4623
        %p4625 = scmp.eq.s32.totalorder %s32, 0
        // Predicated region
        $region61: #{tpu_custom_call.1} parent=43 // pred_check
          %p4626 = pneg %p4625
        $region62: #{tpu_custom_call.1} parent=43 // pred_check_branch
          %4628 = sbr.rel (%p4626) target = $region64
        $region63: #{tpu_custom_call.1} parent=43 // pred_region
          %4629 = vst [vmem:[#allocation3] sm:$0xf] 0
          %4630 = vst [vmem:[#allocation3 + $0x4] sm:$0xf] 0
          %4631 = vst [vmem:[#allocation3 + $0x8] sm:$0xf] 0
          %4632 = vst [vmem:[#allocation3 + $0xc] sm:$0xf] 0
        $region64: #{tpu_custom_call.1} parent=43 // pred_fallthru
          _
        %p4633 = scmp.eq.s32.totalorder %s32, 1
        // Predicated region
        $region65: #{tpu_custom_call.1} parent=43 // pred_check
          %p4634 = pneg %p4633
        $region66: #{tpu_custom_call.1} parent=43 // pred_check_branch
          %4636 = sbr.rel (%p4634) target = $region68
        $region67: #{tpu_custom_call.1} parent=43 // pred_region
          %s4637 = scalar_lea.vmem [#allocation3], 144
          %4638 = vst [vmem:[%s4637] sm:$0xf] 0
          %4639 = vst [vmem:[%s4637 + $0x4] sm:$0xf] 0
          %4640 = vst [vmem:[%s4637 + $0x8] sm:$0xf] 0
          %4641 = vst [vmem:[%s4637 + $0xc] sm:$0xf] 0
        $region68: #{tpu_custom_call.1} parent=43 // pred_fallthru
          _
        %v4642 = vld [vmem:[%s5] sm:$0x1]
        %v4643 = vld [vmem:[#allocation3] sm:$0x8]
        %v4644 = vld [vmem:[#allocation3 + $0x4] sm:$0xf]
        %v4645 = vld [vmem:[#allocation3 + $0x8] sm:$0xf]
        %v4646 = vld [vmem:[#allocation3 + $0x10] sm:$0x8]
        %v4647 = vld [vmem:[#allocation3 + $0x14] sm:$0xf]
        %v4648 = vld [vmem:[#allocation3 + $0x18] sm:$0xf]
        %v4649 = vld [vmem:[#allocation3 + $0x20] sm:$0x8]
        %v4650 = vld [vmem:[#allocation3 + $0x24] sm:$0xf]
        %v4651 = vld [vmem:[#allocation3 + $0x28] sm:$0xf]
        %v4652 = vld [vmem:[#allocation3 + $0x30] sm:$0x8]
        %v4653 = vld [vmem:[#allocation3 + $0x34] sm:$0xf]
        %v4654 = vld [vmem:[#allocation3 + $0x38] sm:$0xf]
        %v4655 = vld [vmem:[#allocation3 + $0x40] sm:$0x8]
        %v4656 = vld [vmem:[#allocation3 + $0x44] sm:$0xf]
        %v4657 = vld [vmem:[#allocation3 + $0x48] sm:$0xf]
        %v4658 = vld [vmem:[#allocation3 + $0x50] sm:$0x8]
        %v4659 = vld [vmem:[#allocation3 + $0x54] sm:$0xf]
        %v4660 = vld [vmem:[#allocation3 + $0x58] sm:$0xf]
        %v4661 = vld [vmem:[#allocation3 + $0x60] sm:$0x8]
        %v4662 = vld [vmem:[#allocation3 + $0x64] sm:$0xf]
        %v4663 = vld [vmem:[#allocation3 + $0x68] sm:$0xf]
        %v4664 = vld [vmem:[#allocation3 + $0x70] sm:$0x8]
        %v4665 = vld [vmem:[#allocation3 + $0x74] sm:$0xf]
        %v4666 = vld [vmem:[#allocation3 + $0x78] sm:$0xf]
        %v4667 = vld [vmem:[#allocation3 + $0xc] sm:$0x1]
        %v4668 = vld [vmem:[#allocation3 + $0x1c] sm:$0x1]
        %v4669 = vld [vmem:[#allocation3 + $0x2c] sm:$0x1]
        %v4670 = vld [vmem:[#allocation3 + $0x3c] sm:$0x1]
        %v4671 = vld [vmem:[#allocation3 + $0x4c] sm:$0x1]
        %v4672 = vld [vmem:[#allocation3 + $0x5c] sm:$0x1]
        %v4673 = vld [vmem:[#allocation3 + $0x6c] sm:$0x1]
        %v4674 = vld [vmem:[#allocation3 + $0x7c] sm:$0x1]
        %v4699 = vunpack.c.l.b16 %v4643
        %v4700 = vunpack.c.l.b16 %v4644
        %v4701 = vunpack.c.l.b16 %v4645
        %v4702 = vunpack.c.l.b16 %v4646
        %v4703 = vunpack.c.l.b16 %v4647
        %v4704 = vunpack.c.l.b16 %v4648
        %v4705 = vunpack.c.l.b16 %v4649
        %v4706 = vunpack.c.l.b16 %v4650
        %v4707 = vunpack.c.l.b16 %v4651
        %v4708 = vunpack.c.l.b16 %v4652
        %v4709 = vunpack.c.l.b16 %v4653
        %v4710 = vunpack.c.l.b16 %v4654
        %v4711 = vunpack.c.l.b16 %v4655
        %v4712 = vunpack.c.l.b16 %v4656
        %v4713 = vunpack.c.l.b16 %v4657
        %v4714 = vunpack.c.l.b16 %v4658
        %v4715 = vunpack.c.l.b16 %v4659
        %v4716 = vunpack.c.l.b16 %v4660
        %v4717 = vunpack.c.l.b16 %v4661
        %v4718 = vunpack.c.l.b16 %v4662
        %v4719 = vunpack.c.l.b16 %v4663
        %v4720 = vunpack.c.l.b16 %v4664
        %v4721 = vunpack.c.l.b16 %v4665
        %v4722 = vunpack.c.l.b16 %v4666
        %v4723 = vpack.c.b16 %v4700, %v4699
        %v4724 = vpack.c.b16 %v4701, %v4701
        %v4725 = vpack.c.b16 %v4703, %v4702
        %v4726 = vpack.c.b16 %v4704, %v4704
        %v4727 = vpack.c.b16 %v4706, %v4705
        %v4728 = vpack.c.b16 %v4707, %v4707
        %v4729 = vpack.c.b16 %v4709, %v4708
        %v4730 = vpack.c.b16 %v4710, %v4710
        %v4731 = vpack.c.b16 %v4712, %v4711
        %v4732 = vpack.c.b16 %v4713, %v4713
        %v4733 = vpack.c.b16 %v4715, %v4714
        %v4734 = vpack.c.b16 %v4716, %v4716
        %v4735 = vpack.c.b16 %v4718, %v4717
        %v4736 = vpack.c.b16 %v4719, %v4719
        %v4737 = vpack.c.b16 %v4721, %v4720
        %v4738 = vpack.c.b16 %v4722, %v4722
        %v4739 = vpack.c.b16 %v4701, %v4700
        %v4740 = vpack.c.b16 %v4704, %v4703
        %v4741 = vpack.c.b16 %v4707, %v4706
        %v4742 = vpack.c.b16 %v4710, %v4709
        %v4743 = vpack.c.b16 %v4713, %v4712
        %v4744 = vpack.c.b16 %v4716, %v4715
        %v4745 = vpack.c.b16 %v4719, %v4718
        %v4746 = vpack.c.b16 %v4722, %v4721
        %v4748 = vshrl.u32 %v4739, 16
        %v4750 = vrot.slane %v4748, 4
        %v4751 = vshll.u32 %v4739, 16
        %v4753 = vrot.slane %v4751, 5
        %v4754 = vor.u32 %v4750, %v4753
        %v4756 = vshrl.u32 %v4740, 16
        %v4758 = vrot.slane %v4756, 4
        %v4759 = vshll.u32 %v4740, 16
        %v4761 = vrot.slane %v4759, 5
        %v4762 = vor.u32 %v4758, %v4761
        %v4764 = vshrl.u32 %v4741, 16
        %v4766 = vrot.slane %v4764, 4
        %v4767 = vshll.u32 %v4741, 16
        %v4769 = vrot.slane %v4767, 5
        %v4770 = vor.u32 %v4766, %v4769
        %v4772 = vshrl.u32 %v4742, 16
        %v4774 = vrot.slane %v4772, 4
        %v4775 = vshll.u32 %v4742, 16
        %v4777 = vrot.slane %v4775, 5
        %v4778 = vor.u32 %v4774, %v4777
        %v4780 = vshrl.u32 %v4743, 16
        %v4782 = vrot.slane %v4780, 4
        %v4783 = vshll.u32 %v4743, 16
        %v4785 = vrot.slane %v4783, 5
        %v4786 = vor.u32 %v4782, %v4785
        %v4788 = vshrl.u32 %v4744, 16
        %v4790 = vrot.slane %v4788, 4
        %v4791 = vshll.u32 %v4744, 16
        %v4793 = vrot.slane %v4791, 5
        %v4794 = vor.u32 %v4790, %v4793
        %v4796 = vshrl.u32 %v4745, 16
        %v4798 = vrot.slane %v4796, 4
        %v4799 = vshll.u32 %v4745, 16
        %v4801 = vrot.slane %v4799, 5
        %v4802 = vor.u32 %v4798, %v4801
        %v4804 = vshrl.u32 %v4746, 16
        %v4806 = vrot.slane %v4804, 4
        %v4807 = vshll.u32 %v4746, 16
        %v4809 = vrot.slane %v4807, 5
        %v4810 = vor.u32 %v4806, %v4809
        %v4819 = vunpack.c.l.b16 %v4667
        %v4820 = vunpack.c.l.b16 %v4668
        %v4821 = vunpack.c.l.b16 %v4669
        %v4822 = vunpack.c.l.b16 %v4670
        %v4823 = vunpack.c.l.b16 %v4671
        %v4824 = vunpack.c.l.b16 %v4672
        %v4825 = vunpack.c.l.b16 %v4673
        %v4826 = vunpack.c.l.b16 %v4674
        %v4827 = vpack.c.b16 %v4819, %v4819
        %v4828 = vpack.c.b16 %v4820, %v4820
        %v4829 = vpack.c.b16 %v4821, %v4821
        %v4830 = vpack.c.b16 %v4822, %v4822
        %v4831 = vpack.c.b16 %v4823, %v4823
        %v4832 = vpack.c.b16 %v4824, %v4824
        %v4833 = vpack.c.b16 %v4825, %v4825
        %v4834 = vpack.c.b16 %v4826, %v4826
        %v4835 = vrot.slane %v4739, 5
        %v4836 = vrot.slane %v4827, 5
        %v4837 = vsel %vm726, %v4835, %v4836
        %v4838 = vrot.slane %v4740, 5
        %v4839 = vrot.slane %v4828, 5
        %v4840 = vsel %vm726, %v4838, %v4839
        %v4841 = vrot.slane %v4741, 5
        %v4842 = vrot.slane %v4829, 5
        %v4843 = vsel %vm726, %v4841, %v4842
        %v4844 = vrot.slane %v4742, 5
        %v4845 = vrot.slane %v4830, 5
        %v4846 = vsel %vm726, %v4844, %v4845
        %v4847 = vrot.slane %v4743, 5
        %v4848 = vrot.slane %v4831, 5
        %v4849 = vsel %vm726, %v4847, %v4848
        %v4850 = vrot.slane %v4744, 5
        %v4851 = vrot.slane %v4832, 5
        %v4852 = vsel %vm726, %v4850, %v4851
        %v4853 = vrot.slane %v4745, 5
        %v4854 = vrot.slane %v4833, 5
        %v4855 = vsel %vm726, %v4853, %v4854
        %v4856 = vrot.slane %v4746, 5
        %v4857 = vrot.slane %v4834, 5
        %v4858 = vsel %vm726, %v4856, %v4857
        %v4860 = vshrl.u32 %v4723, 16
        %v4862 = vrot.slane %v4860, 3
        %v4863 = vshll.u32 %v4723, 16
        %v4865 = vrot.slane %v4863, 4
        %v4866 = vor.u32 %v4862, %v4865
        %v4868 = vshrl.u32 %v4724, 16
        %v4870 = vrot.slane %v4868, 3
        %v4871 = vshll.u32 %v4724, 16
        %v4873 = vrot.slane %v4871, 4
        %v4874 = vor.u32 %v4870, %v4873
        %v4875 = vsel %vm757, %v4866, %v4874
        %v4877 = vshrl.u32 %v4754, 16
        %v4879 = vrot.slane %v4877, 3
        %v4880 = vshll.u32 %v4754, 16
        %v4882 = vrot.slane %v4880, 4
        %v4883 = vor.u32 %v4879, %v4882
        %v4884 = vsel %vm757, %v4883, %v4883
        %v4886 = vshrl.u32 %v4835, 16
        %v4888 = vrot.slane %v4886, 3
        %v4889 = vshll.u32 %v4835, 16
        %v4891 = vrot.slane %v4889, 4
        %v4892 = vor.u32 %v4888, %v4891
        %v4894 = vshrl.u32 %v4837, 16
        %v4896 = vrot.slane %v4894, 3
        %v4897 = vshll.u32 %v4837, 16
        %v4899 = vrot.slane %v4897, 4
        %v4900 = vor.u32 %v4896, %v4899
        %v4901 = vsel %vm757, %v4892, %v4900
        %v4903 = vshrl.u32 %v4725, 16
        %v4905 = vrot.slane %v4903, 3
        %v4906 = vshll.u32 %v4725, 16
        %v4908 = vrot.slane %v4906, 4
        %v4909 = vor.u32 %v4905, %v4908
        %v4911 = vshrl.u32 %v4726, 16
        %v4913 = vrot.slane %v4911, 3
        %v4914 = vshll.u32 %v4726, 16
        %v4916 = vrot.slane %v4914, 4
        %v4917 = vor.u32 %v4913, %v4916
        %v4918 = vsel %vm757, %v4909, %v4917
        %v4920 = vshrl.u32 %v4762, 16
        %v4922 = vrot.slane %v4920, 3
        %v4923 = vshll.u32 %v4762, 16
        %v4925 = vrot.slane %v4923, 4
        %v4926 = vor.u32 %v4922, %v4925
        %v4927 = vsel %vm757, %v4926, %v4926
        %v4929 = vshrl.u32 %v4838, 16
        %v4931 = vrot.slane %v4929, 3
        %v4932 = vshll.u32 %v4838, 16
        %v4934 = vrot.slane %v4932, 4
        %v4935 = vor.u32 %v4931, %v4934
        %v4937 = vshrl.u32 %v4840, 16
        %v4939 = vrot.slane %v4937, 3
        %v4940 = vshll.u32 %v4840, 16
        %v4942 = vrot.slane %v4940, 4
        %v4943 = vor.u32 %v4939, %v4942
        %v4944 = vsel %vm757, %v4935, %v4943
        %v4946 = vshrl.u32 %v4727, 16
        %v4948 = vrot.slane %v4946, 3
        %v4949 = vshll.u32 %v4727, 16
        %v4951 = vrot.slane %v4949, 4
        %v4952 = vor.u32 %v4948, %v4951
        %v4954 = vshrl.u32 %v4728, 16
        %v4956 = vrot.slane %v4954, 3
        %v4957 = vshll.u32 %v4728, 16
        %v4959 = vrot.slane %v4957, 4
        %v4960 = vor.u32 %v4956, %v4959
        %v4961 = vsel %vm757, %v4952, %v4960
        %v4963 = vshrl.u32 %v4770, 16
        %v4965 = vrot.slane %v4963, 3
        %v4966 = vshll.u32 %v4770, 16
        %v4968 = vrot.slane %v4966, 4
        %v4969 = vor.u32 %v4965, %v4968
        %v4970 = vsel %vm757, %v4969, %v4969
        %v4972 = vshrl.u32 %v4841, 16
        %v4974 = vrot.slane %v4972, 3
        %v4975 = vshll.u32 %v4841, 16
        %v4977 = vrot.slane %v4975, 4
        %v4978 = vor.u32 %v4974, %v4977
        %v4980 = vshrl.u32 %v4843, 16
        %v4982 = vrot.slane %v4980, 3
        %v4983 = vshll.u32 %v4843, 16
        %v4985 = vrot.slane %v4983, 4
        %v4986 = vor.u32 %v4982, %v4985
        %v4987 = vsel %vm757, %v4978, %v4986
        %v4989 = vshrl.u32 %v4729, 16
        %v4991 = vrot.slane %v4989, 3
        %v4992 = vshll.u32 %v4729, 16
        %v4994 = vrot.slane %v4992, 4
        %v4995 = vor.u32 %v4991, %v4994
        %v4997 = vshrl.u32 %v4730, 16
        %v4999 = vrot.slane %v4997, 3
        %v5000 = vshll.u32 %v4730, 16
        %v5002 = vrot.slane %v5000, 4
        %v5003 = vor.u32 %v4999, %v5002
        %v5004 = vsel %vm757, %v4995, %v5003
        %v5006 = vshrl.u32 %v4778, 16
        %v5008 = vrot.slane %v5006, 3
        %v5009 = vshll.u32 %v4778, 16
        %v5011 = vrot.slane %v5009, 4
        %v5012 = vor.u32 %v5008, %v5011
        %v5013 = vsel %vm757, %v5012, %v5012
        %v5015 = vshrl.u32 %v4844, 16
        %v5017 = vrot.slane %v5015, 3
        %v5018 = vshll.u32 %v4844, 16
        %v5020 = vrot.slane %v5018, 4
        %v5021 = vor.u32 %v5017, %v5020
        %v5023 = vshrl.u32 %v4846, 16
        %v5025 = vrot.slane %v5023, 3
        %v5026 = vshll.u32 %v4846, 16
        %v5028 = vrot.slane %v5026, 4
        %v5029 = vor.u32 %v5025, %v5028
        %v5030 = vsel %vm757, %v5021, %v5029
        %v5032 = vshrl.u32 %v4731, 16
        %v5034 = vrot.slane %v5032, 3
        %v5035 = vshll.u32 %v4731, 16
        %v5037 = vrot.slane %v5035, 4
        %v5038 = vor.u32 %v5034, %v5037
        %v5040 = vshrl.u32 %v4732, 16
        %v5042 = vrot.slane %v5040, 3
        %v5043 = vshll.u32 %v4732, 16
        %v5045 = vrot.slane %v5043, 4
        %v5046 = vor.u32 %v5042, %v5045
        %v5047 = vsel %vm757, %v5038, %v5046
        %v5049 = vshrl.u32 %v4786, 16
        %v5051 = vrot.slane %v5049, 3
        %v5052 = vshll.u32 %v4786, 16
        %v5054 = vrot.slane %v5052, 4
        %v5055 = vor.u32 %v5051, %v5054
        %v5056 = vsel %vm757, %v5055, %v5055
        %v5058 = vshrl.u32 %v4847, 16
        %v5060 = vrot.slane %v5058, 3
        %v5061 = vshll.u32 %v4847, 16
        %v5063 = vrot.slane %v5061, 4
        %v5064 = vor.u32 %v5060, %v5063
        %v5066 = vshrl.u32 %v4849, 16
        %v5068 = vrot.slane %v5066, 3
        %v5069 = vshll.u32 %v4849, 16
        %v5071 = vrot.slane %v5069, 4
        %v5072 = vor.u32 %v5068, %v5071
        %v5073 = vsel %vm757, %v5064, %v5072
        %v5075 = vshrl.u32 %v4733, 16
        %v5077 = vrot.slane %v5075, 3
        %v5078 = vshll.u32 %v4733, 16
        %v5080 = vrot.slane %v5078, 4
        %v5081 = vor.u32 %v5077, %v5080
        %v5083 = vshrl.u32 %v4734, 16
        %v5085 = vrot.slane %v5083, 3
        %v5086 = vshll.u32 %v4734, 16
        %v5088 = vrot.slane %v5086, 4
        %v5089 = vor.u32 %v5085, %v5088
        %v5090 = vsel %vm757, %v5081, %v5089
        %v5092 = vshrl.u32 %v4794, 16
        %v5094 = vrot.slane %v5092, 3
        %v5095 = vshll.u32 %v4794, 16
        %v5097 = vrot.slane %v5095, 4
        %v5098 = vor.u32 %v5094, %v5097
        %v5099 = vsel %vm757, %v5098, %v5098
        %v5101 = vshrl.u32 %v4850, 16
        %v5103 = vrot.slane %v5101, 3
        %v5104 = vshll.u32 %v4850, 16
        %v5106 = vrot.slane %v5104, 4
        %v5107 = vor.u32 %v5103, %v5106
        %v5109 = vshrl.u32 %v4852, 16
        %v5111 = vrot.slane %v5109, 3
        %v5112 = vshll.u32 %v4852, 16
        %v5114 = vrot.slane %v5112, 4
        %v5115 = vor.u32 %v5111, %v5114
        %v5116 = vsel %vm757, %v5107, %v5115
        %v5118 = vshrl.u32 %v4735, 16
        %v5120 = vrot.slane %v5118, 3
        %v5121 = vshll.u32 %v4735, 16
        %v5123 = vrot.slane %v5121, 4
        %v5124 = vor.u32 %v5120, %v5123
        %v5126 = vshrl.u32 %v4736, 16
        %v5128 = vrot.slane %v5126, 3
        %v5129 = vshll.u32 %v4736, 16
        %v5131 = vrot.slane %v5129, 4
        %v5132 = vor.u32 %v5128, %v5131
        %v5133 = vsel %vm757, %v5124, %v5132
        %v5135 = vshrl.u32 %v4802, 16
        %v5137 = vrot.slane %v5135, 3
        %v5138 = vshll.u32 %v4802, 16
        %v5140 = vrot.slane %v5138, 4
        %v5141 = vor.u32 %v5137, %v5140
        %v5142 = vsel %vm757, %v5141, %v5141
        %v5144 = vshrl.u32 %v4853, 16
        %v5146 = vrot.slane %v5144, 3
        %v5147 = vshll.u32 %v4853, 16
        %v5149 = vrot.slane %v5147, 4
        %v5150 = vor.u32 %v5146, %v5149
        %v5152 = vshrl.u32 %v4855, 16
        %v5154 = vrot.slane %v5152, 3
        %v5155 = vshll.u32 %v4855, 16
        %v5157 = vrot.slane %v5155, 4
        %v5158 = vor.u32 %v5154, %v5157
        %v5159 = vsel %vm757, %v5150, %v5158
        %v5161 = vshrl.u32 %v4737, 16
        %v5163 = vrot.slane %v5161, 3
        %v5164 = vshll.u32 %v4737, 16
        %v5166 = vrot.slane %v5164, 4
        %v5167 = vor.u32 %v5163, %v5166
        %v5169 = vshrl.u32 %v4738, 16
        %v5171 = vrot.slane %v5169, 3
        %v5172 = vshll.u32 %v4738, 16
        %v5174 = vrot.slane %v5172, 4
        %v5175 = vor.u32 %v5171, %v5174
        %v5176 = vsel %vm757, %v5167, %v5175
        %v5178 = vshrl.u32 %v4810, 16
        %v5180 = vrot.slane %v5178, 3
        %v5181 = vshll.u32 %v4810, 16
        %v5183 = vrot.slane %v5181, 4
        %v5184 = vor.u32 %v5180, %v5183
        %v5185 = vsel %vm757, %v5184, %v5184
        %v5187 = vshrl.u32 %v4856, 16
        %v5189 = vrot.slane %v5187, 3
        %v5190 = vshll.u32 %v4856, 16
        %v5192 = vrot.slane %v5190, 4
        %v5193 = vor.u32 %v5189, %v5192
        %v5195 = vshrl.u32 %v4858, 16
        %v5197 = vrot.slane %v5195, 3
        %v5198 = vshll.u32 %v4858, 16
        %v5200 = vrot.slane %v5198, 4
        %v5201 = vor.u32 %v5197, %v5200
        %v5202 = vsel %vm757, %v5193, %v5201
        %v5227 = vld [vmem:[#allocation10] sm:$0xf]
        %v5228 = vld [vmem:[#allocation10 + $0x4] sm:$0xf]
        %v5229 = vld [vmem:[#allocation10 + $0x8] sm:$0xf]
        %v5230 = vld [vmem:[#allocation10 + $0xc] sm:$0xf]
        %v5231 = vld [vmem:[#allocation10 + $0x10] sm:$0xf]
        %v5232 = vld [vmem:[#allocation10 + $0x14] sm:$0xf]
        %v5233 = vld [vmem:[#allocation10 + $0x18] sm:$0xf]
        %v5234 = vld [vmem:[#allocation10 + $0x1c] sm:$0xf]
        %v5235 = vld [vmem:[#allocation10 + $0x20] sm:$0xf]
        %v5236 = vld [vmem:[#allocation10 + $0x24] sm:$0xf]
        %v5237 = vld [vmem:[#allocation10 + $0x28] sm:$0xf]
        %v5238 = vld [vmem:[#allocation10 + $0x2c] sm:$0xf]
        %v5239 = vld [vmem:[#allocation10 + $0x30] sm:$0xf]
        %v5240 = vld [vmem:[#allocation10 + $0x34] sm:$0xf]
        %v5241 = vld [vmem:[#allocation10 + $0x38] sm:$0xf]
        %v5242 = vld [vmem:[#allocation10 + $0x3c] sm:$0xf]
        %v5243 = vld [vmem:[#allocation10 + $0x40] sm:$0xf]
        %v5244 = vld [vmem:[#allocation10 + $0x44] sm:$0xf]
        %v5245 = vld [vmem:[#allocation10 + $0x48] sm:$0xf]
        %v5246 = vld [vmem:[#allocation10 + $0x4c] sm:$0xf]
        %v5247 = vld [vmem:[#allocation10 + $0x50] sm:$0xf]
        %v5248 = vld [vmem:[#allocation10 + $0x54] sm:$0xf]
        %v5249 = vld [vmem:[#allocation10 + $0x58] sm:$0xf]
        %v5250 = vld [vmem:[#allocation10 + $0x5c] sm:$0xf]
        %v5251 = vld [vmem:[#allocation10 + $0x60] sm:$0xf]
        %v5252 = vld [vmem:[#allocation10 + $0x64] sm:$0xf]
        %v5253 = vld [vmem:[#allocation10 + $0x68] sm:$0xf]
        %v5254 = vld [vmem:[#allocation10 + $0x6c] sm:$0xf]
        %v5255 = vld [vmem:[#allocation10 + $0x70] sm:$0xf]
        %v5256 = vld [vmem:[#allocation10 + $0x74] sm:$0xf]
        %v5257 = vld [vmem:[#allocation10 + $0x78] sm:$0xf]
        %v5258 = vld [vmem:[#allocation10 + $0x7c] sm:$0xf]
        %v5259 = vld [vmem:[#allocation10 + $0x80] sm:$0xf]
        %v5260 = vld [vmem:[#allocation10 + $0x84] sm:$0xf]
        %v5261 = vld [vmem:[#allocation10 + $0x88] sm:$0xf]
        %v5262 = vld [vmem:[#allocation10 + $0x8c] sm:$0xf]
        %v5263 = vld [vmem:[#allocation10 + $0x90] sm:$0xf]
        %v5264 = vld [vmem:[#allocation10 + $0x94] sm:$0xf]
        %v5265 = vld [vmem:[#allocation10 + $0x98] sm:$0xf]
        %v5266 = vld [vmem:[#allocation10 + $0x9c] sm:$0xf]
        %v5267 = vld [vmem:[#allocation10 + $0xa0] sm:$0xf]
        %v5268 = vld [vmem:[#allocation10 + $0xa4] sm:$0xf]
        %v5269 = vld [vmem:[#allocation10 + $0xa8] sm:$0xf]
        %v5270 = vld [vmem:[#allocation10 + $0xac] sm:$0xf]
        %v5271 = vld [vmem:[#allocation10 + $0xb0] sm:$0xf]
        %v5272 = vld [vmem:[#allocation10 + $0xb4] sm:$0xf]
        %v5273 = vld [vmem:[#allocation10 + $0xb8] sm:$0xf]
        %v5274 = vld [vmem:[#allocation10 + $0xbc] sm:$0xf]
        %v5323 = vunpack.c.l.b16 %v5227
        %v5324 = vunpack.c.l.b16 %v5228
        %v5325 = vunpack.c.l.b16 %v5229
        %v5326 = vunpack.c.l.b16 %v5230
        %v5327 = vunpack.c.l.b16 %v5231
        %v5328 = vunpack.c.l.b16 %v5232
        %v5329 = vunpack.c.l.b16 %v5233
        %v5330 = vunpack.c.l.b16 %v5234
        %v5331 = vunpack.c.l.b16 %v5235
        %v5332 = vunpack.c.l.b16 %v5236
        %v5333 = vunpack.c.l.b16 %v5237
        %v5334 = vunpack.c.l.b16 %v5238
        %v5335 = vunpack.c.l.b16 %v5239
        %v5336 = vunpack.c.l.b16 %v5240
        %v5337 = vunpack.c.l.b16 %v5241
        %v5338 = vunpack.c.l.b16 %v5242
        %v5339 = vunpack.c.l.b16 %v5243
        %v5340 = vunpack.c.l.b16 %v5244
        %v5341 = vunpack.c.l.b16 %v5245
        %v5342 = vunpack.c.l.b16 %v5246
        %v5343 = vunpack.c.l.b16 %v5247
        %v5344 = vunpack.c.l.b16 %v5248
        %v5345 = vunpack.c.l.b16 %v5249
        %v5346 = vunpack.c.l.b16 %v5250
        %v5347 = vunpack.c.l.b16 %v5251
        %v5348 = vunpack.c.l.b16 %v5252
        %v5349 = vunpack.c.l.b16 %v5253
        %v5350 = vunpack.c.l.b16 %v5254
        %v5351 = vunpack.c.l.b16 %v5255
        %v5352 = vunpack.c.l.b16 %v5256
        %v5353 = vunpack.c.l.b16 %v5257
        %v5354 = vunpack.c.l.b16 %v5258
        %v5355 = vunpack.c.l.b16 %v5259
        %v5356 = vunpack.c.l.b16 %v5260
        %v5357 = vunpack.c.l.b16 %v5261
        %v5358 = vunpack.c.l.b16 %v5262
        %v5359 = vunpack.c.l.b16 %v5263
        %v5360 = vunpack.c.l.b16 %v5264
        %v5361 = vunpack.c.l.b16 %v5265
        %v5362 = vunpack.c.l.b16 %v5266
        %v5363 = vunpack.c.l.b16 %v5267
        %v5364 = vunpack.c.l.b16 %v5268
        %v5365 = vunpack.c.l.b16 %v5269
        %v5366 = vunpack.c.l.b16 %v5270
        %v5367 = vunpack.c.l.b16 %v5271
        %v5368 = vunpack.c.l.b16 %v5272
        %v5369 = vunpack.c.l.b16 %v5273
        %v5370 = vunpack.c.l.b16 %v5274
        %v5371 = vpack.c.b16 %v5324, %v5323
        %v5372 = vpack.c.b16 %v5326, %v5325
        %v5373 = vpack.c.b16 %v5328, %v5327
        %v5374 = vpack.c.b16 %v5330, %v5329
        %v5375 = vpack.c.b16 %v5332, %v5331
        %v5376 = vpack.c.b16 %v5334, %v5333
        %v5377 = vpack.c.b16 %v5336, %v5335
        %v5378 = vpack.c.b16 %v5338, %v5337
        %v5379 = vpack.c.b16 %v5340, %v5339
        %v5380 = vpack.c.b16 %v5342, %v5341
        %v5381 = vpack.c.b16 %v5344, %v5343
        %v5382 = vpack.c.b16 %v5346, %v5345
        %v5383 = vpack.c.b16 %v5348, %v5347
        %v5384 = vpack.c.b16 %v5350, %v5349
        %v5385 = vpack.c.b16 %v5352, %v5351
        %v5386 = vpack.c.b16 %v5354, %v5353
        %v5387 = vpack.c.b16 %v5356, %v5355
        %v5388 = vpack.c.b16 %v5358, %v5357
        %v5389 = vpack.c.b16 %v5360, %v5359
        %v5390 = vpack.c.b16 %v5362, %v5361
        %v5391 = vpack.c.b16 %v5364, %v5363
        %v5392 = vpack.c.b16 %v5366, %v5365
        %v5393 = vpack.c.b16 %v5368, %v5367
        %v5394 = vpack.c.b16 %v5370, %v5369
        %5419 = vmatprep.subr.bf16.mxu0 0
        %5420 = vmatpush1.bf16.msra.mxu0 %v5378
        %5421 = vmatprep.subr.bf16.mxu0 0
        %5422 = vmatpush1.bf16.msra.mxu0 %v5377
        %5423 = vmatprep.subr.bf16.mxu0 0
        %5424 = vmatpush1.bf16.msra.mxu0 %v5376
        %5425 = vmatprep.subr.bf16.mxu0 0
        %5426 = vmatpush1.bf16.msra.mxu0 %v5375
        %5427 = vmatprep.subr.bf16.mxu0 0
        %5428 = vmatpush1.bf16.msra.mxu0 %v5374
        %5429 = vmatprep.subr.bf16.mxu0 0
        %5430 = vmatpush1.bf16.msra.mxu0 %v5373
        %5431 = vmatprep.subr.bf16.mxu0 0
        %5432 = vmatpush1.bf16.msra.mxu0 %v5372
        %5433 = vmatprep.subr.bf16.mxu0 0
        %5434 = vmatpush1.bf16.msra.mxu0 %v5371
        %5435 = vmatprep.subr.bf16.mxu0 0
        %5436 = vmatpush2.bf16.msra.mxu0 %v5386
        %5437 = vmatprep.subr.bf16.mxu0 0
        %5438 = vmatpush2.bf16.msra.mxu0 %v5385
        %5439 = vmatprep.subr.bf16.mxu0 0
        %5440 = vmatpush2.bf16.msra.mxu0 %v5384
        %5441 = vmatprep.subr.bf16.mxu0 0
        %5442 = vmatpush2.bf16.msra.mxu0 %v5383
        %5443 = vmatprep.subr.bf16.mxu0 0
        %5444 = vmatpush2.bf16.msra.mxu0 %v5382
        %5445 = vmatprep.subr.bf16.mxu0 0
        %5446 = vmatpush2.bf16.msra.mxu0 %v5381
        %5447 = vmatprep.subr.bf16.mxu0 0
        %5448 = vmatpush2.bf16.msra.mxu0 %v5380
        %5449 = vmatprep.subr.bf16.mxu0 0
        %5450 = vmatpush2.bf16.msra.mxu0 %v5379
        %5451 = vmatprep.mubr.bf16.mxu0 %v4884
        %5452 = vmatmul.mubr.bf16.gmra.mxu0 %v4875
        %v5453 = vpop.f32.mrf.mxu0
        %v5454 = vadd.f32 0.0, %v5453
        %v5455 = vpop.f32.mrf.mxu0
        %v5456 = vpop.f32.mrf.mxu0
        %v5457 = vadd.f32 0.0, %v5456
        %v5458 = vpop.f32.mrf.mxu0
        %5459 = vmatprep.mubr.bf16.mxu0 %v4927
        %5460 = vmatmul.mubr.bf16.gmra.mxu0 %v4918
        %v5461 = vpop.f32.mrf.mxu0
        %v5462 = vadd.f32 0.0, %v5461
        %v5463 = vpop.f32.mrf.mxu0
        %v5464 = vpop.f32.mrf.mxu0
        %v5465 = vadd.f32 0.0, %v5464
        %v5466 = vpop.f32.mrf.mxu0
        %5467 = vmatprep.mubr.bf16.mxu0 %v4970
        %5468 = vmatmul.mubr.bf16.gmra.mxu0 %v4961
        %v5469 = vpop.f32.mrf.mxu0
        %v5470 = vadd.f32 0.0, %v5469
        %v5471 = vpop.f32.mrf.mxu0
        %v5472 = vpop.f32.mrf.mxu0
        %v5473 = vadd.f32 0.0, %v5472
        %v5474 = vpop.f32.mrf.mxu0
        %5475 = vmatprep.mubr.bf16.mxu0 %v5013
        %5476 = vmatmul.mubr.bf16.gmra.mxu0 %v5004
        %v5477 = vpop.f32.mrf.mxu0
        %v5478 = vadd.f32 0.0, %v5477
        %v5479 = vpop.f32.mrf.mxu0
        %v5480 = vpop.f32.mrf.mxu0
        %v5481 = vadd.f32 0.0, %v5480
        %v5482 = vpop.f32.mrf.mxu0
        %5483 = vmatprep.mubr.bf16.mxu0 %v5056
        %5484 = vmatmul.mubr.bf16.gmra.mxu0 %v5047
        %v5485 = vpop.f32.mrf.mxu0
        %v5486 = vadd.f32 0.0, %v5485
        %v5487 = vpop.f32.mrf.mxu0
        %v5488 = vpop.f32.mrf.mxu0
        %v5489 = vadd.f32 0.0, %v5488
        %v5490 = vpop.f32.mrf.mxu0
        %5491 = vmatprep.mubr.bf16.mxu0 %v5099
        %5492 = vmatmul.mubr.bf16.gmra.mxu0 %v5090
        %v5493 = vpop.f32.mrf.mxu0
        %v5494 = vadd.f32 0.0, %v5493
        %v5495 = vpop.f32.mrf.mxu0
        %v5496 = vpop.f32.mrf.mxu0
        %v5497 = vadd.f32 0.0, %v5496
        %v5498 = vpop.f32.mrf.mxu0
        %5499 = vmatprep.mubr.bf16.mxu0 %v5142
        %5500 = vmatmul.mubr.bf16.gmra.mxu0 %v5133
        %v5501 = vpop.f32.mrf.mxu0
        %v5502 = vadd.f32 0.0, %v5501
        %v5503 = vpop.f32.mrf.mxu0
        %v5504 = vpop.f32.mrf.mxu0
        %v5505 = vadd.f32 0.0, %v5504
        %v5506 = vpop.f32.mrf.mxu0
        %5507 = vmatprep.mubr.bf16.mxu0 %v5185
        %5508 = vmatmul.mubr.bf16.gmra.mxu0 %v5176
        %v5509 = vpop.f32.mrf.mxu0
        %v5510 = vadd.f32 0.0, %v5509
        %v5511 = vpop.f32.mrf.mxu0
        %v5512 = vpop.f32.mrf.mxu0
        %v5513 = vadd.f32 0.0, %v5512
        %v5514 = vpop.f32.mrf.mxu0
        %5515 = vdwg.mxu0
        %5516 = vmatprep.subr.bf16.mxu0 0
        %5517 = vmatpush1.bf16.msra.mxu0 %v5394
        %5518 = vmatprep.subr.bf16.mxu0 0
        %5519 = vmatpush1.bf16.msra.mxu0 %v5393
        %5520 = vmatprep.subr.bf16.mxu0 0
        %5521 = vmatpush1.bf16.msra.mxu0 %v5392
        %5522 = vmatprep.subr.bf16.mxu0 0
        %5523 = vmatpush1.bf16.msra.mxu0 %v5391
        %5524 = vmatprep.subr.bf16.mxu0 0
        %5525 = vmatpush1.bf16.msra.mxu0 %v5390
        %5526 = vmatprep.subr.bf16.mxu0 0
        %5527 = vmatpush1.bf16.msra.mxu0 %v5389
        %5528 = vmatprep.subr.bf16.mxu0 0
        %5529 = vmatpush1.bf16.msra.mxu0 %v5388
        %5530 = vmatprep.subr.bf16.mxu0 0
        %5531 = vmatpush1.bf16.msra.mxu0 %v5387
        %5532 = vmatprep.subr.bf16.mxu0 0
        %5533 = vmatpush2.bf16.msra.mxu0 0
        %5534 = vmatprep.subr.bf16.mxu0 0
        %5535 = vmatpush2.bf16.msra.mxu0 0
        %5536 = vmatprep.subr.bf16.mxu0 0
        %5537 = vmatpush2.bf16.msra.mxu0 0
        %5538 = vmatprep.subr.bf16.mxu0 0
        %5539 = vmatpush2.bf16.msra.mxu0 0
        %5540 = vmatprep.subr.bf16.mxu0 0
        %5541 = vmatpush2.bf16.msra.mxu0 0
        %5542 = vmatprep.subr.bf16.mxu0 0
        %5543 = vmatpush2.bf16.msra.mxu0 0
        %5544 = vmatprep.subr.bf16.mxu0 0
        %5545 = vmatpush2.bf16.msra.mxu0 0
        %5546 = vmatprep.subr.bf16.mxu0 0
        %5547 = vmatpush2.bf16.msra.mxu0 0
        %5548 = vmatprep.mubr.bf16.mxu0 0
        %5549 = vmatmul.mubr.bf16.gmra.mxu0 %v4901
        %v5550 = vpop.f32.mrf.mxu0
        %v5551 = vadd.f32 %v5454, %v5550
        %v5552 = vpop.f32.mrf.mxu0
        %v5553 = vpop.f32.mrf.mxu0
        %v5554 = vadd.f32 %v5457, %v5553
        %v5555 = vpop.f32.mrf.mxu0
        %5556 = vmatprep.mubr.bf16.mxu0 0
        %5557 = vmatmul.mubr.bf16.gmra.mxu0 %v4944
        %v5558 = vpop.f32.mrf.mxu0
        %v5559 = vadd.f32 %v5462, %v5558
        %v5560 = vpop.f32.mrf.mxu0
        %v5561 = vpop.f32.mrf.mxu0
        %v5562 = vadd.f32 %v5465, %v5561
        %v5563 = vpop.f32.mrf.mxu0
        %5564 = vmatprep.mubr.bf16.mxu0 0
        %5565 = vmatmul.mubr.bf16.gmra.mxu0 %v4987
        %v5566 = vpop.f32.mrf.mxu0
        %v5567 = vadd.f32 %v5470, %v5566
        %v5568 = vpop.f32.mrf.mxu0
        %v5569 = vpop.f32.mrf.mxu0
        %v5570 = vadd.f32 %v5473, %v5569
        %v5571 = vpop.f32.mrf.mxu0
        %5572 = vmatprep.mubr.bf16.mxu0 0
        %5573 = vmatmul.mubr.bf16.gmra.mxu0 %v5030
        %v5574 = vpop.f32.mrf.mxu0
        %v5575 = vadd.f32 %v5478, %v5574
        %v5576 = vpop.f32.mrf.mxu0
        %v5577 = vpop.f32.mrf.mxu0
        %v5578 = vadd.f32 %v5481, %v5577
        %v5579 = vpop.f32.mrf.mxu0
        %5580 = vmatprep.mubr.bf16.mxu0 0
        %5581 = vmatmul.mubr.bf16.gmra.mxu0 %v5073
        %v5582 = vpop.f32.mrf.mxu0
        %v5583 = vadd.f32 %v5486, %v5582
        %v5584 = vpop.f32.mrf.mxu0
        %v5585 = vpop.f32.mrf.mxu0
        %v5586 = vadd.f32 %v5489, %v5585
        %v5587 = vpop.f32.mrf.mxu0
        %5588 = vmatprep.mubr.bf16.mxu0 0
        %5589 = vmatmul.mubr.bf16.gmra.mxu0 %v5116
        %v5590 = vpop.f32.mrf.mxu0
        %v5591 = vadd.f32 %v5494, %v5590
        %v5592 = vpop.f32.mrf.mxu0
        %v5593 = vpop.f32.mrf.mxu0
        %v5594 = vadd.f32 %v5497, %v5593
        %v5595 = vpop.f32.mrf.mxu0
        %5596 = vmatprep.mubr.bf16.mxu0 0
        %5597 = vmatmul.mubr.bf16.gmra.mxu0 %v5159
        %v5598 = vpop.f32.mrf.mxu0
        %v5599 = vadd.f32 %v5502, %v5598
        %v5600 = vpop.f32.mrf.mxu0
        %v5601 = vpop.f32.mrf.mxu0
        %v5602 = vadd.f32 %v5505, %v5601
        %v5603 = vpop.f32.mrf.mxu0
        %5604 = vmatprep.mubr.bf16.mxu0 0
        %5605 = vmatmul.mubr.bf16.gmra.mxu0 %v5202
        %v5606 = vpop.f32.mrf.mxu0
        %v5607 = vadd.f32 %v5510, %v5606
        %v5608 = vpop.f32.mrf.mxu0
        %v5609 = vpop.f32.mrf.mxu0
        %v5610 = vadd.f32 %v5513, %v5609
        %v5611 = vpop.f32.mrf.mxu0
        %5612 = vdwg.mxu0
        %v5614 = vlaneseq
        %v5615 = vshrl.u32 %v5614, 7
        %v5616 = vsub.s32 0, %v5615
        %v5617 = vrot.slane %v4642, %v5616
        %v5619 = vadd.f32 %v5617, %v5551
        %v5620 = vadd.f32 %v5617, %v5554
        %v5621 = vadd.f32 %v5617, %v5559
        %v5622 = vadd.f32 %v5617, %v5562
        %v5623 = vadd.f32 %v5617, %v5567
        %v5624 = vadd.f32 %v5617, %v5570
        %v5625 = vadd.f32 %v5617, %v5575
        %v5626 = vadd.f32 %v5617, %v5578
        %v5627 = vadd.f32 %v5617, %v5583
        %v5628 = vadd.f32 %v5617, %v5586
        %v5629 = vadd.f32 %v5617, %v5591
        %v5630 = vadd.f32 %v5617, %v5594
        %v5631 = vadd.f32 %v5617, %v5599
        %v5632 = vadd.f32 %v5617, %v5602
        %v5633 = vadd.f32 %v5617, %v5607
        %v5634 = vadd.f32 %v5617, %v5610
        %s5635 = scalar_lea.vmem [#allocation3], 16
        %v5636 = vld [vmem:[%s5635] sm:$0x8]
        %v5637 = vld [vmem:[%s5635 + $0x4] sm:$0xf]
        %v5638 = vld [vmem:[%s5635 + $0x8] sm:$0xf]
        %v5639 = vld [vmem:[%s5635 + $0x10] sm:$0x8]
        %v5640 = vld [vmem:[%s5635 + $0x14] sm:$0xf]
        %v5641 = vld [vmem:[%s5635 + $0x18] sm:$0xf]
        %v5642 = vld [vmem:[%s5635 + $0x20] sm:$0x8]
        %v5643 = vld [vmem:[%s5635 + $0x24] sm:$0xf]
        %v5644 = vld [vmem:[%s5635 + $0x28] sm:$0xf]
        %v5645 = vld [vmem:[%s5635 + $0x30] sm:$0x8]
        %v5646 = vld [vmem:[%s5635 + $0x34] sm:$0xf]
        %v5647 = vld [vmem:[%s5635 + $0x38] sm:$0xf]
        %v5648 = vld [vmem:[%s5635 + $0x40] sm:$0x8]
        %v5649 = vld [vmem:[%s5635 + $0x44] sm:$0xf]
        %v5650 = vld [vmem:[%s5635 + $0x48] sm:$0xf]
        %v5651 = vld [vmem:[%s5635 + $0x50] sm:$0x8]
        %v5652 = vld [vmem:[%s5635 + $0x54] sm:$0xf]
        %v5653 = vld [vmem:[%s5635 + $0x58] sm:$0xf]
        %v5654 = vld [vmem:[%s5635 + $0x60] sm:$0x8]
        %v5655 = vld [vmem:[%s5635 + $0x64] sm:$0xf]
        %v5656 = vld [vmem:[%s5635 + $0x68] sm:$0xf]
        %v5657 = vld [vmem:[%s5635 + $0x70] sm:$0x8]
        %v5658 = vld [vmem:[%s5635 + $0x74] sm:$0xf]
        %v5659 = vld [vmem:[%s5635 + $0x78] sm:$0xf]
        %v5660 = vld [vmem:[%s5635 + $0xc] sm:$0x1]
        %v5661 = vld [vmem:[%s5635 + $0x1c] sm:$0x1]
        %v5662 = vld [vmem:[%s5635 + $0x2c] sm:$0x1]
        %v5663 = vld [vmem:[%s5635 + $0x3c] sm:$0x1]
        %v5664 = vld [vmem:[%s5635 + $0x4c] sm:$0x1]
        %v5665 = vld [vmem:[%s5635 + $0x5c] sm:$0x1]
        %v5666 = vld [vmem:[%s5635 + $0x6c] sm:$0x1]
        %v5667 = vld [vmem:[%s5635 + $0x7c] sm:$0x1]
        %v5692 = vunpack.c.l.b16 %v5636
        %v5693 = vunpack.c.l.b16 %v5637
        %v5694 = vunpack.c.l.b16 %v5638
        %v5695 = vunpack.c.l.b16 %v5639
        %v5696 = vunpack.c.l.b16 %v5640
        %v5697 = vunpack.c.l.b16 %v5641
        %v5698 = vunpack.c.l.b16 %v5642
        %v5699 = vunpack.c.l.b16 %v5643
        %v5700 = vunpack.c.l.b16 %v5644
        %v5701 = vunpack.c.l.b16 %v5645
        %v5702 = vunpack.c.l.b16 %v5646
        %v5703 = vunpack.c.l.b16 %v5647
        %v5704 = vunpack.c.l.b16 %v5648
        %v5705 = vunpack.c.l.b16 %v5649
        %v5706 = vunpack.c.l.b16 %v5650
        %v5707 = vunpack.c.l.b16 %v5651
        %v5708 = vunpack.c.l.b16 %v5652
        %v5709 = vunpack.c.l.b16 %v5653
        %v5710 = vunpack.c.l.b16 %v5654
        %v5711 = vunpack.c.l.b16 %v5655
        %v5712 = vunpack.c.l.b16 %v5656
        %v5713 = vunpack.c.l.b16 %v5657
        %v5714 = vunpack.c.l.b16 %v5658
        %v5715 = vunpack.c.l.b16 %v5659
        %v5716 = vpack.c.b16 %v5693, %v5692
        %v5717 = vpack.c.b16 %v5694, %v5694
        %v5718 = vpack.c.b16 %v5696, %v5695
        %v5719 = vpack.c.b16 %v5697, %v5697
        %v5720 = vpack.c.b16 %v5699, %v5698
        %v5721 = vpack.c.b16 %v5700, %v5700
        %v5722 = vpack.c.b16 %v5702, %v5701
        %v5723 = vpack.c.b16 %v5703, %v5703
        %v5724 = vpack.c.b16 %v5705, %v5704
        %v5725 = vpack.c.b16 %v5706, %v5706
        %v5726 = vpack.c.b16 %v5708, %v5707
        %v5727 = vpack.c.b16 %v5709, %v5709
        %v5728 = vpack.c.b16 %v5711, %v5710
        %v5729 = vpack.c.b16 %v5712, %v5712
        %v5730 = vpack.c.b16 %v5714, %v5713
        %v5731 = vpack.c.b16 %v5715, %v5715
        %v5732 = vpack.c.b16 %v5694, %v5693
        %v5733 = vpack.c.b16 %v5697, %v5696
        %v5734 = vpack.c.b16 %v5700, %v5699
        %v5735 = vpack.c.b16 %v5703, %v5702
        %v5736 = vpack.c.b16 %v5706, %v5705
        %v5737 = vpack.c.b16 %v5709, %v5708
        %v5738 = vpack.c.b16 %v5712, %v5711
        %v5739 = vpack.c.b16 %v5715, %v5714
        %v5741 = vshrl.u32 %v5732, 16
        %v5743 = vrot.slane %v5741, 4
        %v5744 = vshll.u32 %v5732, 16
        %v5746 = vrot.slane %v5744, 5
        %v5747 = vor.u32 %v5743, %v5746
        %v5749 = vshrl.u32 %v5733, 16
        %v5751 = vrot.slane %v5749, 4
        %v5752 = vshll.u32 %v5733, 16
        %v5754 = vrot.slane %v5752, 5
        %v5755 = vor.u32 %v5751, %v5754
        %v5757 = vshrl.u32 %v5734, 16
        %v5759 = vrot.slane %v5757, 4
        %v5760 = vshll.u32 %v5734, 16
        %v5762 = vrot.slane %v5760, 5
        %v5763 = vor.u32 %v5759, %v5762
        %v5765 = vshrl.u32 %v5735, 16
        %v5767 = vrot.slane %v5765, 4
        %v5768 = vshll.u32 %v5735, 16
        %v5770 = vrot.slane %v5768, 5
        %v5771 = vor.u32 %v5767, %v5770
        %v5773 = vshrl.u32 %v5736, 16
        %v5775 = vrot.slane %v5773, 4
        %v5776 = vshll.u32 %v5736, 16
        %v5778 = vrot.slane %v5776, 5
        %v5779 = vor.u32 %v5775, %v5778
        %v5781 = vshrl.u32 %v5737, 16
        %v5783 = vrot.slane %v5781, 4
        %v5784 = vshll.u32 %v5737, 16
        %v5786 = vrot.slane %v5784, 5
        %v5787 = vor.u32 %v5783, %v5786
        %v5789 = vshrl.u32 %v5738, 16
        %v5791 = vrot.slane %v5789, 4
        %v5792 = vshll.u32 %v5738, 16
        %v5794 = vrot.slane %v5792, 5
        %v5795 = vor.u32 %v5791, %v5794
        %v5797 = vshrl.u32 %v5739, 16
        %v5799 = vrot.slane %v5797, 4
        %v5800 = vshll.u32 %v5739, 16
        %v5802 = vrot.slane %v5800, 5
        %v5803 = vor.u32 %v5799, %v5802
        %v5812 = vunpack.c.l.b16 %v5660
        %v5813 = vunpack.c.l.b16 %v5661
        %v5814 = vunpack.c.l.b16 %v5662
        %v5815 = vunpack.c.l.b16 %v5663
        %v5816 = vunpack.c.l.b16 %v5664
        %v5817 = vunpack.c.l.b16 %v5665
        %v5818 = vunpack.c.l.b16 %v5666
        %v5819 = vunpack.c.l.b16 %v5667
        %v5820 = vpack.c.b16 %v5812, %v5812
        %v5821 = vpack.c.b16 %v5813, %v5813
        %v5822 = vpack.c.b16 %v5814, %v5814
        %v5823 = vpack.c.b16 %v5815, %v5815
        %v5824 = vpack.c.b16 %v5816, %v5816
        %v5825 = vpack.c.b16 %v5817, %v5817
        %v5826 = vpack.c.b16 %v5818, %v5818
        %v5827 = vpack.c.b16 %v5819, %v5819
        %v5828 = vrot.slane %v5732, 5
        %v5829 = vrot.slane %v5820, 5
        %v5830 = vsel %vm726, %v5828, %v5829
        %v5831 = vrot.slane %v5733, 5
        %v5832 = vrot.slane %v5821, 5
        %v5833 = vsel %vm726, %v5831, %v5832
        %v5834 = vrot.slane %v5734, 5
        %v5835 = vrot.slane %v5822, 5
        %v5836 = vsel %vm726, %v5834, %v5835
        %v5837 = vrot.slane %v5735, 5
        %v5838 = vrot.slane %v5823, 5
        %v5839 = vsel %vm726, %v5837, %v5838
        %v5840 = vrot.slane %v5736, 5
        %v5841 = vrot.slane %v5824, 5
        %v5842 = vsel %vm726, %v5840, %v5841
        %v5843 = vrot.slane %v5737, 5
        %v5844 = vrot.slane %v5825, 5
        %v5845 = vsel %vm726, %v5843, %v5844
        %v5846 = vrot.slane %v5738, 5
        %v5847 = vrot.slane %v5826, 5
        %v5848 = vsel %vm726, %v5846, %v5847
        %v5849 = vrot.slane %v5739, 5
        %v5850 = vrot.slane %v5827, 5
        %v5851 = vsel %vm726, %v5849, %v5850
        %v5853 = vshrl.u32 %v5716, 16
        %v5855 = vrot.slane %v5853, 3
        %v5856 = vshll.u32 %v5716, 16
        %v5858 = vrot.slane %v5856, 4
        %v5859 = vor.u32 %v5855, %v5858
        %v5861 = vshrl.u32 %v5717, 16
        %v5863 = vrot.slane %v5861, 3
        %v5864 = vshll.u32 %v5717, 16
        %v5866 = vrot.slane %v5864, 4
        %v5867 = vor.u32 %v5863, %v5866
        %v5868 = vsel %vm757, %v5859, %v5867
        %v5870 = vshrl.u32 %v5747, 16
        %v5872 = vrot.slane %v5870, 3
        %v5873 = vshll.u32 %v5747, 16
        %v5875 = vrot.slane %v5873, 4
        %v5876 = vor.u32 %v5872, %v5875
        %v5877 = vsel %vm757, %v5876, %v5876
        %v5879 = vshrl.u32 %v5828, 16
        %v5881 = vrot.slane %v5879, 3
        %v5882 = vshll.u32 %v5828, 16
        %v5884 = vrot.slane %v5882, 4
        %v5885 = vor.u32 %v5881, %v5884
        %v5887 = vshrl.u32 %v5830, 16
        %v5889 = vrot.slane %v5887, 3
        %v5890 = vshll.u32 %v5830, 16
        %v5892 = vrot.slane %v5890, 4
        %v5893 = vor.u32 %v5889, %v5892
        %v5894 = vsel %vm757, %v5885, %v5893
        %v5896 = vshrl.u32 %v5718, 16
        %v5898 = vrot.slane %v5896, 3
        %v5899 = vshll.u32 %v5718, 16
        %v5901 = vrot.slane %v5899, 4
        %v5902 = vor.u32 %v5898, %v5901
        %v5904 = vshrl.u32 %v5719, 16
        %v5906 = vrot.slane %v5904, 3
        %v5907 = vshll.u32 %v5719, 16
        %v5909 = vrot.slane %v5907, 4
        %v5910 = vor.u32 %v5906, %v5909
        %v5911 = vsel %vm757, %v5902, %v5910
        %v5913 = vshrl.u32 %v5755, 16
        %v5915 = vrot.slane %v5913, 3
        %v5916 = vshll.u32 %v5755, 16
        %v5918 = vrot.slane %v5916, 4
        %v5919 = vor.u32 %v5915, %v5918
        %v5920 = vsel %vm757, %v5919, %v5919
        %v5922 = vshrl.u32 %v5831, 16
        %v5924 = vrot.slane %v5922, 3
        %v5925 = vshll.u32 %v5831, 16
        %v5927 = vrot.slane %v5925, 4
        %v5928 = vor.u32 %v5924, %v5927
        %v5930 = vshrl.u32 %v5833, 16
        %v5932 = vrot.slane %v5930, 3
        %v5933 = vshll.u32 %v5833, 16
        %v5935 = vrot.slane %v5933, 4
        %v5936 = vor.u32 %v5932, %v5935
        %v5937 = vsel %vm757, %v5928, %v5936
        %v5939 = vshrl.u32 %v5720, 16
        %v5941 = vrot.slane %v5939, 3
        %v5942 = vshll.u32 %v5720, 16
        %v5944 = vrot.slane %v5942, 4
        %v5945 = vor.u32 %v5941, %v5944
        %v5947 = vshrl.u32 %v5721, 16
        %v5949 = vrot.slane %v5947, 3
        %v5950 = vshll.u32 %v5721, 16
        %v5952 = vrot.slane %v5950, 4
        %v5953 = vor.u32 %v5949, %v5952
        %v5954 = vsel %vm757, %v5945, %v5953
        %v5956 = vshrl.u32 %v5763, 16
        %v5958 = vrot.slane %v5956, 3
        %v5959 = vshll.u32 %v5763, 16
        %v5961 = vrot.slane %v5959, 4
        %v5962 = vor.u32 %v5958, %v5961
        %v5963 = vsel %vm757, %v5962, %v5962
        %v5965 = vshrl.u32 %v5834, 16
        %v5967 = vrot.slane %v5965, 3
        %v5968 = vshll.u32 %v5834, 16
        %v5970 = vrot.slane %v5968, 4
        %v5971 = vor.u32 %v5967, %v5970
        %v5973 = vshrl.u32 %v5836, 16
        %v5975 = vrot.slane %v5973, 3
        %v5976 = vshll.u32 %v5836, 16
        %v5978 = vrot.slane %v5976, 4
        %v5979 = vor.u32 %v5975, %v5978
        %v5980 = vsel %vm757, %v5971, %v5979
        %v5982 = vshrl.u32 %v5722, 16
        %v5984 = vrot.slane %v5982, 3
        %v5985 = vshll.u32 %v5722, 16
        %v5987 = vrot.slane %v5985, 4
        %v5988 = vor.u32 %v5984, %v5987
        %v5990 = vshrl.u32 %v5723, 16
        %v5992 = vrot.slane %v5990, 3
        %v5993 = vshll.u32 %v5723, 16
        %v5995 = vrot.slane %v5993, 4
        %v5996 = vor.u32 %v5992, %v5995
        %v5997 = vsel %vm757, %v5988, %v5996
        %v5999 = vshrl.u32 %v5771, 16
        %v6001 = vrot.slane %v5999, 3
        %v6002 = vshll.u32 %v5771, 16
        %v6004 = vrot.slane %v6002, 4
        %v6005 = vor.u32 %v6001, %v6004
        %v6006 = vsel %vm757, %v6005, %v6005
        %v6008 = vshrl.u32 %v5837, 16
        %v6010 = vrot.slane %v6008, 3
        %v6011 = vshll.u32 %v5837, 16
        %v6013 = vrot.slane %v6011, 4
        %v6014 = vor.u32 %v6010, %v6013
        %v6016 = vshrl.u32 %v5839, 16
        %v6018 = vrot.slane %v6016, 3
        %v6019 = vshll.u32 %v5839, 16
        %v6021 = vrot.slane %v6019, 4
        %v6022 = vor.u32 %v6018, %v6021
        %v6023 = vsel %vm757, %v6014, %v6022
        %v6025 = vshrl.u32 %v5724, 16
        %v6027 = vrot.slane %v6025, 3
        %v6028 = vshll.u32 %v5724, 16
        %v6030 = vrot.slane %v6028, 4
        %v6031 = vor.u32 %v6027, %v6030
        %v6033 = vshrl.u32 %v5725, 16
        %v6035 = vrot.slane %v6033, 3
        %v6036 = vshll.u32 %v5725, 16
        %v6038 = vrot.slane %v6036, 4
        %v6039 = vor.u32 %v6035, %v6038
        %v6040 = vsel %vm757, %v6031, %v6039
        %v6042 = vshrl.u32 %v5779, 16
        %v6044 = vrot.slane %v6042, 3
        %v6045 = vshll.u32 %v5779, 16
        %v6047 = vrot.slane %v6045, 4
        %v6048 = vor.u32 %v6044, %v6047
        %v6049 = vsel %vm757, %v6048, %v6048
        %v6051 = vshrl.u32 %v5840, 16
        %v6053 = vrot.slane %v6051, 3
        %v6054 = vshll.u32 %v5840, 16
        %v6056 = vrot.slane %v6054, 4
        %v6057 = vor.u32 %v6053, %v6056
        %v6059 = vshrl.u32 %v5842, 16
        %v6061 = vrot.slane %v6059, 3
        %v6062 = vshll.u32 %v5842, 16
        %v6064 = vrot.slane %v6062, 4
        %v6065 = vor.u32 %v6061, %v6064
        %v6066 = vsel %vm757, %v6057, %v6065
        %v6068 = vshrl.u32 %v5726, 16
        %v6070 = vrot.slane %v6068, 3
        %v6071 = vshll.u32 %v5726, 16
        %v6073 = vrot.slane %v6071, 4
        %v6074 = vor.u32 %v6070, %v6073
        %v6076 = vshrl.u32 %v5727, 16
        %v6078 = vrot.slane %v6076, 3
        %v6079 = vshll.u32 %v5727, 16
        %v6081 = vrot.slane %v6079, 4
        %v6082 = vor.u32 %v6078, %v6081
        %v6083 = vsel %vm757, %v6074, %v6082
        %v6085 = vshrl.u32 %v5787, 16
        %v6087 = vrot.slane %v6085, 3
        %v6088 = vshll.u32 %v5787, 16
        %v6090 = vrot.slane %v6088, 4
        %v6091 = vor.u32 %v6087, %v6090
        %v6092 = vsel %vm757, %v6091, %v6091
        %v6094 = vshrl.u32 %v5843, 16
        %v6096 = vrot.slane %v6094, 3
        %v6097 = vshll.u32 %v5843, 16
        %v6099 = vrot.slane %v6097, 4
        %v6100 = vor.u32 %v6096, %v6099
        %v6102 = vshrl.u32 %v5845, 16
        %v6104 = vrot.slane %v6102, 3
        %v6105 = vshll.u32 %v5845, 16
        %v6107 = vrot.slane %v6105, 4
        %v6108 = vor.u32 %v6104, %v6107
        %v6109 = vsel %vm757, %v6100, %v6108
        %v6111 = vshrl.u32 %v5728, 16
        %v6113 = vrot.slane %v6111, 3
        %v6114 = vshll.u32 %v5728, 16
        %v6116 = vrot.slane %v6114, 4
        %v6117 = vor.u32 %v6113, %v6116
        %v6119 = vshrl.u32 %v5729, 16
        %v6121 = vrot.slane %v6119, 3
        %v6122 = vshll.u32 %v5729, 16
        %v6124 = vrot.slane %v6122, 4
        %v6125 = vor.u32 %v6121, %v6124
        %v6126 = vsel %vm757, %v6117, %v6125
        %v6128 = vshrl.u32 %v5795, 16
        %v6130 = vrot.slane %v6128, 3
        %v6131 = vshll.u32 %v5795, 16
        %v6133 = vrot.slane %v6131, 4
        %v6134 = vor.u32 %v6130, %v6133
        %v6135 = vsel %vm757, %v6134, %v6134
        %v6137 = vshrl.u32 %v5846, 16
        %v6139 = vrot.slane %v6137, 3
        %v6140 = vshll.u32 %v5846, 16
        %v6142 = vrot.slane %v6140, 4
        %v6143 = vor.u32 %v6139, %v6142
        %v6145 = vshrl.u32 %v5848, 16
        %v6147 = vrot.slane %v6145, 3
        %v6148 = vshll.u32 %v5848, 16
        %v6150 = vrot.slane %v6148, 4
        %v6151 = vor.u32 %v6147, %v6150
        %v6152 = vsel %vm757, %v6143, %v6151
        %v6154 = vshrl.u32 %v5730, 16
        %v6156 = vrot.slane %v6154, 3
        %v6157 = vshll.u32 %v5730, 16
        %v6159 = vrot.slane %v6157, 4
        %v6160 = vor.u32 %v6156, %v6159
        %v6162 = vshrl.u32 %v5731, 16
        %v6164 = vrot.slane %v6162, 3
        %v6165 = vshll.u32 %v5731, 16
        %v6167 = vrot.slane %v6165, 4
        %v6168 = vor.u32 %v6164, %v6167
        %v6169 = vsel %vm757, %v6160, %v6168
        %v6171 = vshrl.u32 %v5803, 16
        %v6173 = vrot.slane %v6171, 3
        %v6174 = vshll.u32 %v5803, 16
        %v6176 = vrot.slane %v6174, 4
        %v6177 = vor.u32 %v6173, %v6176
        %v6178 = vsel %vm757, %v6177, %v6177
        %v6180 = vshrl.u32 %v5849, 16
        %v6182 = vrot.slane %v6180, 3
        %v6183 = vshll.u32 %v5849, 16
        %v6185 = vrot.slane %v6183, 4
        %v6186 = vor.u32 %v6182, %v6185
        %v6188 = vshrl.u32 %v5851, 16
        %v6190 = vrot.slane %v6188, 3
        %v6191 = vshll.u32 %v5851, 16
        %v6193 = vrot.slane %v6191, 4
        %v6194 = vor.u32 %v6190, %v6193
        %v6195 = vsel %vm757, %v6186, %v6194
        %s6220 = scalar_lea.vmem [#allocation10], 192
        %v6221 = vld [vmem:[%s6220] sm:$0xf]
        %v6222 = vld [vmem:[%s6220 + $0x4] sm:$0xf]
        %v6223 = vld [vmem:[%s6220 + $0x8] sm:$0xf]
        %v6224 = vld [vmem:[%s6220 + $0xc] sm:$0xf]
        %v6225 = vld [vmem:[%s6220 + $0x10] sm:$0xf]
        %v6226 = vld [vmem:[%s6220 + $0x14] sm:$0xf]
        %v6227 = vld [vmem:[%s6220 + $0x18] sm:$0xf]
        %v6228 = vld [vmem:[%s6220 + $0x1c] sm:$0xf]
        %v6229 = vld [vmem:[%s6220 + $0x20] sm:$0xf]
        %v6230 = vld [vmem:[%s6220 + $0x24] sm:$0xf]
        %v6231 = vld [vmem:[%s6220 + $0x28] sm:$0xf]
        %v6232 = vld [vmem:[%s6220 + $0x2c] sm:$0xf]
        %v6233 = vld [vmem:[%s6220 + $0x30] sm:$0xf]
        %v6234 = vld [vmem:[%s6220 + $0x34] sm:$0xf]
        %v6235 = vld [vmem:[%s6220 + $0x38] sm:$0xf]
        %v6236 = vld [vmem:[%s6220 + $0x3c] sm:$0xf]
        %v6237 = vld [vmem:[%s6220 + $0x40] sm:$0xf]
        %v6238 = vld [vmem:[%s6220 + $0x44] sm:$0xf]
        %v6239 = vld [vmem:[%s6220 + $0x48] sm:$0xf]
        %v6240 = vld [vmem:[%s6220 + $0x4c] sm:$0xf]
        %v6241 = vld [vmem:[%s6220 + $0x50] sm:$0xf]
        %v6242 = vld [vmem:[%s6220 + $0x54] sm:$0xf]
        %v6243 = vld [vmem:[%s6220 + $0x58] sm:$0xf]
        %v6244 = vld [vmem:[%s6220 + $0x5c] sm:$0xf]
        %v6245 = vld [vmem:[%s6220 + $0x60] sm:$0xf]
        %v6246 = vld [vmem:[%s6220 + $0x64] sm:$0xf]
        %v6247 = vld [vmem:[%s6220 + $0x68] sm:$0xf]
        %v6248 = vld [vmem:[%s6220 + $0x6c] sm:$0xf]
        %v6249 = vld [vmem:[%s6220 + $0x70] sm:$0xf]
        %v6250 = vld [vmem:[%s6220 + $0x74] sm:$0xf]
        %v6251 = vld [vmem:[%s6220 + $0x78] sm:$0xf]
        %v6252 = vld [vmem:[%s6220 + $0x7c] sm:$0xf]
        %v6253 = vld [vmem:[%s6220 + $0x80] sm:$0xf]
        %v6254 = vld [vmem:[%s6220 + $0x84] sm:$0xf]
        %v6255 = vld [vmem:[%s6220 + $0x88] sm:$0xf]
        %v6256 = vld [vmem:[%s6220 + $0x8c] sm:$0xf]
        %v6257 = vld [vmem:[%s6220 + $0x90] sm:$0xf]
        %v6258 = vld [vmem:[%s6220 + $0x94] sm:$0xf]
        %v6259 = vld [vmem:[%s6220 + $0x98] sm:$0xf]
        %v6260 = vld [vmem:[%s6220 + $0x9c] sm:$0xf]
        %v6261 = vld [vmem:[%s6220 + $0xa0] sm:$0xf]
        %v6262 = vld [vmem:[%s6220 + $0xa4] sm:$0xf]
        %v6263 = vld [vmem:[%s6220 + $0xa8] sm:$0xf]
        %v6264 = vld [vmem:[%s6220 + $0xac] sm:$0xf]
        %v6265 = vld [vmem:[%s6220 + $0xb0] sm:$0xf]
        %v6266 = vld [vmem:[%s6220 + $0xb4] sm:$0xf]
        %v6267 = vld [vmem:[%s6220 + $0xb8] sm:$0xf]
        %v6268 = vld [vmem:[%s6220 + $0xbc] sm:$0xf]
        %v6317 = vunpack.c.l.b16 %v6221
        %v6318 = vunpack.c.l.b16 %v6222
        %v6319 = vunpack.c.l.b16 %v6223
        %v6320 = vunpack.c.l.b16 %v6224
        %v6321 = vunpack.c.l.b16 %v6225
        %v6322 = vunpack.c.l.b16 %v6226
        %v6323 = vunpack.c.l.b16 %v6227
        %v6324 = vunpack.c.l.b16 %v6228
        %v6325 = vunpack.c.l.b16 %v6229
        %v6326 = vunpack.c.l.b16 %v6230
        %v6327 = vunpack.c.l.b16 %v6231
        %v6328 = vunpack.c.l.b16 %v6232
        %v6329 = vunpack.c.l.b16 %v6233
        %v6330 = vunpack.c.l.b16 %v6234
        %v6331 = vunpack.c.l.b16 %v6235
        %v6332 = vunpack.c.l.b16 %v6236
        %v6333 = vunpack.c.l.b16 %v6237
        %v6334 = vunpack.c.l.b16 %v6238
        %v6335 = vunpack.c.l.b16 %v6239
        %v6336 = vunpack.c.l.b16 %v6240
        %v6337 = vunpack.c.l.b16 %v6241
        %v6338 = vunpack.c.l.b16 %v6242
        %v6339 = vunpack.c.l.b16 %v6243
        %v6340 = vunpack.c.l.b16 %v6244
        %v6341 = vunpack.c.l.b16 %v6245
        %v6342 = vunpack.c.l.b16 %v6246
        %v6343 = vunpack.c.l.b16 %v6247
        %v6344 = vunpack.c.l.b16 %v6248
        %v6345 = vunpack.c.l.b16 %v6249
        %v6346 = vunpack.c.l.b16 %v6250
        %v6347 = vunpack.c.l.b16 %v6251
        %v6348 = vunpack.c.l.b16 %v6252
        %v6349 = vunpack.c.l.b16 %v6253
        %v6350 = vunpack.c.l.b16 %v6254
        %v6351 = vunpack.c.l.b16 %v6255
        %v6352 = vunpack.c.l.b16 %v6256
        %v6353 = vunpack.c.l.b16 %v6257
        %v6354 = vunpack.c.l.b16 %v6258
        %v6355 = vunpack.c.l.b16 %v6259
        %v6356 = vunpack.c.l.b16 %v6260
        %v6357 = vunpack.c.l.b16 %v6261
        %v6358 = vunpack.c.l.b16 %v6262
        %v6359 = vunpack.c.l.b16 %v6263
        %v6360 = vunpack.c.l.b16 %v6264
        %v6361 = vunpack.c.l.b16 %v6265
        %v6362 = vunpack.c.l.b16 %v6266
        %v6363 = vunpack.c.l.b16 %v6267
        %v6364 = vunpack.c.l.b16 %v6268
        %v6365 = vpack.c.b16 %v6318, %v6317
        %v6366 = vpack.c.b16 %v6320, %v6319
        %v6367 = vpack.c.b16 %v6322, %v6321
        %v6368 = vpack.c.b16 %v6324, %v6323
        %v6369 = vpack.c.b16 %v6326, %v6325
        %v6370 = vpack.c.b16 %v6328, %v6327
        %v6371 = vpack.c.b16 %v6330, %v6329
        %v6372 = vpack.c.b16 %v6332, %v6331
        %v6373 = vpack.c.b16 %v6334, %v6333
        %v6374 = vpack.c.b16 %v6336, %v6335
        %v6375 = vpack.c.b16 %v6338, %v6337
        %v6376 = vpack.c.b16 %v6340, %v6339
        %v6377 = vpack.c.b16 %v6342, %v6341
        %v6378 = vpack.c.b16 %v6344, %v6343
        %v6379 = vpack.c.b16 %v6346, %v6345
        %v6380 = vpack.c.b16 %v6348, %v6347
        %v6381 = vpack.c.b16 %v6350, %v6349
        %v6382 = vpack.c.b16 %v6352, %v6351
        %v6383 = vpack.c.b16 %v6354, %v6353
        %v6384 = vpack.c.b16 %v6356, %v6355
        %v6385 = vpack.c.b16 %v6358, %v6357
        %v6386 = vpack.c.b16 %v6360, %v6359
        %v6387 = vpack.c.b16 %v6362, %v6361
        %v6388 = vpack.c.b16 %v6364, %v6363
        %6413 = vmatprep.subr.bf16.mxu0 0
        %6414 = vmatpush1.bf16.msra.mxu0 %v6372
        %6415 = vmatprep.subr.bf16.mxu0 0
        %6416 = vmatpush1.bf16.msra.mxu0 %v6371
        %6417 = vmatprep.subr.bf16.mxu0 0
        %6418 = vmatpush1.bf16.msra.mxu0 %v6370
        %6419 = vmatprep.subr.bf16.mxu0 0
        %6420 = vmatpush1.bf16.msra.mxu0 %v6369
        %6421 = vmatprep.subr.bf16.mxu0 0
        %6422 = vmatpush1.bf16.msra.mxu0 %v6368
        %6423 = vmatprep.subr.bf16.mxu0 0
        %6424 = vmatpush1.bf16.msra.mxu0 %v6367
        %6425 = vmatprep.subr.bf16.mxu0 0
        %6426 = vmatpush1.bf16.msra.mxu0 %v6366
        %6427 = vmatprep.subr.bf16.mxu0 0
        %6428 = vmatpush1.bf16.msra.mxu0 %v6365
        %6429 = vmatprep.subr.bf16.mxu0 0
        %6430 = vmatpush2.bf16.msra.mxu0 %v6380
        %6431 = vmatprep.subr.bf16.mxu0 0
        %6432 = vmatpush2.bf16.msra.mxu0 %v6379
        %6433 = vmatprep.subr.bf16.mxu0 0
        %6434 = vmatpush2.bf16.msra.mxu0 %v6378
        %6435 = vmatprep.subr.bf16.mxu0 0
        %6436 = vmatpush2.bf16.msra.mxu0 %v6377
        %6437 = vmatprep.subr.bf16.mxu0 0
        %6438 = vmatpush2.bf16.msra.mxu0 %v6376
        %6439 = vmatprep.subr.bf16.mxu0 0
        %6440 = vmatpush2.bf16.msra.mxu0 %v6375
        %6441 = vmatprep.subr.bf16.mxu0 0
        %6442 = vmatpush2.bf16.msra.mxu0 %v6374
        %6443 = vmatprep.subr.bf16.mxu0 0
        %6444 = vmatpush2.bf16.msra.mxu0 %v6373
        %6445 = vmatprep.mubr.bf16.mxu0 %v5877
        %6446 = vmatmul.mubr.bf16.gmra.mxu0 %v5868
        %v6447 = vpop.f32.mrf.mxu0
        %v6448 = vadd.f32 0.0, %v6447
        %v6449 = vpop.f32.mrf.mxu0
        %v6450 = vpop.f32.mrf.mxu0
        %v6451 = vadd.f32 0.0, %v6450
        %v6452 = vpop.f32.mrf.mxu0
        %6453 = vmatprep.mubr.bf16.mxu0 %v5920
        %6454 = vmatmul.mubr.bf16.gmra.mxu0 %v5911
        %v6455 = vpop.f32.mrf.mxu0
        %v6456 = vadd.f32 0.0, %v6455
        %v6457 = vpop.f32.mrf.mxu0
        %v6458 = vpop.f32.mrf.mxu0
        %v6459 = vadd.f32 0.0, %v6458
        %v6460 = vpop.f32.mrf.mxu0
        %6461 = vmatprep.mubr.bf16.mxu0 %v5963
        %6462 = vmatmul.mubr.bf16.gmra.mxu0 %v5954
        %v6463 = vpop.f32.mrf.mxu0
        %v6464 = vadd.f32 0.0, %v6463
        %v6465 = vpop.f32.mrf.mxu0
        %v6466 = vpop.f32.mrf.mxu0
        %v6467 = vadd.f32 0.0, %v6466
        %v6468 = vpop.f32.mrf.mxu0
        %6469 = vmatprep.mubr.bf16.mxu0 %v6006
        %6470 = vmatmul.mubr.bf16.gmra.mxu0 %v5997
        %v6471 = vpop.f32.mrf.mxu0
        %v6472 = vadd.f32 0.0, %v6471
        %v6473 = vpop.f32.mrf.mxu0
        %v6474 = vpop.f32.mrf.mxu0
        %v6475 = vadd.f32 0.0, %v6474
        %v6476 = vpop.f32.mrf.mxu0
        %6477 = vmatprep.mubr.bf16.mxu0 %v6049
        %6478 = vmatmul.mubr.bf16.gmra.mxu0 %v6040
        %v6479 = vpop.f32.mrf.mxu0
        %v6480 = vadd.f32 0.0, %v6479
        %v6481 = vpop.f32.mrf.mxu0
        %v6482 = vpop.f32.mrf.mxu0
        %v6483 = vadd.f32 0.0, %v6482
        %v6484 = vpop.f32.mrf.mxu0
        %6485 = vmatprep.mubr.bf16.mxu0 %v6092
        %6486 = vmatmul.mubr.bf16.gmra.mxu0 %v6083
        %v6487 = vpop.f32.mrf.mxu0
        %v6488 = vadd.f32 0.0, %v6487
        %v6489 = vpop.f32.mrf.mxu0
        %v6490 = vpop.f32.mrf.mxu0
        %v6491 = vadd.f32 0.0, %v6490
        %v6492 = vpop.f32.mrf.mxu0
        %6493 = vmatprep.mubr.bf16.mxu0 %v6135
        %6494 = vmatmul.mubr.bf16.gmra.mxu0 %v6126
        %v6495 = vpop.f32.mrf.mxu0
        %v6496 = vadd.f32 0.0, %v6495
        %v6497 = vpop.f32.mrf.mxu0
        %v6498 = vpop.f32.mrf.mxu0
        %v6499 = vadd.f32 0.0, %v6498
        %v6500 = vpop.f32.mrf.mxu0
        %6501 = vmatprep.mubr.bf16.mxu0 %v6178
        %6502 = vmatmul.mubr.bf16.gmra.mxu0 %v6169
        %v6503 = vpop.f32.mrf.mxu0
        %v6504 = vadd.f32 0.0, %v6503
        %v6505 = vpop.f32.mrf.mxu0
        %v6506 = vpop.f32.mrf.mxu0
        %v6507 = vadd.f32 0.0, %v6506
        %v6508 = vpop.f32.mrf.mxu0
        %6509 = vdwg.mxu0
        %6510 = vmatprep.subr.bf16.mxu0 0
        %6511 = vmatpush1.bf16.msra.mxu0 %v6388
        %6512 = vmatprep.subr.bf16.mxu0 0
        %6513 = vmatpush1.bf16.msra.mxu0 %v6387
        %6514 = vmatprep.subr.bf16.mxu0 0
        %6515 = vmatpush1.bf16.msra.mxu0 %v6386
        %6516 = vmatprep.subr.bf16.mxu0 0
        %6517 = vmatpush1.bf16.msra.mxu0 %v6385
        %6518 = vmatprep.subr.bf16.mxu0 0
        %6519 = vmatpush1.bf16.msra.mxu0 %v6384
        %6520 = vmatprep.subr.bf16.mxu0 0
        %6521 = vmatpush1.bf16.msra.mxu0 %v6383
        %6522 = vmatprep.subr.bf16.mxu0 0
        %6523 = vmatpush1.bf16.msra.mxu0 %v6382
        %6524 = vmatprep.subr.bf16.mxu0 0
        %6525 = vmatpush1.bf16.msra.mxu0 %v6381
        %6526 = vmatprep.subr.bf16.mxu0 0
        %6527 = vmatpush2.bf16.msra.mxu0 0
        %6528 = vmatprep.subr.bf16.mxu0 0
        %6529 = vmatpush2.bf16.msra.mxu0 0
        %6530 = vmatprep.subr.bf16.mxu0 0
        %6531 = vmatpush2.bf16.msra.mxu0 0
        %6532 = vmatprep.subr.bf16.mxu0 0
        %6533 = vmatpush2.bf16.msra.mxu0 0
        %6534 = vmatprep.subr.bf16.mxu0 0
        %6535 = vmatpush2.bf16.msra.mxu0 0
        %6536 = vmatprep.subr.bf16.mxu0 0
        %6537 = vmatpush2.bf16.msra.mxu0 0
        %6538 = vmatprep.subr.bf16.mxu0 0
        %6539 = vmatpush2.bf16.msra.mxu0 0
        %6540 = vmatprep.subr.bf16.mxu0 0
        %6541 = vmatpush2.bf16.msra.mxu0 0
        %6542 = vmatprep.mubr.bf16.mxu0 0
        %6543 = vmatmul.mubr.bf16.gmra.mxu0 %v5894
        %v6544 = vpop.f32.mrf.mxu0
        %v6545 = vadd.f32 %v6448, %v6544
        %v6546 = vpop.f32.mrf.mxu0
        %v6547 = vpop.f32.mrf.mxu0
        %v6548 = vadd.f32 %v6451, %v6547
        %v6549 = vpop.f32.mrf.mxu0
        %6550 = vmatprep.mubr.bf16.mxu0 0
        %6551 = vmatmul.mubr.bf16.gmra.mxu0 %v5937
        %v6552 = vpop.f32.mrf.mxu0
        %v6553 = vadd.f32 %v6456, %v6552
        %v6554 = vpop.f32.mrf.mxu0
        %v6555 = vpop.f32.mrf.mxu0
        %v6556 = vadd.f32 %v6459, %v6555
        %v6557 = vpop.f32.mrf.mxu0
        %6558 = vmatprep.mubr.bf16.mxu0 0
        %6559 = vmatmul.mubr.bf16.gmra.mxu0 %v5980
        %v6560 = vpop.f32.mrf.mxu0
        %v6561 = vadd.f32 %v6464, %v6560
        %v6562 = vpop.f32.mrf.mxu0
        %v6563 = vpop.f32.mrf.mxu0
        %v6564 = vadd.f32 %v6467, %v6563
        %v6565 = vpop.f32.mrf.mxu0
        %6566 = vmatprep.mubr.bf16.mxu0 0
        %6567 = vmatmul.mubr.bf16.gmra.mxu0 %v6023
        %v6568 = vpop.f32.mrf.mxu0
        %v6569 = vadd.f32 %v6472, %v6568
        %v6570 = vpop.f32.mrf.mxu0
        %v6571 = vpop.f32.mrf.mxu0
        %v6572 = vadd.f32 %v6475, %v6571
        %v6573 = vpop.f32.mrf.mxu0
        %6574 = vmatprep.mubr.bf16.mxu0 0
        %6575 = vmatmul.mubr.bf16.gmra.mxu0 %v6066
        %v6576 = vpop.f32.mrf.mxu0
        %v6577 = vadd.f32 %v6480, %v6576
        %v6578 = vpop.f32.mrf.mxu0
        %v6579 = vpop.f32.mrf.mxu0
        %v6580 = vadd.f32 %v6483, %v6579
        %v6581 = vpop.f32.mrf.mxu0
        %6582 = vmatprep.mubr.bf16.mxu0 0
        %6583 = vmatmul.mubr.bf16.gmra.mxu0 %v6109
        %v6584 = vpop.f32.mrf.mxu0
        %v6585 = vadd.f32 %v6488, %v6584
        %v6586 = vpop.f32.mrf.mxu0
        %v6587 = vpop.f32.mrf.mxu0
        %v6588 = vadd.f32 %v6491, %v6587
        %v6589 = vpop.f32.mrf.mxu0
        %6590 = vmatprep.mubr.bf16.mxu0 0
        %6591 = vmatmul.mubr.bf16.gmra.mxu0 %v6152
        %v6592 = vpop.f32.mrf.mxu0
        %v6593 = vadd.f32 %v6496, %v6592
        %v6594 = vpop.f32.mrf.mxu0
        %v6595 = vpop.f32.mrf.mxu0
        %v6596 = vadd.f32 %v6499, %v6595
        %v6597 = vpop.f32.mrf.mxu0
        %6598 = vmatprep.mubr.bf16.mxu0 0
        %6599 = vmatmul.mubr.bf16.gmra.mxu0 %v6195
        %v6600 = vpop.f32.mrf.mxu0
        %v6601 = vadd.f32 %v6504, %v6600
        %v6602 = vpop.f32.mrf.mxu0
        %v6603 = vpop.f32.mrf.mxu0
        %v6604 = vadd.f32 %v6507, %v6603
        %v6605 = vpop.f32.mrf.mxu0
        %6606 = vdwg.mxu0
        %v6607 = vadd.f32 %v5619, %v6545
        %v6608 = vadd.f32 %v5620, %v6548
        %v6609 = vadd.f32 %v5621, %v6553
        %v6610 = vadd.f32 %v5622, %v6556
        %v6611 = vadd.f32 %v5623, %v6561
        %v6612 = vadd.f32 %v5624, %v6564
        %v6613 = vadd.f32 %v5625, %v6569
        %v6614 = vadd.f32 %v5626, %v6572
        %v6615 = vadd.f32 %v5627, %v6577
        %v6616 = vadd.f32 %v5628, %v6580
        %v6617 = vadd.f32 %v5629, %v6585
        %v6618 = vadd.f32 %v5630, %v6588
        %v6619 = vadd.f32 %v5631, %v6593
        %v6620 = vadd.f32 %v5632, %v6596
        %v6621 = vadd.f32 %v5633, %v6601
        %v6622 = vadd.f32 %v5634, %v6604
        %s6623 = scalar_lea.vmem [#allocation3], 32
        %v6624 = vld [vmem:[%s6623] sm:$0x8]
        %v6625 = vld [vmem:[%s6623 + $0x4] sm:$0xf]
        %v6626 = vld [vmem:[%s6623 + $0x8] sm:$0xf]
        %v6627 = vld [vmem:[%s6623 + $0x10] sm:$0x8]
        %v6628 = vld [vmem:[%s6623 + $0x14] sm:$0xf]
        %v6629 = vld [vmem:[%s6623 + $0x18] sm:$0xf]
        %v6630 = vld [vmem:[%s6623 + $0x20] sm:$0x8]
        %v6631 = vld [vmem:[%s6623 + $0x24] sm:$0xf]
        %v6632 = vld [vmem:[%s6623 + $0x28] sm:$0xf]
        %v6633 = vld [vmem:[%s6623 + $0x30] sm:$0x8]
        %v6634 = vld [vmem:[%s6623 + $0x34] sm:$0xf]
        %v6635 = vld [vmem:[%s6623 + $0x38] sm:$0xf]
        %v6636 = vld [vmem:[%s6623 + $0x40] sm:$0x8]
        %v6637 = vld [vmem:[%s6623 + $0x44] sm:$0xf]
        %v6638 = vld [vmem:[%s6623 + $0x48] sm:$0xf]
        %v6639 = vld [vmem:[%s6623 + $0x50] sm:$0x8]
        %v6640 = vld [vmem:[%s6623 + $0x54] sm:$0xf]
        %v6641 = vld [vmem:[%s6623 + $0x58] sm:$0xf]
        %v6642 = vld [vmem:[%s6623 + $0x60] sm:$0x8]
        %v6643 = vld [vmem:[%s6623 + $0x64] sm:$0xf]
        %v6644 = vld [vmem:[%s6623 + $0x68] sm:$0xf]
        %v6645 = vld [vmem:[%s6623 + $0x70] sm:$0x8]
        %v6646 = vld [vmem:[%s6623 + $0x74] sm:$0xf]
        %v6647 = vld [vmem:[%s6623 + $0x78] sm:$0xf]
        %v6648 = vld [vmem:[%s6623 + $0xc] sm:$0x1]
        %v6649 = vld [vmem:[%s6623 + $0x1c] sm:$0x1]
        %v6650 = vld [vmem:[%s6623 + $0x2c] sm:$0x1]
        %v6651 = vld [vmem:[%s6623 + $0x3c] sm:$0x1]
        %v6652 = vld [vmem:[%s6623 + $0x4c] sm:$0x1]
        %v6653 = vld [vmem:[%s6623 + $0x5c] sm:$0x1]
        %v6654 = vld [vmem:[%s6623 + $0x6c] sm:$0x1]
        %v6655 = vld [vmem:[%s6623 + $0x7c] sm:$0x1]
        %v6680 = vunpack.c.l.b16 %v6624
        %v6681 = vunpack.c.l.b16 %v6625
        %v6682 = vunpack.c.l.b16 %v6626
        %v6683 = vunpack.c.l.b16 %v6627
        %v6684 = vunpack.c.l.b16 %v6628
        %v6685 = vunpack.c.l.b16 %v6629
        %v6686 = vunpack.c.l.b16 %v6630
        %v6687 = vunpack.c.l.b16 %v6631
        %v6688 = vunpack.c.l.b16 %v6632
        %v6689 = vunpack.c.l.b16 %v6633
        %v6690 = vunpack.c.l.b16 %v6634
        %v6691 = vunpack.c.l.b16 %v6635
        %v6692 = vunpack.c.l.b16 %v6636
        %v6693 = vunpack.c.l.b16 %v6637
        %v6694 = vunpack.c.l.b16 %v6638
        %v6695 = vunpack.c.l.b16 %v6639
        %v6696 = vunpack.c.l.b16 %v6640
        %v6697 = vunpack.c.l.b16 %v6641
        %v6698 = vunpack.c.l.b16 %v6642
        %v6699 = vunpack.c.l.b16 %v6643
        %v6700 = vunpack.c.l.b16 %v6644
        %v6701 = vunpack.c.l.b16 %v6645
        %v6702 = vunpack.c.l.b16 %v6646
        %v6703 = vunpack.c.l.b16 %v6647
        %v6704 = vpack.c.b16 %v6681, %v6680
        %v6705 = vpack.c.b16 %v6682, %v6682
        %v6706 = vpack.c.b16 %v6684, %v6683
        %v6707 = vpack.c.b16 %v6685, %v6685
        %v6708 = vpack.c.b16 %v6687, %v6686
        %v6709 = vpack.c.b16 %v6688, %v6688
        %v6710 = vpack.c.b16 %v6690, %v6689
        %v6711 = vpack.c.b16 %v6691, %v6691
        %v6712 = vpack.c.b16 %v6693, %v6692
        %v6713 = vpack.c.b16 %v6694, %v6694
        %v6714 = vpack.c.b16 %v6696, %v6695
        %v6715 = vpack.c.b16 %v6697, %v6697
        %v6716 = vpack.c.b16 %v6699, %v6698
        %v6717 = vpack.c.b16 %v6700, %v6700
        %v6718 = vpack.c.b16 %v6702, %v6701
        %v6719 = vpack.c.b16 %v6703, %v6703
        %v6720 = vpack.c.b16 %v6682, %v6681
        %v6721 = vpack.c.b16 %v6685, %v6684
        %v6722 = vpack.c.b16 %v6688, %v6687
        %v6723 = vpack.c.b16 %v6691, %v6690
        %v6724 = vpack.c.b16 %v6694, %v6693
        %v6725 = vpack.c.b16 %v6697, %v6696
        %v6726 = vpack.c.b16 %v6700, %v6699
        %v6727 = vpack.c.b16 %v6703, %v6702
        %v6729 = vshrl.u32 %v6720, 16
        %v6731 = vrot.slane %v6729, 4
        %v6732 = vshll.u32 %v6720, 16
        %v6734 = vrot.slane %v6732, 5
        %v6735 = vor.u32 %v6731, %v6734
        %v6737 = vshrl.u32 %v6721, 16
        %v6739 = vrot.slane %v6737, 4
        %v6740 = vshll.u32 %v6721, 16
        %v6742 = vrot.slane %v6740, 5
        %v6743 = vor.u32 %v6739, %v6742
        %v6745 = vshrl.u32 %v6722, 16
        %v6747 = vrot.slane %v6745, 4
        %v6748 = vshll.u32 %v6722, 16
        %v6750 = vrot.slane %v6748, 5
        %v6751 = vor.u32 %v6747, %v6750
        %v6753 = vshrl.u32 %v6723, 16
        %v6755 = vrot.slane %v6753, 4
        %v6756 = vshll.u32 %v6723, 16
        %v6758 = vrot.slane %v6756, 5
        %v6759 = vor.u32 %v6755, %v6758
        %v6761 = vshrl.u32 %v6724, 16
        %v6763 = vrot.slane %v6761, 4
        %v6764 = vshll.u32 %v6724, 16
        %v6766 = vrot.slane %v6764, 5
        %v6767 = vor.u32 %v6763, %v6766
        %v6769 = vshrl.u32 %v6725, 16
        %v6771 = vrot.slane %v6769, 4
        %v6772 = vshll.u32 %v6725, 16
        %v6774 = vrot.slane %v6772, 5
        %v6775 = vor.u32 %v6771, %v6774
        %v6777 = vshrl.u32 %v6726, 16
        %v6779 = vrot.slane %v6777, 4
        %v6780 = vshll.u32 %v6726, 16
        %v6782 = vrot.slane %v6780, 5
        %v6783 = vor.u32 %v6779, %v6782
        %v6785 = vshrl.u32 %v6727, 16
        %v6787 = vrot.slane %v6785, 4
        %v6788 = vshll.u32 %v6727, 16
        %v6790 = vrot.slane %v6788, 5
        %v6791 = vor.u32 %v6787, %v6790
        %v6800 = vunpack.c.l.b16 %v6648
        %v6801 = vunpack.c.l.b16 %v6649
        %v6802 = vunpack.c.l.b16 %v6650
        %v6803 = vunpack.c.l.b16 %v6651
        %v6804 = vunpack.c.l.b16 %v6652
        %v6805 = vunpack.c.l.b16 %v6653
        %v6806 = vunpack.c.l.b16 %v6654
        %v6807 = vunpack.c.l.b16 %v6655
        %v6808 = vpack.c.b16 %v6800, %v6800
        %v6809 = vpack.c.b16 %v6801, %v6801
        %v6810 = vpack.c.b16 %v6802, %v6802
        %v6811 = vpack.c.b16 %v6803, %v6803
        %v6812 = vpack.c.b16 %v6804, %v6804
        %v6813 = vpack.c.b16 %v6805, %v6805
        %v6814 = vpack.c.b16 %v6806, %v6806
        %v6815 = vpack.c.b16 %v6807, %v6807
        %v6816 = vrot.slane %v6720, 5
        %v6817 = vrot.slane %v6808, 5
        %v6818 = vsel %vm726, %v6816, %v6817
        %v6819 = vrot.slane %v6721, 5
        %v6820 = vrot.slane %v6809, 5
        %v6821 = vsel %vm726, %v6819, %v6820
        %v6822 = vrot.slane %v6722, 5
        %v6823 = vrot.slane %v6810, 5
        %v6824 = vsel %vm726, %v6822, %v6823
        %v6825 = vrot.slane %v6723, 5
        %v6826 = vrot.slane %v6811, 5
        %v6827 = vsel %vm726, %v6825, %v6826
        %v6828 = vrot.slane %v6724, 5
        %v6829 = vrot.slane %v6812, 5
        %v6830 = vsel %vm726, %v6828, %v6829
        %v6831 = vrot.slane %v6725, 5
        %v6832 = vrot.slane %v6813, 5
        %v6833 = vsel %vm726, %v6831, %v6832
        %v6834 = vrot.slane %v6726, 5
        %v6835 = vrot.slane %v6814, 5
        %v6836 = vsel %vm726, %v6834, %v6835
        %v6837 = vrot.slane %v6727, 5
        %v6838 = vrot.slane %v6815, 5
        %v6839 = vsel %vm726, %v6837, %v6838
        %v6841 = vshrl.u32 %v6704, 16
        %v6843 = vrot.slane %v6841, 3
        %v6844 = vshll.u32 %v6704, 16
        %v6846 = vrot.slane %v6844, 4
        %v6847 = vor.u32 %v6843, %v6846
        %v6849 = vshrl.u32 %v6705, 16
        %v6851 = vrot.slane %v6849, 3
        %v6852 = vshll.u32 %v6705, 16
        %v6854 = vrot.slane %v6852, 4
        %v6855 = vor.u32 %v6851, %v6854
        %v6856 = vsel %vm757, %v6847, %v6855
        %v6858 = vshrl.u32 %v6735, 16
        %v6860 = vrot.slane %v6858, 3
        %v6861 = vshll.u32 %v6735, 16
        %v6863 = vrot.slane %v6861, 4
        %v6864 = vor.u32 %v6860, %v6863
        %v6865 = vsel %vm757, %v6864, %v6864
        %v6867 = vshrl.u32 %v6816, 16
        %v6869 = vrot.slane %v6867, 3
        %v6870 = vshll.u32 %v6816, 16
        %v6872 = vrot.slane %v6870, 4
        %v6873 = vor.u32 %v6869, %v6872
        %v6875 = vshrl.u32 %v6818, 16
        %v6877 = vrot.slane %v6875, 3
        %v6878 = vshll.u32 %v6818, 16
        %v6880 = vrot.slane %v6878, 4
        %v6881 = vor.u32 %v6877, %v6880
        %v6882 = vsel %vm757, %v6873, %v6881
        %v6884 = vshrl.u32 %v6706, 16
        %v6886 = vrot.slane %v6884, 3
        %v6887 = vshll.u32 %v6706, 16
        %v6889 = vrot.slane %v6887, 4
        %v6890 = vor.u32 %v6886, %v6889
        %v6892 = vshrl.u32 %v6707, 16
        %v6894 = vrot.slane %v6892, 3
        %v6895 = vshll.u32 %v6707, 16
        %v6897 = vrot.slane %v6895, 4
        %v6898 = vor.u32 %v6894, %v6897
        %v6899 = vsel %vm757, %v6890, %v6898
        %v6901 = vshrl.u32 %v6743, 16
        %v6903 = vrot.slane %v6901, 3
        %v6904 = vshll.u32 %v6743, 16
        %v6906 = vrot.slane %v6904, 4
        %v6907 = vor.u32 %v6903, %v6906
        %v6908 = vsel %vm757, %v6907, %v6907
        %v6910 = vshrl.u32 %v6819, 16
        %v6912 = vrot.slane %v6910, 3
        %v6913 = vshll.u32 %v6819, 16
        %v6915 = vrot.slane %v6913, 4
        %v6916 = vor.u32 %v6912, %v6915
        %v6918 = vshrl.u32 %v6821, 16
        %v6920 = vrot.slane %v6918, 3
        %v6921 = vshll.u32 %v6821, 16
        %v6923 = vrot.slane %v6921, 4
        %v6924 = vor.u32 %v6920, %v6923
        %v6925 = vsel %vm757, %v6916, %v6924
        %v6927 = vshrl.u32 %v6708, 16
        %v6929 = vrot.slane %v6927, 3
        %v6930 = vshll.u32 %v6708, 16
        %v6932 = vrot.slane %v6930, 4
        %v6933 = vor.u32 %v6929, %v6932
        %v6935 = vshrl.u32 %v6709, 16
        %v6937 = vrot.slane %v6935, 3
        %v6938 = vshll.u32 %v6709, 16
        %v6940 = vrot.slane %v6938, 4
        %v6941 = vor.u32 %v6937, %v6940
        %v6942 = vsel %vm757, %v6933, %v6941
        %v6944 = vshrl.u32 %v6751, 16
        %v6946 = vrot.slane %v6944, 3
        %v6947 = vshll.u32 %v6751, 16
        %v6949 = vrot.slane %v6947, 4
        %v6950 = vor.u32 %v6946, %v6949
        %v6951 = vsel %vm757, %v6950, %v6950
        %v6953 = vshrl.u32 %v6822, 16
        %v6955 = vrot.slane %v6953, 3
        %v6956 = vshll.u32 %v6822, 16
        %v6958 = vrot.slane %v6956, 4
        %v6959 = vor.u32 %v6955, %v6958
        %v6961 = vshrl.u32 %v6824, 16
        %v6963 = vrot.slane %v6961, 3
        %v6964 = vshll.u32 %v6824, 16
        %v6966 = vrot.slane %v6964, 4
        %v6967 = vor.u32 %v6963, %v6966
        %v6968 = vsel %vm757, %v6959, %v6967
        %v6970 = vshrl.u32 %v6710, 16
        %v6972 = vrot.slane %v6970, 3
        %v6973 = vshll.u32 %v6710, 16
        %v6975 = vrot.slane %v6973, 4
        %v6976 = vor.u32 %v6972, %v6975
        %v6978 = vshrl.u32 %v6711, 16
        %v6980 = vrot.slane %v6978, 3
        %v6981 = vshll.u32 %v6711, 16
        %v6983 = vrot.slane %v6981, 4
        %v6984 = vor.u32 %v6980, %v6983
        %v6985 = vsel %vm757, %v6976, %v6984
        %v6987 = vshrl.u32 %v6759, 16
        %v6989 = vrot.slane %v6987, 3
        %v6990 = vshll.u32 %v6759, 16
        %v6992 = vrot.slane %v6990, 4
        %v6993 = vor.u32 %v6989, %v6992
        %v6994 = vsel %vm757, %v6993, %v6993
        %v6996 = vshrl.u32 %v6825, 16
        %v6998 = vrot.slane %v6996, 3
        %v6999 = vshll.u32 %v6825, 16
        %v7001 = vrot.slane %v6999, 4
        %v7002 = vor.u32 %v6998, %v7001
        %v7004 = vshrl.u32 %v6827, 16
        %v7006 = vrot.slane %v7004, 3
        %v7007 = vshll.u32 %v6827, 16
        %v7009 = vrot.slane %v7007, 4
        %v7010 = vor.u32 %v7006, %v7009
        %v7011 = vsel %vm757, %v7002, %v7010
        %v7013 = vshrl.u32 %v6712, 16
        %v7015 = vrot.slane %v7013, 3
        %v7016 = vshll.u32 %v6712, 16
        %v7018 = vrot.slane %v7016, 4
        %v7019 = vor.u32 %v7015, %v7018
        %v7021 = vshrl.u32 %v6713, 16
        %v7023 = vrot.slane %v7021, 3
        %v7024 = vshll.u32 %v6713, 16
        %v7026 = vrot.slane %v7024, 4
        %v7027 = vor.u32 %v7023, %v7026
        %v7028 = vsel %vm757, %v7019, %v7027
        %v7030 = vshrl.u32 %v6767, 16
        %v7032 = vrot.slane %v7030, 3
        %v7033 = vshll.u32 %v6767, 16
        %v7035 = vrot.slane %v7033, 4
        %v7036 = vor.u32 %v7032, %v7035
        %v7037 = vsel %vm757, %v7036, %v7036
        %v7039 = vshrl.u32 %v6828, 16
        %v7041 = vrot.slane %v7039, 3
        %v7042 = vshll.u32 %v6828, 16
        %v7044 = vrot.slane %v7042, 4
        %v7045 = vor.u32 %v7041, %v7044
        %v7047 = vshrl.u32 %v6830, 16
        %v7049 = vrot.slane %v7047, 3
        %v7050 = vshll.u32 %v6830, 16
        %v7052 = vrot.slane %v7050, 4
        %v7053 = vor.u32 %v7049, %v7052
        %v7054 = vsel %vm757, %v7045, %v7053
        %v7056 = vshrl.u32 %v6714, 16
        %v7058 = vrot.slane %v7056, 3
        %v7059 = vshll.u32 %v6714, 16
        %v7061 = vrot.slane %v7059, 4
        %v7062 = vor.u32 %v7058, %v7061
        %v7064 = vshrl.u32 %v6715, 16
        %v7066 = vrot.slane %v7064, 3
        %v7067 = vshll.u32 %v6715, 16
        %v7069 = vrot.slane %v7067, 4
        %v7070 = vor.u32 %v7066, %v7069
        %v7071 = vsel %vm757, %v7062, %v7070
        %v7073 = vshrl.u32 %v6775, 16
        %v7075 = vrot.slane %v7073, 3
        %v7076 = vshll.u32 %v6775, 16
        %v7078 = vrot.slane %v7076, 4
        %v7079 = vor.u32 %v7075, %v7078
        %v7080 = vsel %vm757, %v7079, %v7079
        %v7082 = vshrl.u32 %v6831, 16
        %v7084 = vrot.slane %v7082, 3
        %v7085 = vshll.u32 %v6831, 16
        %v7087 = vrot.slane %v7085, 4
        %v7088 = vor.u32 %v7084, %v7087
        %v7090 = vshrl.u32 %v6833, 16
        %v7092 = vrot.slane %v7090, 3
        %v7093 = vshll.u32 %v6833, 16
        %v7095 = vrot.slane %v7093, 4
        %v7096 = vor.u32 %v7092, %v7095
        %v7097 = vsel %vm757, %v7088, %v7096
        %v7099 = vshrl.u32 %v6716, 16
        %v7101 = vrot.slane %v7099, 3
        %v7102 = vshll.u32 %v6716, 16
        %v7104 = vrot.slane %v7102, 4
        %v7105 = vor.u32 %v7101, %v7104
        %v7107 = vshrl.u32 %v6717, 16
        %v7109 = vrot.slane %v7107, 3
        %v7110 = vshll.u32 %v6717, 16
        %v7112 = vrot.slane %v7110, 4
        %v7113 = vor.u32 %v7109, %v7112
        %v7114 = vsel %vm757, %v7105, %v7113
        %v7116 = vshrl.u32 %v6783, 16
        %v7118 = vrot.slane %v7116, 3
        %v7119 = vshll.u32 %v6783, 16
        %v7121 = vrot.slane %v7119, 4
        %v7122 = vor.u32 %v7118, %v7121
        %v7123 = vsel %vm757, %v7122, %v7122
        %v7125 = vshrl.u32 %v6834, 16
        %v7127 = vrot.slane %v7125, 3
        %v7128 = vshll.u32 %v6834, 16
        %v7130 = vrot.slane %v7128, 4
        %v7131 = vor.u32 %v7127, %v7130
        %v7133 = vshrl.u32 %v6836, 16
        %v7135 = vrot.slane %v7133, 3
        %v7136 = vshll.u32 %v6836, 16
        %v7138 = vrot.slane %v7136, 4
        %v7139 = vor.u32 %v7135, %v7138
        %v7140 = vsel %vm757, %v7131, %v7139
        %v7142 = vshrl.u32 %v6718, 16
        %v7144 = vrot.slane %v7142, 3
        %v7145 = vshll.u32 %v6718, 16
        %v7147 = vrot.slane %v7145, 4
        %v7148 = vor.u32 %v7144, %v7147
        %v7150 = vshrl.u32 %v6719, 16
        %v7152 = vrot.slane %v7150, 3
        %v7153 = vshll.u32 %v6719, 16
        %v7155 = vrot.slane %v7153, 4
        %v7156 = vor.u32 %v7152, %v7155
        %v7157 = vsel %vm757, %v7148, %v7156
        %v7159 = vshrl.u32 %v6791, 16
        %v7161 = vrot.slane %v7159, 3
        %v7162 = vshll.u32 %v6791, 16
        %v7164 = vrot.slane %v7162, 4
        %v7165 = vor.u32 %v7161, %v7164
        %v7166 = vsel %vm757, %v7165, %v7165
        %v7168 = vshrl.u32 %v6837, 16
        %v7170 = vrot.slane %v7168, 3
        %v7171 = vshll.u32 %v6837, 16
        %v7173 = vrot.slane %v7171, 4
        %v7174 = vor.u32 %v7170, %v7173
        %v7176 = vshrl.u32 %v6839, 16
        %v7178 = vrot.slane %v7176, 3
        %v7179 = vshll.u32 %v6839, 16
        %v7181 = vrot.slane %v7179, 4
        %v7182 = vor.u32 %v7178, %v7181
        %v7183 = vsel %vm757, %v7174, %v7182
        %s7208 = scalar_lea.vmem [#allocation10], 384
        %v7209 = vld [vmem:[%s7208] sm:$0xf]
        %v7210 = vld [vmem:[%s7208 + $0x4] sm:$0xf]
        %v7211 = vld [vmem:[%s7208 + $0x8] sm:$0xf]
        %v7212 = vld [vmem:[%s7208 + $0xc] sm:$0xf]
        %v7213 = vld [vmem:[%s7208 + $0x10] sm:$0xf]
        %v7214 = vld [vmem:[%s7208 + $0x14] sm:$0xf]
        %v7215 = vld [vmem:[%s7208 + $0x18] sm:$0xf]
        %v7216 = vld [vmem:[%s7208 + $0x1c] sm:$0xf]
        %v7217 = vld [vmem:[%s7208 + $0x20] sm:$0xf]
        %v7218 = vld [vmem:[%s7208 + $0x24] sm:$0xf]
        %v7219 = vld [vmem:[%s7208 + $0x28] sm:$0xf]
        %v7220 = vld [vmem:[%s7208 + $0x2c] sm:$0xf]
        %v7221 = vld [vmem:[%s7208 + $0x30] sm:$0xf]
        %v7222 = vld [vmem:[%s7208 + $0x34] sm:$0xf]
        %v7223 = vld [vmem:[%s7208 + $0x38] sm:$0xf]
        %v7224 = vld [vmem:[%s7208 + $0x3c] sm:$0xf]
        %v7225 = vld [vmem:[%s7208 + $0x40] sm:$0xf]
        %v7226 = vld [vmem:[%s7208 + $0x44] sm:$0xf]
        %v7227 = vld [vmem:[%s7208 + $0x48] sm:$0xf]
        %v7228 = vld [vmem:[%s7208 + $0x4c] sm:$0xf]
        %v7229 = vld [vmem:[%s7208 + $0x50] sm:$0xf]
        %v7230 = vld [vmem:[%s7208 + $0x54] sm:$0xf]
        %v7231 = vld [vmem:[%s7208 + $0x58] sm:$0xf]
        %v7232 = vld [vmem:[%s7208 + $0x5c] sm:$0xf]
        %v7233 = vld [vmem:[%s7208 + $0x60] sm:$0xf]
        %v7234 = vld [vmem:[%s7208 + $0x64] sm:$0xf]
        %v7235 = vld [vmem:[%s7208 + $0x68] sm:$0xf]
        %v7236 = vld [vmem:[%s7208 + $0x6c] sm:$0xf]
        %v7237 = vld [vmem:[%s7208 + $0x70] sm:$0xf]
        %v7238 = vld [vmem:[%s7208 + $0x74] sm:$0xf]
        %v7239 = vld [vmem:[%s7208 + $0x78] sm:$0xf]
        %v7240 = vld [vmem:[%s7208 + $0x7c] sm:$0xf]
        %v7241 = vld [vmem:[%s7208 + $0x80] sm:$0xf]
        %v7242 = vld [vmem:[%s7208 + $0x84] sm:$0xf]
        %v7243 = vld [vmem:[%s7208 + $0x88] sm:$0xf]
        %v7244 = vld [vmem:[%s7208 + $0x8c] sm:$0xf]
        %v7245 = vld [vmem:[%s7208 + $0x90] sm:$0xf]
        %v7246 = vld [vmem:[%s7208 + $0x94] sm:$0xf]
        %v7247 = vld [vmem:[%s7208 + $0x98] sm:$0xf]
        %v7248 = vld [vmem:[%s7208 + $0x9c] sm:$0xf]
        %v7249 = vld [vmem:[%s7208 + $0xa0] sm:$0xf]
        %v7250 = vld [vmem:[%s7208 + $0xa4] sm:$0xf]
        %v7251 = vld [vmem:[%s7208 + $0xa8] sm:$0xf]
        %v7252 = vld [vmem:[%s7208 + $0xac] sm:$0xf]
        %v7253 = vld [vmem:[%s7208 + $0xb0] sm:$0xf]
        %v7254 = vld [vmem:[%s7208 + $0xb4] sm:$0xf]
        %v7255 = vld [vmem:[%s7208 + $0xb8] sm:$0xf]
        %v7256 = vld [vmem:[%s7208 + $0xbc] sm:$0xf]
        %v7305 = vunpack.c.l.b16 %v7209
        %v7306 = vunpack.c.l.b16 %v7210
        %v7307 = vunpack.c.l.b16 %v7211
        %v7308 = vunpack.c.l.b16 %v7212
        %v7309 = vunpack.c.l.b16 %v7213
        %v7310 = vunpack.c.l.b16 %v7214
        %v7311 = vunpack.c.l.b16 %v7215
        %v7312 = vunpack.c.l.b16 %v7216
        %v7313 = vunpack.c.l.b16 %v7217
        %v7314 = vunpack.c.l.b16 %v7218
        %v7315 = vunpack.c.l.b16 %v7219
        %v7316 = vunpack.c.l.b16 %v7220
        %v7317 = vunpack.c.l.b16 %v7221
        %v7318 = vunpack.c.l.b16 %v7222
        %v7319 = vunpack.c.l.b16 %v7223
        %v7320 = vunpack.c.l.b16 %v7224
        %v7321 = vunpack.c.l.b16 %v7225
        %v7322 = vunpack.c.l.b16 %v7226
        %v7323 = vunpack.c.l.b16 %v7227
        %v7324 = vunpack.c.l.b16 %v7228
        %v7325 = vunpack.c.l.b16 %v7229
        %v7326 = vunpack.c.l.b16 %v7230
        %v7327 = vunpack.c.l.b16 %v7231
        %v7328 = vunpack.c.l.b16 %v7232
        %v7329 = vunpack.c.l.b16 %v7233
        %v7330 = vunpack.c.l.b16 %v7234
        %v7331 = vunpack.c.l.b16 %v7235
        %v7332 = vunpack.c.l.b16 %v7236
        %v7333 = vunpack.c.l.b16 %v7237
        %v7334 = vunpack.c.l.b16 %v7238
        %v7335 = vunpack.c.l.b16 %v7239
        %v7336 = vunpack.c.l.b16 %v7240
        %v7337 = vunpack.c.l.b16 %v7241
        %v7338 = vunpack.c.l.b16 %v7242
        %v7339 = vunpack.c.l.b16 %v7243
        %v7340 = vunpack.c.l.b16 %v7244
        %v7341 = vunpack.c.l.b16 %v7245
        %v7342 = vunpack.c.l.b16 %v7246
        %v7343 = vunpack.c.l.b16 %v7247
        %v7344 = vunpack.c.l.b16 %v7248
        %v7345 = vunpack.c.l.b16 %v7249
        %v7346 = vunpack.c.l.b16 %v7250
        %v7347 = vunpack.c.l.b16 %v7251
        %v7348 = vunpack.c.l.b16 %v7252
        %v7349 = vunpack.c.l.b16 %v7253
        %v7350 = vunpack.c.l.b16 %v7254
        %v7351 = vunpack.c.l.b16 %v7255
        %v7352 = vunpack.c.l.b16 %v7256
        %v7353 = vpack.c.b16 %v7306, %v7305
        %v7354 = vpack.c.b16 %v7308, %v7307
        %v7355 = vpack.c.b16 %v7310, %v7309
        %v7356 = vpack.c.b16 %v7312, %v7311
        %v7357 = vpack.c.b16 %v7314, %v7313
        %v7358 = vpack.c.b16 %v7316, %v7315
        %v7359 = vpack.c.b16 %v7318, %v7317
        %v7360 = vpack.c.b16 %v7320, %v7319
        %v7361 = vpack.c.b16 %v7322, %v7321
        %v7362 = vpack.c.b16 %v7324, %v7323
        %v7363 = vpack.c.b16 %v7326, %v7325
        %v7364 = vpack.c.b16 %v7328, %v7327
        %v7365 = vpack.c.b16 %v7330, %v7329
        %v7366 = vpack.c.b16 %v7332, %v7331
        %v7367 = vpack.c.b16 %v7334, %v7333
        %v7368 = vpack.c.b16 %v7336, %v7335
        %v7369 = vpack.c.b16 %v7338, %v7337
        %v7370 = vpack.c.b16 %v7340, %v7339
        %v7371 = vpack.c.b16 %v7342, %v7341
        %v7372 = vpack.c.b16 %v7344, %v7343
        %v7373 = vpack.c.b16 %v7346, %v7345
        %v7374 = vpack.c.b16 %v7348, %v7347
        %v7375 = vpack.c.b16 %v7350, %v7349
        %v7376 = vpack.c.b16 %v7352, %v7351
        %7401 = vmatprep.subr.bf16.mxu0 0
        %7402 = vmatpush1.bf16.msra.mxu0 %v7360
        %7403 = vmatprep.subr.bf16.mxu0 0
        %7404 = vmatpush1.bf16.msra.mxu0 %v7359
        %7405 = vmatprep.subr.bf16.mxu0 0
        %7406 = vmatpush1.bf16.msra.mxu0 %v7358
        %7407 = vmatprep.subr.bf16.mxu0 0
        %7408 = vmatpush1.bf16.msra.mxu0 %v7357
        %7409 = vmatprep.subr.bf16.mxu0 0
        %7410 = vmatpush1.bf16.msra.mxu0 %v7356
        %7411 = vmatprep.subr.bf16.mxu0 0
        %7412 = vmatpush1.bf16.msra.mxu0 %v7355
        %7413 = vmatprep.subr.bf16.mxu0 0
        %7414 = vmatpush1.bf16.msra.mxu0 %v7354
        %7415 = vmatprep.subr.bf16.mxu0 0
        %7416 = vmatpush1.bf16.msra.mxu0 %v7353
        %7417 = vmatprep.subr.bf16.mxu0 0
        %7418 = vmatpush2.bf16.msra.mxu0 %v7368
        %7419 = vmatprep.subr.bf16.mxu0 0
        %7420 = vmatpush2.bf16.msra.mxu0 %v7367
        %7421 = vmatprep.subr.bf16.mxu0 0
        %7422 = vmatpush2.bf16.msra.mxu0 %v7366
        %7423 = vmatprep.subr.bf16.mxu0 0
        %7424 = vmatpush2.bf16.msra.mxu0 %v7365
        %7425 = vmatprep.subr.bf16.mxu0 0
        %7426 = vmatpush2.bf16.msra.mxu0 %v7364
        %7427 = vmatprep.subr.bf16.mxu0 0
        %7428 = vmatpush2.bf16.msra.mxu0 %v7363
        %7429 = vmatprep.subr.bf16.mxu0 0
        %7430 = vmatpush2.bf16.msra.mxu0 %v7362
        %7431 = vmatprep.subr.bf16.mxu0 0
        %7432 = vmatpush2.bf16.msra.mxu0 %v7361
        %7433 = vmatprep.mubr.bf16.mxu0 %v6865
        %7434 = vmatmul.mubr.bf16.gmra.mxu0 %v6856
        %v7435 = vpop.f32.mrf.mxu0
        %v7436 = vadd.f32 0.0, %v7435
        %v7437 = vpop.f32.mrf.mxu0
        %v7438 = vpop.f32.mrf.mxu0
        %v7439 = vadd.f32 0.0, %v7438
        %v7440 = vpop.f32.mrf.mxu0
        %7441 = vmatprep.mubr.bf16.mxu0 %v6908
        %7442 = vmatmul.mubr.bf16.gmra.mxu0 %v6899
        %v7443 = vpop.f32.mrf.mxu0
        %v7444 = vadd.f32 0.0, %v7443
        %v7445 = vpop.f32.mrf.mxu0
        %v7446 = vpop.f32.mrf.mxu0
        %v7447 = vadd.f32 0.0, %v7446
        %v7448 = vpop.f32.mrf.mxu0
        %7449 = vmatprep.mubr.bf16.mxu0 %v6951
        %7450 = vmatmul.mubr.bf16.gmra.mxu0 %v6942
        %v7451 = vpop.f32.mrf.mxu0
        %v7452 = vadd.f32 0.0, %v7451
        %v7453 = vpop.f32.mrf.mxu0
        %v7454 = vpop.f32.mrf.mxu0
        %v7455 = vadd.f32 0.0, %v7454
        %v7456 = vpop.f32.mrf.mxu0
        %7457 = vmatprep.mubr.bf16.mxu0 %v6994
        %7458 = vmatmul.mubr.bf16.gmra.mxu0 %v6985
        %v7459 = vpop.f32.mrf.mxu0
        %v7460 = vadd.f32 0.0, %v7459
        %v7461 = vpop.f32.mrf.mxu0
        %v7462 = vpop.f32.mrf.mxu0
        %v7463 = vadd.f32 0.0, %v7462
        %v7464 = vpop.f32.mrf.mxu0
        %7465 = vmatprep.mubr.bf16.mxu0 %v7037
        %7466 = vmatmul.mubr.bf16.gmra.mxu0 %v7028
        %v7467 = vpop.f32.mrf.mxu0
        %v7468 = vadd.f32 0.0, %v7467
        %v7469 = vpop.f32.mrf.mxu0
        %v7470 = vpop.f32.mrf.mxu0
        %v7471 = vadd.f32 0.0, %v7470
        %v7472 = vpop.f32.mrf.mxu0
        %7473 = vmatprep.mubr.bf16.mxu0 %v7080
        %7474 = vmatmul.mubr.bf16.gmra.mxu0 %v7071
        %v7475 = vpop.f32.mrf.mxu0
        %v7476 = vadd.f32 0.0, %v7475
        %v7477 = vpop.f32.mrf.mxu0
        %v7478 = vpop.f32.mrf.mxu0
        %v7479 = vadd.f32 0.0, %v7478
        %v7480 = vpop.f32.mrf.mxu0
        %7481 = vmatprep.mubr.bf16.mxu0 %v7123
        %7482 = vmatmul.mubr.bf16.gmra.mxu0 %v7114
        %v7483 = vpop.f32.mrf.mxu0
        %v7484 = vadd.f32 0.0, %v7483
        %v7485 = vpop.f32.mrf.mxu0
        %v7486 = vpop.f32.mrf.mxu0
        %v7487 = vadd.f32 0.0, %v7486
        %v7488 = vpop.f32.mrf.mxu0
        %7489 = vmatprep.mubr.bf16.mxu0 %v7166
        %7490 = vmatmul.mubr.bf16.gmra.mxu0 %v7157
        %v7491 = vpop.f32.mrf.mxu0
        %v7492 = vadd.f32 0.0, %v7491
        %v7493 = vpop.f32.mrf.mxu0
        %v7494 = vpop.f32.mrf.mxu0
        %v7495 = vadd.f32 0.0, %v7494
        %v7496 = vpop.f32.mrf.mxu0
        %7497 = vdwg.mxu0
        %7498 = vmatprep.subr.bf16.mxu0 0
        %7499 = vmatpush1.bf16.msra.mxu0 %v7376
        %7500 = vmatprep.subr.bf16.mxu0 0
        %7501 = vmatpush1.bf16.msra.mxu0 %v7375
        %7502 = vmatprep.subr.bf16.mxu0 0
        %7503 = vmatpush1.bf16.msra.mxu0 %v7374
        %7504 = vmatprep.subr.bf16.mxu0 0
        %7505 = vmatpush1.bf16.msra.mxu0 %v7373
        %7506 = vmatprep.subr.bf16.mxu0 0
        %7507 = vmatpush1.bf16.msra.mxu0 %v7372
        %7508 = vmatprep.subr.bf16.mxu0 0
        %7509 = vmatpush1.bf16.msra.mxu0 %v7371
        %7510 = vmatprep.subr.bf16.mxu0 0
        %7511 = vmatpush1.bf16.msra.mxu0 %v7370
        %7512 = vmatprep.subr.bf16.mxu0 0
        %7513 = vmatpush1.bf16.msra.mxu0 %v7369
        %7514 = vmatprep.subr.bf16.mxu0 0
        %7515 = vmatpush2.bf16.msra.mxu0 0
        %7516 = vmatprep.subr.bf16.mxu0 0
        %7517 = vmatpush2.bf16.msra.mxu0 0
        %7518 = vmatprep.subr.bf16.mxu0 0
        %7519 = vmatpush2.bf16.msra.mxu0 0
        %7520 = vmatprep.subr.bf16.mxu0 0
        %7521 = vmatpush2.bf16.msra.mxu0 0
        %7522 = vmatprep.subr.bf16.mxu0 0
        %7523 = vmatpush2.bf16.msra.mxu0 0
        %7524 = vmatprep.subr.bf16.mxu0 0
        %7525 = vmatpush2.bf16.msra.mxu0 0
        %7526 = vmatprep.subr.bf16.mxu0 0
        %7527 = vmatpush2.bf16.msra.mxu0 0
        %7528 = vmatprep.subr.bf16.mxu0 0
        %7529 = vmatpush2.bf16.msra.mxu0 0
        %7530 = vmatprep.mubr.bf16.mxu0 0
        %7531 = vmatmul.mubr.bf16.gmra.mxu0 %v6882
        %v7532 = vpop.f32.mrf.mxu0
        %v7533 = vadd.f32 %v7436, %v7532
        %v7534 = vpop.f32.mrf.mxu0
        %v7535 = vpop.f32.mrf.mxu0
        %v7536 = vadd.f32 %v7439, %v7535
        %v7537 = vpop.f32.mrf.mxu0
        %7538 = vmatprep.mubr.bf16.mxu0 0
        %7539 = vmatmul.mubr.bf16.gmra.mxu0 %v6925
        %v7540 = vpop.f32.mrf.mxu0
        %v7541 = vadd.f32 %v7444, %v7540
        %v7542 = vpop.f32.mrf.mxu0
        %v7543 = vpop.f32.mrf.mxu0
        %v7544 = vadd.f32 %v7447, %v7543
        %v7545 = vpop.f32.mrf.mxu0
        %7546 = vmatprep.mubr.bf16.mxu0 0
        %7547 = vmatmul.mubr.bf16.gmra.mxu0 %v6968
        %v7548 = vpop.f32.mrf.mxu0
        %v7549 = vadd.f32 %v7452, %v7548
        %v7550 = vpop.f32.mrf.mxu0
        %v7551 = vpop.f32.mrf.mxu0
        %v7552 = vadd.f32 %v7455, %v7551
        %v7553 = vpop.f32.mrf.mxu0
        %7554 = vmatprep.mubr.bf16.mxu0 0
        %7555 = vmatmul.mubr.bf16.gmra.mxu0 %v7011
        %v7556 = vpop.f32.mrf.mxu0
        %v7557 = vadd.f32 %v7460, %v7556
        %v7558 = vpop.f32.mrf.mxu0
        %v7559 = vpop.f32.mrf.mxu0
        %v7560 = vadd.f32 %v7463, %v7559
        %v7561 = vpop.f32.mrf.mxu0
        %7562 = vmatprep.mubr.bf16.mxu0 0
        %7563 = vmatmul.mubr.bf16.gmra.mxu0 %v7054
        %v7564 = vpop.f32.mrf.mxu0
        %v7565 = vadd.f32 %v7468, %v7564
        %v7566 = vpop.f32.mrf.mxu0
        %v7567 = vpop.f32.mrf.mxu0
        %v7568 = vadd.f32 %v7471, %v7567
        %v7569 = vpop.f32.mrf.mxu0
        %7570 = vmatprep.mubr.bf16.mxu0 0
        %7571 = vmatmul.mubr.bf16.gmra.mxu0 %v7097
        %v7572 = vpop.f32.mrf.mxu0
        %v7573 = vadd.f32 %v7476, %v7572
        %v7574 = vpop.f32.mrf.mxu0
        %v7575 = vpop.f32.mrf.mxu0
        %v7576 = vadd.f32 %v7479, %v7575
        %v7577 = vpop.f32.mrf.mxu0
        %7578 = vmatprep.mubr.bf16.mxu0 0
        %7579 = vmatmul.mubr.bf16.gmra.mxu0 %v7140
        %v7580 = vpop.f32.mrf.mxu0
        %v7581 = vadd.f32 %v7484, %v7580
        %v7582 = vpop.f32.mrf.mxu0
        %v7583 = vpop.f32.mrf.mxu0
        %v7584 = vadd.f32 %v7487, %v7583
        %v7585 = vpop.f32.mrf.mxu0
        %7586 = vmatprep.mubr.bf16.mxu0 0
        %7587 = vmatmul.mubr.bf16.gmra.mxu0 %v7183
        %v7588 = vpop.f32.mrf.mxu0
        %v7589 = vadd.f32 %v7492, %v7588
        %v7590 = vpop.f32.mrf.mxu0
        %v7591 = vpop.f32.mrf.mxu0
        %v7592 = vadd.f32 %v7495, %v7591
        %v7593 = vpop.f32.mrf.mxu0
        %7594 = vdwg.mxu0
        %v7595 = vadd.f32 %v6607, %v7533
        %v7596 = vadd.f32 %v6608, %v7536
        %v7597 = vadd.f32 %v6609, %v7541
        %v7598 = vadd.f32 %v6610, %v7544
        %v7599 = vadd.f32 %v6611, %v7549
        %v7600 = vadd.f32 %v6612, %v7552
        %v7601 = vadd.f32 %v6613, %v7557
        %v7602 = vadd.f32 %v6614, %v7560
        %v7603 = vadd.f32 %v6615, %v7565
        %v7604 = vadd.f32 %v6616, %v7568
        %v7605 = vadd.f32 %v6617, %v7573
        %v7606 = vadd.f32 %v6618, %v7576
        %v7607 = vadd.f32 %v6619, %v7581
        %v7608 = vadd.f32 %v6620, %v7584
        %v7609 = vadd.f32 %v6621, %v7589
        %v7610 = vadd.f32 %v6622, %v7592
        %v7611 = vadd.f32 %v7595, %v4406
        %v7612 = vadd.f32 %v7596, %v4408
        %v7613 = vadd.f32 %v7597, %v4410
        %v7614 = vadd.f32 %v7598, %v4412
        %v7615 = vadd.f32 %v7599, %v4414
        %v7616 = vadd.f32 %v7600, %v4416
        %v7617 = vadd.f32 %v7601, %v4418
        %v7618 = vadd.f32 %v7602, %v4420
        %v7619 = vadd.f32 %v7603, %v4422
        %v7620 = vadd.f32 %v7604, %v4424
        %v7621 = vadd.f32 %v7605, %v4426
        %v7622 = vadd.f32 %v7606, %v4428
        %v7623 = vadd.f32 %v7607, %v4430
        %v7624 = vadd.f32 %v7608, %v4432
        %v7625 = vadd.f32 %v7609, %v4434
        %v7626 = vadd.f32 %v7610, %v4436
        %v7627 = vmax.f32 %v7611, 0.0
        %v7628 = vmax.f32 %v7612, 0.0
        %v7629 = vmax.f32 %v7613, 0.0
        %v7630 = vmax.f32 %v7614, 0.0
        %v7631 = vmax.f32 %v7615, 0.0
        %v7632 = vmax.f32 %v7616, 0.0
        %v7633 = vmax.f32 %v7617, 0.0
        %v7634 = vmax.f32 %v7618, 0.0
        %v7635 = vmax.f32 %v7619, 0.0
        %v7636 = vmax.f32 %v7620, 0.0
        %v7637 = vmax.f32 %v7621, 0.0
        %v7638 = vmax.f32 %v7622, 0.0
        %v7639 = vmax.f32 %v7623, 0.0
        %v7640 = vmax.f32 %v7624, 0.0
        %v7641 = vmax.f32 %v7625, 0.0
        %v7642 = vmax.f32 %v7626, 0.0
        %v7643 = vpack.c.bf16 %v7628, %v7627
        %v7644 = vpack.c.bf16 %v7630, %v7629
        %v7645 = vpack.c.bf16 %v7632, %v7631
        %v7646 = vpack.c.bf16 %v7634, %v7633
        %v7647 = vpack.c.bf16 %v7636, %v7635
        %v7648 = vpack.c.bf16 %v7638, %v7637
        %v7649 = vpack.c.bf16 %v7640, %v7639
        %v7650 = vpack.c.bf16 %v7642, %v7641
        %v7659 = vunpack.c.l.b16 %v7643
        %v7660 = vunpack.c.h.b16 %v7643
        %v7661 = vunpack.c.l.b16 %v7644
        %v7662 = vunpack.c.h.b16 %v7644
        %v7663 = vunpack.c.l.b16 %v7645
        %v7664 = vunpack.c.h.b16 %v7645
        %v7665 = vunpack.c.l.b16 %v7646
        %v7666 = vunpack.c.h.b16 %v7646
        %v7667 = vunpack.c.l.b16 %v7647
        %v7668 = vunpack.c.h.b16 %v7647
        %v7669 = vunpack.c.l.b16 %v7648
        %v7670 = vunpack.c.h.b16 %v7648
        %v7671 = vunpack.c.l.b16 %v7649
        %v7672 = vunpack.c.h.b16 %v7649
        %v7673 = vunpack.c.l.b16 %v7650
        %v7674 = vunpack.c.h.b16 %v7650
        %v7675 = vpack.c.b16 %v7659, %v7659
        %v7676 = vpack.c.b16 %v7660, %v7660
        %v7677 = vpack.c.b16 %v7661, %v7661
        %v7678 = vpack.c.b16 %v7662, %v7662
        %v7679 = vpack.c.b16 %v7663, %v7663
        %v7680 = vpack.c.b16 %v7664, %v7664
        %v7681 = vpack.c.b16 %v7665, %v7665
        %v7682 = vpack.c.b16 %v7666, %v7666
        %v7683 = vpack.c.b16 %v7667, %v7667
        %v7684 = vpack.c.b16 %v7668, %v7668
        %v7685 = vpack.c.b16 %v7669, %v7669
        %v7686 = vpack.c.b16 %v7670, %v7670
        %v7687 = vpack.c.b16 %v7671, %v7671
        %v7688 = vpack.c.b16 %v7672, %v7672
        %v7689 = vpack.c.b16 %v7673, %v7673
        %v7690 = vpack.c.b16 %v7674, %v7674
        %7707 = vst [vmem:[%s376] sm:$0xf] %v7675
        %7708 = vst [vmem:[%s376 + $0x4] sm:$0xf] %v7676
        %7709 = vst [vmem:[%s376 + $0x8] sm:$0xf] %v7677
        %7710 = vst [vmem:[%s376 + $0xc] sm:$0xf] %v7678
        %7711 = vst [vmem:[%s376 + $0x10] sm:$0xf] %v7679
        %7712 = vst [vmem:[%s376 + $0x14] sm:$0xf] %v7680
        %7713 = vst [vmem:[%s376 + $0x18] sm:$0xf] %v7681
        %7714 = vst [vmem:[%s376 + $0x1c] sm:$0xf] %v7682
        %7715 = vst [vmem:[%s376 + $0x20] sm:$0xf] %v7683
        %7716 = vst [vmem:[%s376 + $0x24] sm:$0xf] %v7684
        %7717 = vst [vmem:[%s376 + $0x28] sm:$0xf] %v7685
        %7718 = vst [vmem:[%s376 + $0x2c] sm:$0xf] %v7686
        %7719 = vst [vmem:[%s376 + $0x30] sm:$0xf] %v7687
        %7720 = vst [vmem:[%s376 + $0x34] sm:$0xf] %v7688
        %7721 = vst [vmem:[%s376 + $0x38] sm:$0xf] %v7689
        %7722 = vst [vmem:[%s376 + $0x3c] sm:$0xf] %v7690
        %s7723 = sand.u32 %s193, 1
        %s7724 = scalar_lea.sflag [#allocation6], %s7723
        %s7725 = sand.u32 %s193, 1
        %s7726 = smul.addr %s7725, 64
        %s7727 = scalar_lea.vmem [#allocation12], %s7726
        // Predicated region
        $region69: #{tpu_custom_call.1} parent=43 // pred_check
          %p7728 = pneg %p203
        $region70: #{tpu_custom_call.1} parent=43 // pred_check_branch
          %7730 = sbr.rel (%p7728) target = $region72
        $region71: #{tpu_custom_call.1} parent=43 // pred_region
          %s7731 = smul.u32 8, %s32
          %s7733 = ssub.s32 1024, 1024
          %7734 = vsyncadd %s7724, %s7733
          %s7735 = smul.addr %s7731, 2
          %s7736 = smul.addr %s31, 32
          %s7737 = sadd.s32 %s7735, %s7736
          %s7738 = smul.addr %s7737, 64
          %s7739 = scalar_lea.hbm %s6, %s7738
          %s7740 = sshll.u32 %s7727, 4
          %s7741 = int_to_ptr.vmem [resolvable:$true] %s7740
          %7746 = dma.vmem_to_hbm [thread:$0]  %s7741, 1024, %s7739, %s7724, 64, 64, 4
        $region72: #{tpu_custom_call.1} parent=43 // pred_fallthru
          _
      $region44: #{tpu_custom_call.1} parent=5 // pred_fallthru
        _
      %p7747 = scmp.le.s32.totalorder 2, %s22
      // Predicated region
      $region73: #{tpu_custom_call.1} parent=5 // pred_check
        %p7748 = pneg %p7747
      $region74: #{tpu_custom_call.1} parent=5 // pred_check_branch
        %7750 = sbr.rel (%p7748) target = $region76
      $region75: #{tpu_custom_call.1} parent=5 // pred_region
        %s7751 = ssub.s32 %s22, 2
        // Predicated region
        $region77: #{tpu_custom_call.1} parent=75 // pred_check
          %p7752 = pneg %p209
        $region78: #{tpu_custom_call.1} parent=75 // pred_check_branch
          %7754 = sbr.rel (%p7752) target = $region80
        $region79: #{tpu_custom_call.1} parent=75 // pred_region
          %s7755 = sand.u32 %s194, 1
          %s7756 = scalar_lea.sflag [#allocation6], %s7755
          %s7757 = sand.u32 %s194, 1
          %s7758 = smul.addr %s7757, 64
          %s7759 = scalar_lea.vmem [#allocation12], %s7758
          %7760 = dma.done %s7756, 1024
        $region80: #{tpu_custom_call.1} parent=75 // pred_fallthru
          _
      $region76: #{tpu_custom_call.1} parent=5 // pred_fallthru
        _
    $region6: #{tpu_custom_call.1} parent=1 // loop_footer
      %s26 = sadd.s32 1, %s22
    $region7: #{tpu_custom_call.1} parent=1 // loop_footer_branch
      %21 = sbr.rel target = $region3
    $region8: #{tpu_custom_call.1} parent=1 // loop_exit
      _
    %7761 = vsyncpa [#allocation5], 1
    %s7762 = scalar_lea.sflag [#allocation5], 1
    %7763 = vsyncpa %s7762, 1
    %7764 = vsyncpa [#allocation8], 1
    %s7765 = scalar_lea.sflag [#allocation8], 1
    %7766 = vsyncpa %s7765, 1
    %7767 = vsyncpa [#allocation11], 1
    %7768 = vsyncpa [#allocation6], 1
    %s7769 = scalar_lea.sflag [#allocation6], 1
    %7770 = vsyncpa %s7769, 1

</llo_original>
